<compile_context>
chip_gen: v6e
topology: v6e:2x2x1
jax: 0.10.0
libtpu: 0.0.40
codegen_flags: <defaults>
</compile_context>

<pallas_src>
import functools

import jax
import jax.numpy as jnp
from jax import lax
from jax.experimental import pallas as pl
from jax.experimental.pallas import tpu as pltpu

# ----- fixed module hyperparameters (from the PyTorch script) -----
N_ACTIONS = 2
N_LATENTS = 51
N_LAYERS = 3
N_HIDDENS = 32                  # small test hidden size
D_IN = N_LATENTS + N_ACTIONS    # 53
N_RES_BLOCKS = 7
OUT_PAD = 128                   # lane-dense padded output width (>= N_LATENTS)


# ---------------------------------------------------------------------------
# Fused kernel: 3-layer LSTM (layer-major, in-kernel time loop) + residual MLP
# ---------------------------------------------------------------------------
def _rnn_fused_kernel(x_ref, wih0_ref, wih12_ref, whh_ref, b_ref,
                      wfc_ref, bfc_ref, wout_ref, bout_ref,
                      y_ref, gpre_sc, hseq_sc, *, hidden):
    """Shapes:
      x_ref    : (B, T, D_IN)      batch-first input
      wih0_ref : (D_IN, 4H)        layer-0 input weights (stored transposed)
      wih12_ref: (2, H, 4H)        layer-1/2 input weights
      whh_ref  : (3, H, 4H)        recurrent weights
      b_ref    : (3, 1, 4H)        combined b_ih + b_hh per layer
      wfc_ref  : (7, H, H)  bfc_ref: (7, 1, H)
      wout_ref : (H, OUT_PAD)  bout_ref: (1, OUT_PAD)   zero-padded past 51
      y_ref    : (B, T, OUT_PAD)   lane-dense output slab
      gpre_sc  : (T, B, 4H) VMEM   precomputed input projections (per layer)
      hseq_sc  : (T, B, H)  VMEM   hidden-state sequence (per layer)
    """
    H = hidden
    B, T, D = x_ref.shape
    N = B * T

    def run_layer(w_hh):
        # Serial recurrence: only the (B,H)x(H,4H) matmul is on the critical
        # path; w_hh is loaded once (hoisted) and closed over.
        def step(t, carry):
            h, c = carry
            gates = gpre_sc[t] + jnp.dot(
                h, w_hh, preferred_element_type=jnp.float32)     # (B, 4H)
            sig = jax.nn.sigmoid(gates)      # one EUP pass covers i, f, o
            tng = jnp.tanh(gates)            # one EUP pass covers g
            i_g = sig[:, 0 * H:1 * H]
            f_g = sig[:, 1 * H:2 * H]
            g_g = tng[:, 2 * H:3 * H]
            o_g = sig[:, 3 * H:4 * H]
            c_new = f_g * c + i_g * g_g
            h_new = o_g * jnp.tanh(c_new)
            hseq_sc[t] = h_new
            return (h_new, c_new)

        zero = jnp.zeros((B, H), jnp.float32)
        lax.fori_loop(0, T, step, (zero, zero), unroll=True)

    # ---- layer 0: input projection for all timesteps in ONE matmul ----------
    x_flat = x_ref[...].reshape(N, D)                         # rows = b*T + t
    g0 = (jnp.dot(x_flat, wih0_ref[...], preferred_element_type=jnp.float32)
          + b_ref[0])                                         # (N, 4H)
    # reorder once to time-major (lane dim is 4H = 128, cheap relayout)
    gpre_sc[...] = pltpu.einshape("btg->tbg", g0.reshape(B, T, 4 * H))
    run_layer(whh_ref[0])

    # ---- layers 1..2: input = full time-major output of the layer below -----
    for l in range(1, N_LAYERS):
        seq = hseq_sc[...].reshape(N, H)                      # rows = t*B + b
        gpre_sc[...] = (
            jnp.dot(seq, wih12_ref[l - 1], preferred_element_type=jnp.float32)
            + b_ref[l]).reshape(T, B, 4 * H)
        run_layer(whh_ref[l])

    # ---- residual MLP head on the whole (T*B, H) slab ------------------------
    # dropout(p=0.5) is eval-mode identity
    h_flat = hseq_sc[...].reshape(N, H)                       # time-major rows
    y = h_flat
    for i in range(N_RES_BLOCKS):                             # static unroll
        y = jnp.maximum(
            jnp.dot(y, wfc_ref[i], preferred_element_type=jnp.float32)
            + bfc_ref[i], 0.0) + h_flat
    out = (jnp.dot(y, wout_ref[...], preferred_element_type=jnp.float32)
           + bout_ref[...])                                   # (N, OUT_PAD)

    # reorder back to batch-first once; store lane-dense (last dim = 128)
    y_ref[...] = pltpu.einshape("tbo->bto", out.reshape(T, B, OUT_PAD))


@jax.jit
def rnn_forward(states, params):
    """states: (B, T, N_LATENTS + N_ACTIONS) batch_first, like the PyTorch module."""
    B, T, _ = states.shape
    H = N_HIDDENS
    # zero-pad fc_out to 128 output lanes so kernel stores are lane-dense
    w_out_pad = jnp.pad(params["w_out"], ((0, 0), (0, OUT_PAD - N_LATENTS)))
    b_out_pad = jnp.pad(params["b_out"], ((0, 0), (0, OUT_PAD - N_LATENTS)))

    out = pl.pallas_call(
        functools.partial(_rnn_fused_kernel, hidden=H),
        out_shape=jax.ShapeDtypeStruct((B, T, OUT_PAD), jnp.float32),
        scratch_shapes=[
            pltpu.VMEM((T, B, 4 * H), jnp.float32),   # input projections
            pltpu.VMEM((T, B, H), jnp.float32),       # hidden sequence
        ],
    )(states.astype(jnp.float32), params["w_ih0"], params["w_ih12"],
      params["w_hh"], params["b"], params["w_fcs"], params["b_fcs"],
      w_out_pad, b_out_pad)

    y = out[:, :, :N_LATENTS]
    return y, None, None


# ---------------------------------------------------------------------------
# Parameters
# ---------------------------------------------------------------------------
def make_params(key, hidden=N_HIDDENS):
    H = hidden
    ks = jax.random.split(key, 32)
    ki = iter(ks)
    u = lambda k, shape, bound: jax.random.uniform(
        k, shape, jnp.float32, minval=-bound, maxval=bound)

    lstm_bound = 1.0 / jnp.sqrt(H)
    # LSTM: weights stored transposed (in_dim, 4H) for x @ W; gate order i,f,g,o.
    w_ih0 = u(next(ki), (D_IN, 4 * H), lstm_bound)
    w_ih12 = jnp.stack([u(next(ki), (H, 4 * H), lstm_bound) for _ in range(2)])
    w_hh = jnp.stack([u(next(ki), (H, 4 * H), lstm_bound) for _ in range(3)])
    # b_ih + b_hh combined per layer
    b = jnp.stack([(u(next(ki), (1, 4 * H), lstm_bound)
                    + u(next(ki), (1, 4 * H), lstm_bound)) for _ in range(3)])

    fc_bound = 1.0 / jnp.sqrt(H)
    w_fcs = jnp.stack([u(next(ki), (H, H), fc_bound) for _ in range(7)])
    b_fcs = jnp.stack([u(next(ki), (1, H), fc_bound) for _ in range(7)])
    w_out = u(next(ki), (H, N_LATENTS), fc_bound)
    b_out = u(next(ki), (1, N_LATENTS), fc_bound)

    return dict(w_ih0=w_ih0, w_ih12=w_ih12, w_hh=w_hh, b=b,
                w_fcs=w_fcs, b_fcs=b_fcs, w_out=w_out, b_out=b_out)


# ---------------------------------------------------------------------------
# Pure-JAX reference (for correctness check)
# ---------------------------------------------------------------------------
def reference_forward(states, params):
    B, T, _ = states.shape
    H = N_HIDDENS
    x = states.astype(jnp.float32)
    h = [jnp.zeros((B, H), jnp.float32) for _ in range(N_LAYERS)]
    c = [jnp.zeros((B, H), jnp.float32) for _ in range(N_LAYERS)]
    outs = []
    for t in range(T):
        inp = x[:, t, :]
        for l in range(N_LAYERS):
            w_ih = params["w_ih0"] if l == 0 else params["w_ih12"][l - 1]
            gates = inp @ w_ih + h[l] @ params["w_hh"][l] + params["b"][l]
            i_g = jax.nn.sigmoid(gates[:, 0 * H:1 * H])
            f_g = jax.nn.sigmoid(gates[:, 1 * H:2 * H])
            g_g = jnp.tanh(gates[:, 2 * H:3 * H])
            o_g = jax.nn.sigmoid(gates[:, 3 * H:4 * H])
            c[l] = f_g * c[l] + i_g * g_g
            h[l] = o_g * jnp.tanh(c[l])
            inp = h[l]
        outs.append(inp)
    h_seq = jnp.stack(outs, axis=1)                                  # (B, T, H)
    ident = h_seq
    y = h_seq
    for i in range(N_RES_BLOCKS):
        y = jnp.maximum(y @ params["w_fcs"][i] + params["b_fcs"][i], 0.0) + ident
    return y @ params["w_out"] + params["b_out"]


if __name__ == "__main__":
    key = jax.random.PRNGKey(0)
    kp, kx = jax.random.split(key)
    params = make_params(kp)

    B, T = 2, 8
    states = jax.random.normal(kx, (B, T, N_LATENTS + N_ACTIONS), jnp.float32)

    y, _, _ = rnn_forward(states, params)
    y = jax.block_until_ready(y)

    y_ref = reference_forward(states, params)
    assert y.shape == (B, T, N_LATENTS)
    assert jnp.allclose(y, y_ref, rtol=1e-4, atol=1e-4), \
        f"max abs err {jnp.max(jnp.abs(y - y_ref))}"

    print("KERNEL_OK")
</pallas_src>

<mosaic_0001>
module attributes {stable_mosaic.version = 11 : i64} {
  func.func @_rnn_fused_kernel(%arg0: memref<2x8x53xf32, #tpu.memory_space<vmem>>, %arg1: memref<53x128xf32, #tpu.memory_space<vmem>>, %arg2: memref<2x32x128xf32, #tpu.memory_space<vmem>>, %arg3: memref<3x32x128xf32, #tpu.memory_space<vmem>>, %arg4: memref<3x1x128xf32, #tpu.memory_space<vmem>>, %arg5: memref<7x32x32xf32, #tpu.memory_space<vmem>>, %arg6: memref<7x1x32xf32, #tpu.memory_space<vmem>>, %arg7: memref<32x128xf32, #tpu.memory_space<vmem>>, %arg8: memref<1x128xf32, #tpu.memory_space<vmem>>, %arg9: memref<2x8x128xf32, #tpu.memory_space<vmem>>, %arg10: memref<8x2x128xf32, #tpu.memory_space<vmem>>, %arg11: memref<8x2x32xf32, #tpu.memory_space<vmem>>) attributes {dimension_semantics = [], scalar_prefetch = 0 : i64, scratch_operands = 2 : i64, tpu.core_type = #tpu.core_type<tc>} {
    %c0 = arith.constant 0 : index
    %c0_0 = arith.constant 0 : index
    %c0_1 = arith.constant 0 : index
    %0 = vector.load %arg0[%c0, %c0_0, %c0_1] : memref<2x8x53xf32, #tpu.memory_space<vmem>>, vector<2x8x53xf32>
    %1 = vector.shape_cast %0 : vector<2x8x53xf32> to vector<16x53xf32>
    %c0_2 = arith.constant 0 : index
    %c0_3 = arith.constant 0 : index
    %2 = vector.load %arg1[%c0_2, %c0_3] : memref<53x128xf32, #tpu.memory_space<vmem>>, vector<53x128xf32>
    %cst = arith.constant dense<0.000000e+00> : vector<16x128xf32>
    %3 = tpu.matmul %1, %2, %cst {dimension_numbers = #tpu.dot_dimension_numbers<[1], [0], [0], [1], [0, 0, 1, 1], [], []>} : vector<16x53xf32>, vector<53x128xf32>, vector<16x128xf32> -> vector<16x128xf32>
    %c0_4 = arith.constant 0 : index
    %c0_5 = arith.constant 0 : index
    %c0_6 = arith.constant 0 : index
    %4 = vector.load %arg4[%c0_4, %c0_5, %c0_6] : memref<3x1x128xf32, #tpu.memory_space<vmem>>, vector<1x1x128xf32>
    %5 = vector.shape_cast %4 : vector<1x1x128xf32> to vector<1x128xf32>
    %6 = vector.broadcast %5 : vector<1x128xf32> to vector<16x128xf32>
    %7 = arith.addf %3, %6 : vector<16x128xf32>
    %8 = vector.shape_cast %7 : vector<16x128xf32> to vector<2x8x128xf32>
    %9 = tpu.transpose %8, [1, 0, 2] : vector<2x8x128xf32> -> vector<8x2x128xf32>
    %c0_7 = arith.constant 0 : index
    %c0_8 = arith.constant 0 : index
    %c0_9 = arith.constant 0 : index
    %10 = vector.load %arg10[%c0_7, %c0_8, %c0_9] : memref<8x2x128xf32, #tpu.memory_space<vmem>>, vector<8x2x128xf32>
    tpu.vector_store %arg10[%c0_7, %c0_8, %c0_9], %9 {strides = array<i32>} : memref<8x2x128xf32, #tpu.memory_space<vmem>>, vector<8x2x128xf32>,
    %c0_10 = arith.constant 0 : index
    %c0_11 = arith.constant 0 : index
    %c0_12 = arith.constant 0 : index
    %11 = vector.load %arg3[%c0_10, %c0_11, %c0_12] : memref<3x32x128xf32, #tpu.memory_space<vmem>>, vector<1x32x128xf32>
    %12 = vector.shape_cast %11 : vector<1x32x128xf32> to vector<32x128xf32>
    %cst_13 = arith.constant 0.000000e+00 : f32
    %13 = vector.broadcast %cst_13 : f32 to vector<2x32xf32>
    %c0_i32 = arith.constant 0 : i32
    %14 = arith.index_cast %c0_i32 : i32 to index
    %c0_14 = arith.constant 0 : index
    %c0_15 = arith.constant 0 : index
    %15 = vector.load %arg10[%14, %c0_14, %c0_15] : memref<8x2x128xf32, #tpu.memory_space<vmem>>, vector<1x2x128xf32>
    %16 = vector.shape_cast %15 : vector<1x2x128xf32> to vector<2x128xf32>
    %cst_16 = arith.constant dense<0.000000e+00> : vector<2x128xf32>
    %17 = tpu.matmul %13, %12, %cst_16 {dimension_numbers = #tpu.dot_dimension_numbers<[1], [0], [0], [1], [0, 0, 1, 1], [], []>} : vector<2x32xf32>, vector<32x128xf32>, vector<2x128xf32> -> vector<2x128xf32>
    %18 = arith.addf %16, %17 : vector<2x128xf32>
    %19 = arith.negf %18 : vector<2x128xf32>
    %20 = math.exp %19 : vector<2x128xf32>
    %cst_17 = arith.constant 1.000000e+00 : f32
    %21 = vector.broadcast %cst_17 : f32 to vector<2x128xf32>
    %22 = arith.addf %21, %20 : vector<2x128xf32>
    %23 = arith.divf %21, %22 : vector<2x128xf32>
    %24 = math.tanh %18 : vector<2x128xf32>
    %25 = vector.extract_strided_slice %23 {offsets = [0, 0], sizes = [2, 32], strides = [1, 1]} : vector<2x128xf32> to vector<2x32xf32>
    %26 = vector.extract_strided_slice %23 {offsets = [0, 32], sizes = [2, 32], strides = [1, 1]} : vector<2x128xf32> to vector<2x32xf32>
    %27 = vector.extract_strided_slice %24 {offsets = [0, 64], sizes = [2, 32], strides = [1, 1]} : vector<2x128xf32> to vector<2x32xf32>
    %28 = vector.extract_strided_slice %23 {offsets = [0, 96], sizes = [2, 32], strides = [1, 1]} : vector<2x128xf32> to vector<2x32xf32>
    %29 = arith.mulf %26, %13 : vector<2x32xf32>
    %30 = arith.mulf %25, %27 : vector<2x32xf32>
    %31 = arith.addf %29, %30 : vector<2x32xf32>
    %32 = math.tanh %31 : vector<2x32xf32>
    %33 = arith.mulf %28, %32 : vector<2x32xf32>
    %34 = arith.index_cast %c0_i32 : i32 to index
    %c0_18 = arith.constant 0 : index
    %c0_19 = arith.constant 0 : index
    %35 = vector.load %arg11[%34, %c0_18, %c0_19] : memref<8x2x32xf32, #tpu.memory_space<vmem>>, vector<1x2x32xf32>
    %36 = vector.shape_cast %35 : vector<1x2x32xf32> to vector<2x32xf32>
    %37 = vector.shape_cast %33 : vector<2x32xf32> to vector<1x2x32xf32>
    tpu.vector_store %arg11[%34, %c0_18, %c0_19], %37 {strides = array<i32>} : memref<8x2x32xf32, #tpu.memory_space<vmem>>, vector<1x2x32xf32>,
    %c1_i32 = arith.constant 1 : i32
    %38 = arith.index_cast %c1_i32 : i32 to index
    %c0_20 = arith.constant 0 : index
    %c0_21 = arith.constant 0 : index
    %39 = vector.load %arg10[%38, %c0_20, %c0_21] : memref<8x2x128xf32, #tpu.memory_space<vmem>>, vector<1x2x128xf32>
    %40 = vector.shape_cast %39 : vector<1x2x128xf32> to vector<2x128xf32>
    %cst_22 = arith.constant dense<0.000000e+00> : vector<2x128xf32>
    %41 = tpu.matmul %33, %12, %cst_22 {dimension_numbers = #tpu.dot_dimension_numbers<[1], [0], [0], [1], [0, 0, 1, 1], [], []>} : vector<2x32xf32>, vector<32x128xf32>, vector<2x128xf32> -> vector<2x128xf32>
    %42 = arith.addf %40, %41 : vector<2x128xf32>
    %43 = arith.negf %42 : vector<2x128xf32>
    %44 = math.exp %43 : vector<2x128xf32>
    %cst_23 = arith.constant 1.000000e+00 : f32
    %45 = vector.broadcast %cst_23 : f32 to vector<2x128xf32>
    %46 = arith.addf %45, %44 : vector<2x128xf32>
    %47 = arith.divf %45, %46 : vector<2x128xf32>
    %48 = math.tanh %42 : vector<2x128xf32>
    %49 = vector.extract_strided_slice %47 {offsets = [0, 0], sizes = [2, 32], strides = [1, 1]} : vector<2x128xf32> to vector<2x32xf32>
    %50 = vector.extract_strided_slice %47 {offsets = [0, 32], sizes = [2, 32], strides = [1, 1]} : vector<2x128xf32> to vector<2x32xf32>
    %51 = vector.extract_strided_slice %48 {offsets = [0, 64], sizes = [2, 32], strides = [1, 1]} : vector<2x128xf32> to vector<2x32xf32>
    %52 = vector.extract_strided_slice %47 {offsets = [0, 96], sizes = [2, 32], strides = [1, 1]} : vector<2x128xf32> to vector<2x32xf32>
    %53 = arith.mulf %50, %31 : vector<2x32xf32>
    %54 = arith.mulf %49, %51 : vector<2x32xf32>
    %55 = arith.addf %53, %54 : vector<2x32xf32>
    %56 = math.tanh %55 : vector<2x32xf32>
    %57 = arith.mulf %52, %56 : vector<2x32xf32>
    %58 = arith.index_cast %c1_i32 : i32 to index
    %c0_24 = arith.constant 0 : index
    %c0_25 = arith.constant 0 : index
    %59 = vector.load %arg11[%58, %c0_24, %c0_25] : memref<8x2x32xf32, #tpu.memory_space<vmem>>, vector<1x2x32xf32>
    %60 = vector.shape_cast %59 : vector<1x2x32xf32> to vector<2x32xf32>
    %61 = vector.shape_cast %57 : vector<2x32xf32> to vector<1x2x32xf32>
    tpu.vector_store %arg11[%58, %c0_24, %c0_25], %61 {strides = array<i32>} : memref<8x2x32xf32, #tpu.memory_space<vmem>>, vector<1x2x32xf32>,
    %c2_i32 = arith.constant 2 : i32
    %62 = arith.index_cast %c2_i32 : i32 to index
    %c0_26 = arith.constant 0 : index
    %c0_27 = arith.constant 0 : index
    %63 = vector.load %arg10[%62, %c0_26, %c0_27] : memref<8x2x128xf32, #tpu.memory_space<vmem>>, vector<1x2x128xf32>
    %64 = vector.shape_cast %63 : vector<1x2x128xf32> to vector<2x128xf32>
    %cst_28 = arith.constant dense<0.000000e+00> : vector<2x128xf32>
    %65 = tpu.matmul %57, %12, %cst_28 {dimension_numbers = #tpu.dot_dimension_numbers<[1], [0], [0], [1], [0, 0, 1, 1], [], []>} : vector<2x32xf32>, vector<32x128xf32>, vector<2x128xf32> -> vector<2x128xf32>
    %66 = arith.addf %64, %65 : vector<2x128xf32>
    %67 = arith.negf %66 : vector<2x128xf32>
    %68 = math.exp %67 : vector<2x128xf32>
    %cst_29 = arith.constant 1.000000e+00 : f32
    %69 = vector.broadcast %cst_29 : f32 to vector<2x128xf32>
    %70 = arith.addf %69, %68 : vector<2x128xf32>
    %71 = arith.divf %69, %70 : vector<2x128xf32>
    %72 = math.tanh %66 : vector<2x128xf32>
    %73 = vector.extract_strided_slice %71 {offsets = [0, 0], sizes = [2, 32], strides = [1, 1]} : vector<2x128xf32> to vector<2x32xf32>
    %74 = vector.extract_strided_slice %71 {offsets = [0, 32], sizes = [2, 32], strides = [1, 1]} : vector<2x128xf32> to vector<2x32xf32>
    %75 = vector.extract_strided_slice %72 {offsets = [0, 64], sizes = [2, 32], strides = [1, 1]} : vector<2x128xf32> to vector<2x32xf32>
    %76 = vector.extract_strided_slice %71 {offsets = [0, 96], sizes = [2, 32], strides = [1, 1]} : vector<2x128xf32> to vector<2x32xf32>
    %77 = arith.mulf %74, %55 : vector<2x32xf32>
    %78 = arith.mulf %73, %75 : vector<2x32xf32>
    %79 = arith.addf %77, %78 : vector<2x32xf32>
    %80 = math.tanh %79 : vector<2x32xf32>
    %81 = arith.mulf %76, %80 : vector<2x32xf32>
    %82 = arith.index_cast %c2_i32 : i32 to index
    %c0_30 = arith.constant 0 : index
    %c0_31 = arith.constant 0 : index
    %83 = vector.load %arg11[%82, %c0_30, %c0_31] : memref<8x2x32xf32, #tpu.memory_space<vmem>>, vector<1x2x32xf32>
    %84 = vector.shape_cast %83 : vector<1x2x32xf32> to vector<2x32xf32>
    %85 = vector.shape_cast %81 : vector<2x32xf32> to vector<1x2x32xf32>
    tpu.vector_store %arg11[%82, %c0_30, %c0_31], %85 {strides = array<i32>} : memref<8x2x32xf32, #tpu.memory_space<vmem>>, vector<1x2x32xf32>,
    %c3_i32 = arith.constant 3 : i32
    %86 = arith.index_cast %c3_i32 : i32 to index
    %c0_32 = arith.constant 0 : index
    %c0_33 = arith.constant 0 : index
    %87 = vector.load %arg10[%86, %c0_32, %c0_33] : memref<8x2x128xf32, #tpu.memory_space<vmem>>, vector<1x2x128xf32>
    %88 = vector.shape_cast %87 : vector<1x2x128xf32> to vector<2x128xf32>
    %cst_34 = arith.constant dense<0.000000e+00> : vector<2x128xf32>
    %89 = tpu.matmul %81, %12, %cst_34 {dimension_numbers = #tpu.dot_dimension_numbers<[1], [0], [0], [1], [0, 0, 1, 1], [], []>} : vector<2x32xf32>, vector<32x128xf32>, vector<2x128xf32> -> vector<2x128xf32>
    %90 = arith.addf %88, %89 : vector<2x128xf32>
    %91 = arith.negf %90 : vector<2x128xf32>
    %92 = math.exp %91 : vector<2x128xf32>
    %cst_35 = arith.constant 1.000000e+00 : f32
    %93 = vector.broadcast %cst_35 : f32 to vector<2x128xf32>
    %94 = arith.addf %93, %92 : vector<2x128xf32>
    %95 = arith.divf %93, %94 : vector<2x128xf32>
    %96 = math.tanh %90 : vector<2x128xf32>
    %97 = vector.extract_strided_slice %95 {offsets = [0, 0], sizes = [2, 32], strides = [1, 1]} : vector<2x128xf32> to vector<2x32xf32>
    %98 = vector.extract_strided_slice %95 {offsets = [0, 32], sizes = [2, 32], strides = [1, 1]} : vector<2x128xf32> to vector<2x32xf32>
    %99 = vector.extract_strided_slice %96 {offsets = [0, 64], sizes = [2, 32], strides = [1, 1]} : vector<2x128xf32> to vector<2x32xf32>
    %100 = vector.extract_strided_slice %95 {offsets = [0, 96], sizes = [2, 32], strides = [1, 1]} : vector<2x128xf32> to vector<2x32xf32>
    %101 = arith.mulf %98, %79 : vector<2x32xf32>
    %102 = arith.mulf %97, %99 : vector<2x32xf32>
    %103 = arith.addf %101, %102 : vector<2x32xf32>
    %104 = math.tanh %103 : vector<2x32xf32>
    %105 = arith.mulf %100, %104 : vector<2x32xf32>
    %106 = arith.index_cast %c3_i32 : i32 to index
    %c0_36 = arith.constant 0 : index
    %c0_37 = arith.constant 0 : index
    %107 = vector.load %arg11[%106, %c0_36, %c0_37] : memref<8x2x32xf32, #tpu.memory_space<vmem>>, vector<1x2x32xf32>
    %108 = vector.shape_cast %107 : vector<1x2x32xf32> to vector<2x32xf32>
    %109 = vector.shape_cast %105 : vector<2x32xf32> to vector<1x2x32xf32>
    tpu.vector_store %arg11[%106, %c0_36, %c0_37], %109 {strides = array<i32>} : memref<8x2x32xf32, #tpu.memory_space<vmem>>, vector<1x2x32xf32>,
    %c4_i32 = arith.constant 4 : i32
    %110 = arith.index_cast %c4_i32 : i32 to index
    %c0_38 = arith.constant 0 : index
    %c0_39 = arith.constant 0 : index
    %111 = vector.load %arg10[%110, %c0_38, %c0_39] : memref<8x2x128xf32, #tpu.memory_space<vmem>>, vector<1x2x128xf32>
    %112 = vector.shape_cast %111 : vector<1x2x128xf32> to vector<2x128xf32>
    %cst_40 = arith.constant dense<0.000000e+00> : vector<2x128xf32>
    %113 = tpu.matmul %105, %12, %cst_40 {dimension_numbers = #tpu.dot_dimension_numbers<[1], [0], [0], [1], [0, 0, 1, 1], [], []>} : vector<2x32xf32>, vector<32x128xf32>, vector<2x128xf32> -> vector<2x128xf32>
    %114 = arith.addf %112, %113 : vector<2x128xf32>
    %115 = arith.negf %114 : vector<2x128xf32>
    %116 = math.exp %115 : vector<2x128xf32>
    %cst_41 = arith.constant 1.000000e+00 : f32
    %117 = vector.broadcast %cst_41 : f32 to vector<2x128xf32>
    %118 = arith.addf %117, %116 : vector<2x128xf32>
    %119 = arith.divf %117, %118 : vector<2x128xf32>
    %120 = math.tanh %114 : vector<2x128xf32>
    %121 = vector.extract_strided_slice %119 {offsets = [0, 0], sizes = [2, 32], strides = [1, 1]} : vector<2x128xf32> to vector<2x32xf32>
    %122 = vector.extract_strided_slice %119 {offsets = [0, 32], sizes = [2, 32], strides = [1, 1]} : vector<2x128xf32> to vector<2x32xf32>
    %123 = vector.extract_strided_slice %120 {offsets = [0, 64], sizes = [2, 32], strides = [1, 1]} : vector<2x128xf32> to vector<2x32xf32>
    %124 = vector.extract_strided_slice %119 {offsets = [0, 96], sizes = [2, 32], strides = [1, 1]} : vector<2x128xf32> to vector<2x32xf32>
    %125 = arith.mulf %122, %103 : vector<2x32xf32>
    %126 = arith.mulf %121, %123 : vector<2x32xf32>
    %127 = arith.addf %125, %126 : vector<2x32xf32>
    %128 = math.tanh %127 : vector<2x32xf32>
    %129 = arith.mulf %124, %128 : vector<2x32xf32>
    %130 = arith.index_cast %c4_i32 : i32 to index
    %c0_42 = arith.constant 0 : index
    %c0_43 = arith.constant 0 : index
    %131 = vector.load %arg11[%130, %c0_42, %c0_43] : memref<8x2x32xf32, #tpu.memory_space<vmem>>, vector<1x2x32xf32>
    %132 = vector.shape_cast %131 : vector<1x2x32xf32> to vector<2x32xf32>
    %133 = vector.shape_cast %129 : vector<2x32xf32> to vector<1x2x32xf32>
    tpu.vector_store %arg11[%130, %c0_42, %c0_43], %133 {strides = array<i32>} : memref<8x2x32xf32, #tpu.memory_space<vmem>>, vector<1x2x32xf32>,
    %c5_i32 = arith.constant 5 : i32
    %134 = arith.index_cast %c5_i32 : i32 to index
    %c0_44 = arith.constant 0 : index
    %c0_45 = arith.constant 0 : index
    %135 = vector.load %arg10[%134, %c0_44, %c0_45] : memref<8x2x128xf32, #tpu.memory_space<vmem>>, vector<1x2x128xf32>
    %136 = vector.shape_cast %135 : vector<1x2x128xf32> to vector<2x128xf32>
    %cst_46 = arith.constant dense<0.000000e+00> : vector<2x128xf32>
    %137 = tpu.matmul %129, %12, %cst_46 {dimension_numbers = #tpu.dot_dimension_numbers<[1], [0], [0], [1], [0, 0, 1, 1], [], []>} : vector<2x32xf32>, vector<32x128xf32>, vector<2x128xf32> -> vector<2x128xf32>
    %138 = arith.addf %136, %137 : vector<2x128xf32>
    %139 = arith.negf %138 : vector<2x128xf32>
    %140 = math.exp %139 : vector<2x128xf32>
    %cst_47 = arith.constant 1.000000e+00 : f32
    %141 = vector.broadcast %cst_47 : f32 to vector<2x128xf32>
    %142 = arith.addf %141, %140 : vector<2x128xf32>
    %143 = arith.divf %141, %142 : vector<2x128xf32>
    %144 = math.tanh %138 : vector<2x128xf32>
    %145 = vector.extract_strided_slice %143 {offsets = [0, 0], sizes = [2, 32], strides = [1, 1]} : vector<2x128xf32> to vector<2x32xf32>
    %146 = vector.extract_strided_slice %143 {offsets = [0, 32], sizes = [2, 32], strides = [1, 1]} : vector<2x128xf32> to vector<2x32xf32>
    %147 = vector.extract_strided_slice %144 {offsets = [0, 64], sizes = [2, 32], strides = [1, 1]} : vector<2x128xf32> to vector<2x32xf32>
    %148 = vector.extract_strided_slice %143 {offsets = [0, 96], sizes = [2, 32], strides = [1, 1]} : vector<2x128xf32> to vector<2x32xf32>
    %149 = arith.mulf %146, %127 : vector<2x32xf32>
    %150 = arith.mulf %145, %147 : vector<2x32xf32>
    %151 = arith.addf %149, %150 : vector<2x32xf32>
    %152 = math.tanh %151 : vector<2x32xf32>
    %153 = arith.mulf %148, %152 : vector<2x32xf32>
    %154 = arith.index_cast %c5_i32 : i32 to index
    %c0_48 = arith.constant 0 : index
    %c0_49 = arith.constant 0 : index
    %155 = vector.load %arg11[%154, %c0_48, %c0_49] : memref<8x2x32xf32, #tpu.memory_space<vmem>>, vector<1x2x32xf32>
    %156 = vector.shape_cast %155 : vector<1x2x32xf32> to vector<2x32xf32>
    %157 = vector.shape_cast %153 : vector<2x32xf32> to vector<1x2x32xf32>
    tpu.vector_store %arg11[%154, %c0_48, %c0_49], %157 {strides = array<i32>} : memref<8x2x32xf32, #tpu.memory_space<vmem>>, vector<1x2x32xf32>,
    %c6_i32 = arith.constant 6 : i32
    %158 = arith.index_cast %c6_i32 : i32 to index
    %c0_50 = arith.constant 0 : index
    %c0_51 = arith.constant 0 : index
    %159 = vector.load %arg10[%158, %c0_50, %c0_51] : memref<8x2x128xf32, #tpu.memory_space<vmem>>, vector<1x2x128xf32>
    %160 = vector.shape_cast %159 : vector<1x2x128xf32> to vector<2x128xf32>
    %cst_52 = arith.constant dense<0.000000e+00> : vector<2x128xf32>
    %161 = tpu.matmul %153, %12, %cst_52 {dimension_numbers = #tpu.dot_dimension_numbers<[1], [0], [0], [1], [0, 0, 1, 1], [], []>} : vector<2x32xf32>, vector<32x128xf32>, vector<2x128xf32> -> vector<2x128xf32>
    %162 = arith.addf %160, %161 : vector<2x128xf32>
    %163 = arith.negf %162 : vector<2x128xf32>
    %164 = math.exp %163 : vector<2x128xf32>
    %cst_53 = arith.constant 1.000000e+00 : f32
    %165 = vector.broadcast %cst_53 : f32 to vector<2x128xf32>
    %166 = arith.addf %165, %164 : vector<2x128xf32>
    %167 = arith.divf %165, %166 : vector<2x128xf32>
    %168 = math.tanh %162 : vector<2x128xf32>
    %169 = vector.extract_strided_slice %167 {offsets = [0, 0], sizes = [2, 32], strides = [1, 1]} : vector<2x128xf32> to vector<2x32xf32>
    %170 = vector.extract_strided_slice %167 {offsets = [0, 32], sizes = [2, 32], strides = [1, 1]} : vector<2x128xf32> to vector<2x32xf32>
    %171 = vector.extract_strided_slice %168 {offsets = [0, 64], sizes = [2, 32], strides = [1, 1]} : vector<2x128xf32> to vector<2x32xf32>
    %172 = vector.extract_strided_slice %167 {offsets = [0, 96], sizes = [2, 32], strides = [1, 1]} : vector<2x128xf32> to vector<2x32xf32>
    %173 = arith.mulf %170, %151 : vector<2x32xf32>
    %174 = arith.mulf %169, %171 : vector<2x32xf32>
    %175 = arith.addf %173, %174 : vector<2x32xf32>
    %176 = math.tanh %175 : vector<2x32xf32>
    %177 = arith.mulf %172, %176 : vector<2x32xf32>
    %178 = arith.index_cast %c6_i32 : i32 to index
    %c0_54 = arith.constant 0 : index
    %c0_55 = arith.constant 0 : index
    %179 = vector.load %arg11[%178, %c0_54, %c0_55] : memref<8x2x32xf32, #tpu.memory_space<vmem>>, vector<1x2x32xf32>
    %180 = vector.shape_cast %179 : vector<1x2x32xf32> to vector<2x32xf32>
    %181 = vector.shape_cast %177 : vector<2x32xf32> to vector<1x2x32xf32>
    tpu.vector_store %arg11[%178, %c0_54, %c0_55], %181 {strides = array<i32>} : memref<8x2x32xf32, #tpu.memory_space<vmem>>, vector<1x2x32xf32>,
    %c7_i32 = arith.constant 7 : i32
    %182 = arith.index_cast %c7_i32 : i32 to index
    %c0_56 = arith.constant 0 : index
    %c0_57 = arith.constant 0 : index
    %183 = vector.load %arg10[%182, %c0_56, %c0_57] : memref<8x2x128xf32, #tpu.memory_space<vmem>>, vector<1x2x128xf32>
    %184 = vector.shape_cast %183 : vector<1x2x128xf32> to vector<2x128xf32>
    %cst_58 = arith.constant dense<0.000000e+00> : vector<2x128xf32>
    %185 = tpu.matmul %177, %12, %cst_58 {dimension_numbers = #tpu.dot_dimension_numbers<[1], [0], [0], [1], [0, 0, 1, 1], [], []>} : vector<2x32xf32>, vector<32x128xf32>, vector<2x128xf32> -> vector<2x128xf32>
    %186 = arith.addf %184, %185 : vector<2x128xf32>
    %187 = arith.negf %186 : vector<2x128xf32>
    %188 = math.exp %187 : vector<2x128xf32>
    %cst_59 = arith.constant 1.000000e+00 : f32
    %189 = vector.broadcast %cst_59 : f32 to vector<2x128xf32>
    %190 = arith.addf %189, %188 : vector<2x128xf32>
    %191 = arith.divf %189, %190 : vector<2x128xf32>
    %192 = math.tanh %186 : vector<2x128xf32>
    %193 = vector.extract_strided_slice %191 {offsets = [0, 0], sizes = [2, 32], strides = [1, 1]} : vector<2x128xf32> to vector<2x32xf32>
    %194 = vector.extract_strided_slice %191 {offsets = [0, 32], sizes = [2, 32], strides = [1, 1]} : vector<2x128xf32> to vector<2x32xf32>
    %195 = vector.extract_strided_slice %192 {offsets = [0, 64], sizes = [2, 32], strides = [1, 1]} : vector<2x128xf32> to vector<2x32xf32>
    %196 = vector.extract_strided_slice %191 {offsets = [0, 96], sizes = [2, 32], strides = [1, 1]} : vector<2x128xf32> to vector<2x32xf32>
    %197 = arith.mulf %194, %175 : vector<2x32xf32>
    %198 = arith.mulf %193, %195 : vector<2x32xf32>
    %199 = arith.addf %197, %198 : vector<2x32xf32>
    %200 = math.tanh %199 : vector<2x32xf32>
    %201 = arith.mulf %196, %200 : vector<2x32xf32>
    %202 = arith.index_cast %c7_i32 : i32 to index
    %c0_60 = arith.constant 0 : index
    %c0_61 = arith.constant 0 : index
    %203 = vector.load %arg11[%202, %c0_60, %c0_61] : memref<8x2x32xf32, #tpu.memory_space<vmem>>, vector<1x2x32xf32>
    %204 = vector.shape_cast %203 : vector<1x2x32xf32> to vector<2x32xf32>
    %205 = vector.shape_cast %201 : vector<2x32xf32> to vector<1x2x32xf32>
    tpu.vector_store %arg11[%202, %c0_60, %c0_61], %205 {strides = array<i32>} : memref<8x2x32xf32, #tpu.memory_space<vmem>>, vector<1x2x32xf32>,
    %c8_i32 = arith.constant 8 : i32
    %c0_62 = arith.constant 0 : index
    %c0_63 = arith.constant 0 : index
    %c0_64 = arith.constant 0 : index
    %206 = vector.load %arg11[%c0_62, %c0_63, %c0_64] : memref<8x2x32xf32, #tpu.memory_space<vmem>>, vector<8x2x32xf32>
    %207 = vector.shape_cast %206 : vector<8x2x32xf32> to vector<16x32xf32>
    %c0_65 = arith.constant 0 : index
    %c0_66 = arith.constant 0 : index
    %c0_67 = arith.constant 0 : index
    %208 = vector.load %arg2[%c0_65, %c0_66, %c0_67] : memref<2x32x128xf32, #tpu.memory_space<vmem>>, vector<1x32x128xf32>
    %209 = vector.shape_cast %208 : vector<1x32x128xf32> to vector<32x128xf32>
    %cst_68 = arith.constant dense<0.000000e+00> : vector<16x128xf32>
    %210 = tpu.matmul %207, %209, %cst_68 {dimension_numbers = #tpu.dot_dimension_numbers<[1], [0], [0], [1], [0, 0, 1, 1], [], []>} : vector<16x32xf32>, vector<32x128xf32>, vector<16x128xf32> -> vector<16x128xf32>
    %c1 = arith.constant 1 : index
    %c0_69 = arith.constant 0 : index
    %c0_70 = arith.constant 0 : index
    %211 = vector.load %arg4[%c1, %c0_69, %c0_70] : memref<3x1x128xf32, #tpu.memory_space<vmem>>, vector<1x1x128xf32>
    %212 = vector.shape_cast %211 : vector<1x1x128xf32> to vector<1x128xf32>
    %213 = vector.broadcast %212 : vector<1x128xf32> to vector<16x128xf32>
    %214 = arith.addf %210, %213 : vector<16x128xf32>
    %215 = vector.shape_cast %214 : vector<16x128xf32> to vector<8x2x128xf32>
    %c0_71 = arith.constant 0 : index
    %c0_72 = arith.constant 0 : index
    %c0_73 = arith.constant 0 : index
    %216 = vector.load %arg10[%c0_71, %c0_72, %c0_73] : memref<8x2x128xf32, #tpu.memory_space<vmem>>, vector<8x2x128xf32>
    tpu.vector_store %arg10[%c0_71, %c0_72, %c0_73], %215 {strides = array<i32>} : memref<8x2x128xf32, #tpu.memory_space<vmem>>, vector<8x2x128xf32>,
    %c1_74 = arith.constant 1 : index
    %c0_75 = arith.constant 0 : index
    %c0_76 = arith.constant 0 : index
    %217 = vector.load %arg3[%c1_74, %c0_75, %c0_76] : memref<3x32x128xf32, #tpu.memory_space<vmem>>, vector<1x32x128xf32>
    %218 = vector.shape_cast %217 : vector<1x32x128xf32> to vector<32x128xf32>
    %cst_77 = arith.constant 0.000000e+00 : f32
    %219 = vector.broadcast %cst_77 : f32 to vector<2x32xf32>
    %c0_i32_78 = arith.constant 0 : i32
    %220 = arith.index_cast %c0_i32_78 : i32 to index
    %c0_79 = arith.constant 0 : index
    %c0_80 = arith.constant 0 : index
    %221 = vector.load %arg10[%220, %c0_79, %c0_80] : memref<8x2x128xf32, #tpu.memory_space<vmem>>, vector<1x2x128xf32>
    %222 = vector.shape_cast %221 : vector<1x2x128xf32> to vector<2x128xf32>
    %cst_81 = arith.constant dense<0.000000e+00> : vector<2x128xf32>
    %223 = tpu.matmul %219, %218, %cst_81 {dimension_numbers = #tpu.dot_dimension_numbers<[1], [0], [0], [1], [0, 0, 1, 1], [], []>} : vector<2x32xf32>, vector<32x128xf32>, vector<2x128xf32> -> vector<2x128xf32>
    %224 = arith.addf %222, %223 : vector<2x128xf32>
    %225 = arith.negf %224 : vector<2x128xf32>
    %226 = math.exp %225 : vector<2x128xf32>
    %cst_82 = arith.constant 1.000000e+00 : f32
    %227 = vector.broadcast %cst_82 : f32 to vector<2x128xf32>
    %228 = arith.addf %227, %226 : vector<2x128xf32>
    %229 = arith.divf %227, %228 : vector<2x128xf32>
    %230 = math.tanh %224 : vector<2x128xf32>
    %231 = vector.extract_strided_slice %229 {offsets = [0, 0], sizes = [2, 32], strides = [1, 1]} : vector<2x128xf32> to vector<2x32xf32>
    %232 = vector.extract_strided_slice %229 {offsets = [0, 32], sizes = [2, 32], strides = [1, 1]} : vector<2x128xf32> to vector<2x32xf32>
    %233 = vector.extract_strided_slice %230 {offsets = [0, 64], sizes = [2, 32], strides = [1, 1]} : vector<2x128xf32> to vector<2x32xf32>
    %234 = vector.extract_strided_slice %229 {offsets = [0, 96], sizes = [2, 32], strides = [1, 1]} : vector<2x128xf32> to vector<2x32xf32>
    %235 = arith.mulf %232, %219 : vector<2x32xf32>
    %236 = arith.mulf %231, %233 : vector<2x32xf32>
    %237 = arith.addf %235, %236 : vector<2x32xf32>
    %238 = math.tanh %237 : vector<2x32xf32>
    %239 = arith.mulf %234, %238 : vector<2x32xf32>
    %240 = arith.index_cast %c0_i32_78 : i32 to index
    %c0_83 = arith.constant 0 : index
    %c0_84 = arith.constant 0 : index
    %241 = vector.load %arg11[%240, %c0_83, %c0_84] : memref<8x2x32xf32, #tpu.memory_space<vmem>>, vector<1x2x32xf32>
    %242 = vector.shape_cast %241 : vector<1x2x32xf32> to vector<2x32xf32>
    %243 = vector.shape_cast %239 : vector<2x32xf32> to vector<1x2x32xf32>
    tpu.vector_store %arg11[%240, %c0_83, %c0_84], %243 {strides = array<i32>} : memref<8x2x32xf32, #tpu.memory_space<vmem>>, vector<1x2x32xf32>,
    %c1_i32_85 = arith.constant 1 : i32
    %244 = arith.index_cast %c1_i32_85 : i32 to index
    %c0_86 = arith.constant 0 : index
    %c0_87 = arith.constant 0 : index
    %245 = vector.load %arg10[%244, %c0_86, %c0_87] : memref<8x2x128xf32, #tpu.memory_space<vmem>>, vector<1x2x128xf32>
    %246 = vector.shape_cast %245 : vector<1x2x128xf32> to vector<2x128xf32>
    %cst_88 = arith.constant dense<0.000000e+00> : vector<2x128xf32>
    %247 = tpu.matmul %239, %218, %cst_88 {dimension_numbers = #tpu.dot_dimension_numbers<[1], [0], [0], [1], [0, 0, 1, 1], [], []>} : vector<2x32xf32>, vector<32x128xf32>, vector<2x128xf32> -> vector<2x128xf32>
    %248 = arith.addf %246, %247 : vector<2x128xf32>
    %249 = arith.negf %248 : vector<2x128xf32>
    %250 = math.exp %249 : vector<2x128xf32>
    %cst_89 = arith.constant 1.000000e+00 : f32
    %251 = vector.broadcast %cst_89 : f32 to vector<2x128xf32>
    %252 = arith.addf %251, %250 : vector<2x128xf32>
    %253 = arith.divf %251, %252 : vector<2x128xf32>
    %254 = math.tanh %248 : vector<2x128xf32>
    %255 = vector.extract_strided_slice %253 {offsets = [0, 0], sizes = [2, 32], strides = [1, 1]} : vector<2x128xf32> to vector<2x32xf32>
    %256 = vector.extract_strided_slice %253 {offsets = [0, 32], sizes = [2, 32], strides = [1, 1]} : vector<2x128xf32> to vector<2x32xf32>
    %257 = vector.extract_strided_slice %254 {offsets = [0, 64], sizes = [2, 32], strides = [1, 1]} : vector<2x128xf32> to vector<2x32xf32>
    %258 = vector.extract_strided_slice %253 {offsets = [0, 96], sizes = [2, 32], strides = [1, 1]} : vector<2x128xf32> to vector<2x32xf32>
    %259 = arith.mulf %256, %237 : vector<2x32xf32>
    %260 = arith.mulf %255, %257 : vector<2x32xf32>
    %261 = arith.addf %259, %260 : vector<2x32xf32>
    %262 = math.tanh %261 : vector<2x32xf32>
    %263 = arith.mulf %258, %262 : vector<2x32xf32>
    %264 = arith.index_cast %c1_i32_85 : i32 to index
    %c0_90 = arith.constant 0 : index
    %c0_91 = arith.constant 0 : index
    %265 = vector.load %arg11[%264, %c0_90, %c0_91] : memref<8x2x32xf32, #tpu.memory_space<vmem>>, vector<1x2x32xf32>
    %266 = vector.shape_cast %265 : vector<1x2x32xf32> to vector<2x32xf32>
    %267 = vector.shape_cast %263 : vector<2x32xf32> to vector<1x2x32xf32>
    tpu.vector_store %arg11[%264, %c0_90, %c0_91], %267 {strides = array<i32>} : memref<8x2x32xf32, #tpu.memory_space<vmem>>, vector<1x2x32xf32>,
    %c2_i32_92 = arith.constant 2 : i32
    %268 = arith.index_cast %c2_i32_92 : i32 to index
    %c0_93 = arith.constant 0 : index
    %c0_94 = arith.constant 0 : index
    %269 = vector.load %arg10[%268, %c0_93, %c0_94] : memref<8x2x128xf32, #tpu.memory_space<vmem>>, vector<1x2x128xf32>
    %270 = vector.shape_cast %269 : vector<1x2x128xf32> to vector<2x128xf32>
    %cst_95 = arith.constant dense<0.000000e+00> : vector<2x128xf32>
    %271 = tpu.matmul %263, %218, %cst_95 {dimension_numbers = #tpu.dot_dimension_numbers<[1], [0], [0], [1], [0, 0, 1, 1], [], []>} : vector<2x32xf32>, vector<32x128xf32>, vector<2x128xf32> -> vector<2x128xf32>
    %272 = arith.addf %270, %271 : vector<2x128xf32>
    %273 = arith.negf %272 : vector<2x128xf32>
    %274 = math.exp %273 : vector<2x128xf32>
    %cst_96 = arith.constant 1.000000e+00 : f32
    %275 = vector.broadcast %cst_96 : f32 to vector<2x128xf32>
    %276 = arith.addf %275, %274 : vector<2x128xf32>
    %277 = arith.divf %275, %276 : vector<2x128xf32>
    %278 = math.tanh %272 : vector<2x128xf32>
    %279 = vector.extract_strided_slice %277 {offsets = [0, 0], sizes = [2, 32], strides = [1, 1]} : vector<2x128xf32> to vector<2x32xf32>
    %280 = vector.extract_strided_slice %277 {offsets = [0, 32], sizes = [2, 32], strides = [1, 1]} : vector<2x128xf32> to vector<2x32xf32>
    %281 = vector.extract_strided_slice %278 {offsets = [0, 64], sizes = [2, 32], strides = [1, 1]} : vector<2x128xf32> to vector<2x32xf32>
    %282 = vector.extract_strided_slice %277 {offsets = [0, 96], sizes = [2, 32], strides = [1, 1]} : vector<2x128xf32> to vector<2x32xf32>
    %283 = arith.mulf %280, %261 : vector<2x32xf32>
    %284 = arith.mulf %279, %281 : vector<2x32xf32>
    %285 = arith.addf %283, %284 : vector<2x32xf32>
    %286 = math.tanh %285 : vector<2x32xf32>
    %287 = arith.mulf %282, %286 : vector<2x32xf32>
    %288 = arith.index_cast %c2_i32_92 : i32 to index
    %c0_97 = arith.constant 0 : index
    %c0_98 = arith.constant 0 : index
    %289 = vector.load %arg11[%288, %c0_97, %c0_98] : memref<8x2x32xf32, #tpu.memory_space<vmem>>, vector<1x2x32xf32>
    %290 = vector.shape_cast %289 : vector<1x2x32xf32> to vector<2x32xf32>
    %291 = vector.shape_cast %287 : vector<2x32xf32> to vector<1x2x32xf32>
    tpu.vector_store %arg11[%288, %c0_97, %c0_98], %291 {strides = array<i32>} : memref<8x2x32xf32, #tpu.memory_space<vmem>>, vector<1x2x32xf32>,
    %c3_i32_99 = arith.constant 3 : i32
    %292 = arith.index_cast %c3_i32_99 : i32 to index
    %c0_100 = arith.constant 0 : index
    %c0_101 = arith.constant 0 : index
    %293 = vector.load %arg10[%292, %c0_100, %c0_101] : memref<8x2x128xf32, #tpu.memory_space<vmem>>, vector<1x2x128xf32>
    %294 = vector.shape_cast %293 : vector<1x2x128xf32> to vector<2x128xf32>
    %cst_102 = arith.constant dense<0.000000e+00> : vector<2x128xf32>
    %295 = tpu.matmul %287, %218, %cst_102 {dimension_numbers = #tpu.dot_dimension_numbers<[1], [0], [0], [1], [0, 0, 1, 1], [], []>} : vector<2x32xf32>, vector<32x128xf32>, vector<2x128xf32> -> vector<2x128xf32>
    %296 = arith.addf %294, %295 : vector<2x128xf32>
    %297 = arith.negf %296 : vector<2x128xf32>
    %298 = math.exp %297 : vector<2x128xf32>
    %cst_103 = arith.constant 1.000000e+00 : f32
    %299 = vector.broadcast %cst_103 : f32 to vector<2x128xf32>
    %300 = arith.addf %299, %298 : vector<2x128xf32>
    %301 = arith.divf %299, %300 : vector<2x128xf32>
    %302 = math.tanh %296 : vector<2x128xf32>
    %303 = vector.extract_strided_slice %301 {offsets = [0, 0], sizes = [2, 32], strides = [1, 1]} : vector<2x128xf32> to vector<2x32xf32>
    %304 = vector.extract_strided_slice %301 {offsets = [0, 32], sizes = [2, 32], strides = [1, 1]} : vector<2x128xf32> to vector<2x32xf32>
    %305 = vector.extract_strided_slice %302 {offsets = [0, 64], sizes = [2, 32], strides = [1, 1]} : vector<2x128xf32> to vector<2x32xf32>
    %306 = vector.extract_strided_slice %301 {offsets = [0, 96], sizes = [2, 32], strides = [1, 1]} : vector<2x128xf32> to vector<2x32xf32>
    %307 = arith.mulf %304, %285 : vector<2x32xf32>
    %308 = arith.mulf %303, %305 : vector<2x32xf32>
    %309 = arith.addf %307, %308 : vector<2x32xf32>
    %310 = math.tanh %309 : vector<2x32xf32>
    %311 = arith.mulf %306, %310 : vector<2x32xf32>
    %312 = arith.index_cast %c3_i32_99 : i32 to index
    %c0_104 = arith.constant 0 : index
    %c0_105 = arith.constant 0 : index
    %313 = vector.load %arg11[%312, %c0_104, %c0_105] : memref<8x2x32xf32, #tpu.memory_space<vmem>>, vector<1x2x32xf32>
    %314 = vector.shape_cast %313 : vector<1x2x32xf32> to vector<2x32xf32>
    %315 = vector.shape_cast %311 : vector<2x32xf32> to vector<1x2x32xf32>
    tpu.vector_store %arg11[%312, %c0_104, %c0_105], %315 {strides = array<i32>} : memref<8x2x32xf32, #tpu.memory_space<vmem>>, vector<1x2x32xf32>,
    %c4_i32_106 = arith.constant 4 : i32
    %316 = arith.index_cast %c4_i32_106 : i32 to index
    %c0_107 = arith.constant 0 : index
    %c0_108 = arith.constant 0 : index
    %317 = vector.load %arg10[%316, %c0_107, %c0_108] : memref<8x2x128xf32, #tpu.memory_space<vmem>>, vector<1x2x128xf32>
    %318 = vector.shape_cast %317 : vector<1x2x128xf32> to vector<2x128xf32>
    %cst_109 = arith.constant dense<0.000000e+00> : vector<2x128xf32>
    %319 = tpu.matmul %311, %218, %cst_109 {dimension_numbers = #tpu.dot_dimension_numbers<[1], [0], [0], [1], [0, 0, 1, 1], [], []>} : vector<2x32xf32>, vector<32x128xf32>, vector<2x128xf32> -> vector<2x128xf32>
    %320 = arith.addf %318, %319 : vector<2x128xf32>
    %321 = arith.negf %320 : vector<2x128xf32>
    %322 = math.exp %321 : vector<2x128xf32>
    %cst_110 = arith.constant 1.000000e+00 : f32
    %323 = vector.broadcast %cst_110 : f32 to vector<2x128xf32>
    %324 = arith.addf %323, %322 : vector<2x128xf32>
    %325 = arith.divf %323, %324 : vector<2x128xf32>
    %326 = math.tanh %320 : vector<2x128xf32>
    %327 = vector.extract_strided_slice %325 {offsets = [0, 0], sizes = [2, 32], strides = [1, 1]} : vector<2x128xf32> to vector<2x32xf32>
    %328 = vector.extract_strided_slice %325 {offsets = [0, 32], sizes = [2, 32], strides = [1, 1]} : vector<2x128xf32> to vector<2x32xf32>
    %329 = vector.extract_strided_slice %326 {offsets = [0, 64], sizes = [2, 32], strides = [1, 1]} : vector<2x128xf32> to vector<2x32xf32>
    %330 = vector.extract_strided_slice %325 {offsets = [0, 96], sizes = [2, 32], strides = [1, 1]} : vector<2x128xf32> to vector<2x32xf32>
    %331 = arith.mulf %328, %309 : vector<2x32xf32>
    %332 = arith.mulf %327, %329 : vector<2x32xf32>
    %333 = arith.addf %331, %332 : vector<2x32xf32>
    %334 = math.tanh %333 : vector<2x32xf32>
    %335 = arith.mulf %330, %334 : vector<2x32xf32>
    %336 = arith.index_cast %c4_i32_106 : i32 to index
    %c0_111 = arith.constant 0 : index
    %c0_112 = arith.constant 0 : index
    %337 = vector.load %arg11[%336, %c0_111, %c0_112] : memref<8x2x32xf32, #tpu.memory_space<vmem>>, vector<1x2x32xf32>
    %338 = vector.shape_cast %337 : vector<1x2x32xf32> to vector<2x32xf32>
    %339 = vector.shape_cast %335 : vector<2x32xf32> to vector<1x2x32xf32>
    tpu.vector_store %arg11[%336, %c0_111, %c0_112], %339 {strides = array<i32>} : memref<8x2x32xf32, #tpu.memory_space<vmem>>, vector<1x2x32xf32>,
    %c5_i32_113 = arith.constant 5 : i32
    %340 = arith.index_cast %c5_i32_113 : i32 to index
    %c0_114 = arith.constant 0 : index
    %c0_115 = arith.constant 0 : index
    %341 = vector.load %arg10[%340, %c0_114, %c0_115] : memref<8x2x128xf32, #tpu.memory_space<vmem>>, vector<1x2x128xf32>
    %342 = vector.shape_cast %341 : vector<1x2x128xf32> to vector<2x128xf32>
    %cst_116 = arith.constant dense<0.000000e+00> : vector<2x128xf32>
    %343 = tpu.matmul %335, %218, %cst_116 {dimension_numbers = #tpu.dot_dimension_numbers<[1], [0], [0], [1], [0, 0, 1, 1], [], []>} : vector<2x32xf32>, vector<32x128xf32>, vector<2x128xf32> -> vector<2x128xf32>
    %344 = arith.addf %342, %343 : vector<2x128xf32>
    %345 = arith.negf %344 : vector<2x128xf32>
    %346 = math.exp %345 : vector<2x128xf32>
    %cst_117 = arith.constant 1.000000e+00 : f32
    %347 = vector.broadcast %cst_117 : f32 to vector<2x128xf32>
    %348 = arith.addf %347, %346 : vector<2x128xf32>
    %349 = arith.divf %347, %348 : vector<2x128xf32>
    %350 = math.tanh %344 : vector<2x128xf32>
    %351 = vector.extract_strided_slice %349 {offsets = [0, 0], sizes = [2, 32], strides = [1, 1]} : vector<2x128xf32> to vector<2x32xf32>
    %352 = vector.extract_strided_slice %349 {offsets = [0, 32], sizes = [2, 32], strides = [1, 1]} : vector<2x128xf32> to vector<2x32xf32>
    %353 = vector.extract_strided_slice %350 {offsets = [0, 64], sizes = [2, 32], strides = [1, 1]} : vector<2x128xf32> to vector<2x32xf32>
    %354 = vector.extract_strided_slice %349 {offsets = [0, 96], sizes = [2, 32], strides = [1, 1]} : vector<2x128xf32> to vector<2x32xf32>
    %355 = arith.mulf %352, %333 : vector<2x32xf32>
    %356 = arith.mulf %351, %353 : vector<2x32xf32>
    %357 = arith.addf %355, %356 : vector<2x32xf32>
    %358 = math.tanh %357 : vector<2x32xf32>
    %359 = arith.mulf %354, %358 : vector<2x32xf32>
    %360 = arith.index_cast %c5_i32_113 : i32 to index
    %c0_118 = arith.constant 0 : index
    %c0_119 = arith.constant 0 : index
    %361 = vector.load %arg11[%360, %c0_118, %c0_119] : memref<8x2x32xf32, #tpu.memory_space<vmem>>, vector<1x2x32xf32>
    %362 = vector.shape_cast %361 : vector<1x2x32xf32> to vector<2x32xf32>
    %363 = vector.shape_cast %359 : vector<2x32xf32> to vector<1x2x32xf32>
    tpu.vector_store %arg11[%360, %c0_118, %c0_119], %363 {strides = array<i32>} : memref<8x2x32xf32, #tpu.memory_space<vmem>>, vector<1x2x32xf32>,
    %c6_i32_120 = arith.constant 6 : i32
    %364 = arith.index_cast %c6_i32_120 : i32 to index
    %c0_121 = arith.constant 0 : index
    %c0_122 = arith.constant 0 : index
    %365 = vector.load %arg10[%364, %c0_121, %c0_122] : memref<8x2x128xf32, #tpu.memory_space<vmem>>, vector<1x2x128xf32>
    %366 = vector.shape_cast %365 : vector<1x2x128xf32> to vector<2x128xf32>
    %cst_123 = arith.constant dense<0.000000e+00> : vector<2x128xf32>
    %367 = tpu.matmul %359, %218, %cst_123 {dimension_numbers = #tpu.dot_dimension_numbers<[1], [0], [0], [1], [0, 0, 1, 1], [], []>} : vector<2x32xf32>, vector<32x128xf32>, vector<2x128xf32> -> vector<2x128xf32>
    %368 = arith.addf %366, %367 : vector<2x128xf32>
    %369 = arith.negf %368 : vector<2x128xf32>
    %370 = math.exp %369 : vector<2x128xf32>
    %cst_124 = arith.constant 1.000000e+00 : f32
    %371 = vector.broadcast %cst_124 : f32 to vector<2x128xf32>
    %372 = arith.addf %371, %370 : vector<2x128xf32>
    %373 = arith.divf %371, %372 : vector<2x128xf32>
    %374 = math.tanh %368 : vector<2x128xf32>
    %375 = vector.extract_strided_slice %373 {offsets = [0, 0], sizes = [2, 32], strides = [1, 1]} : vector<2x128xf32> to vector<2x32xf32>
    %376 = vector.extract_strided_slice %373 {offsets = [0, 32], sizes = [2, 32], strides = [1, 1]} : vector<2x128xf32> to vector<2x32xf32>
    %377 = vector.extract_strided_slice %374 {offsets = [0, 64], sizes = [2, 32], strides = [1, 1]} : vector<2x128xf32> to vector<2x32xf32>
    %378 = vector.extract_strided_slice %373 {offsets = [0, 96], sizes = [2, 32], strides = [1, 1]} : vector<2x128xf32> to vector<2x32xf32>
    %379 = arith.mulf %376, %357 : vector<2x32xf32>
    %380 = arith.mulf %375, %377 : vector<2x32xf32>
    %381 = arith.addf %379, %380 : vector<2x32xf32>
    %382 = math.tanh %381 : vector<2x32xf32>
    %383 = arith.mulf %378, %382 : vector<2x32xf32>
    %384 = arith.index_cast %c6_i32_120 : i32 to index
    %c0_125 = arith.constant 0 : index
    %c0_126 = arith.constant 0 : index
    %385 = vector.load %arg11[%384, %c0_125, %c0_126] : memref<8x2x32xf32, #tpu.memory_space<vmem>>, vector<1x2x32xf32>
    %386 = vector.shape_cast %385 : vector<1x2x32xf32> to vector<2x32xf32>
    %387 = vector.shape_cast %383 : vector<2x32xf32> to vector<1x2x32xf32>
    tpu.vector_store %arg11[%384, %c0_125, %c0_126], %387 {strides = array<i32>} : memref<8x2x32xf32, #tpu.memory_space<vmem>>, vector<1x2x32xf32>,
    %c7_i32_127 = arith.constant 7 : i32
    %388 = arith.index_cast %c7_i32_127 : i32 to index
    %c0_128 = arith.constant 0 : index
    %c0_129 = arith.constant 0 : index
    %389 = vector.load %arg10[%388, %c0_128, %c0_129] : memref<8x2x128xf32, #tpu.memory_space<vmem>>, vector<1x2x128xf32>
    %390 = vector.shape_cast %389 : vector<1x2x128xf32> to vector<2x128xf32>
    %cst_130 = arith.constant dense<0.000000e+00> : vector<2x128xf32>
    %391 = tpu.matmul %383, %218, %cst_130 {dimension_numbers = #tpu.dot_dimension_numbers<[1], [0], [0], [1], [0, 0, 1, 1], [], []>} : vector<2x32xf32>, vector<32x128xf32>, vector<2x128xf32> -> vector<2x128xf32>
    %392 = arith.addf %390, %391 : vector<2x128xf32>
    %393 = arith.negf %392 : vector<2x128xf32>
    %394 = math.exp %393 : vector<2x128xf32>
    %cst_131 = arith.constant 1.000000e+00 : f32
    %395 = vector.broadcast %cst_131 : f32 to vector<2x128xf32>
    %396 = arith.addf %395, %394 : vector<2x128xf32>
    %397 = arith.divf %395, %396 : vector<2x128xf32>
    %398 = math.tanh %392 : vector<2x128xf32>
    %399 = vector.extract_strided_slice %397 {offsets = [0, 0], sizes = [2, 32], strides = [1, 1]} : vector<2x128xf32> to vector<2x32xf32>
    %400 = vector.extract_strided_slice %397 {offsets = [0, 32], sizes = [2, 32], strides = [1, 1]} : vector<2x128xf32> to vector<2x32xf32>
    %401 = vector.extract_strided_slice %398 {offsets = [0, 64], sizes = [2, 32], strides = [1, 1]} : vector<2x128xf32> to vector<2x32xf32>
    %402 = vector.extract_strided_slice %397 {offsets = [0, 96], sizes = [2, 32], strides = [1, 1]} : vector<2x128xf32> to vector<2x32xf32>
    %403 = arith.mulf %400, %381 : vector<2x32xf32>
    %404 = arith.mulf %399, %401 : vector<2x32xf32>
    %405 = arith.addf %403, %404 : vector<2x32xf32>
    %406 = math.tanh %405 : vector<2x32xf32>
    %407 = arith.mulf %402, %406 : vector<2x32xf32>
    %408 = arith.index_cast %c7_i32_127 : i32 to index
    %c0_132 = arith.constant 0 : index
    %c0_133 = arith.constant 0 : index
    %409 = vector.load %arg11[%408, %c0_132, %c0_133] : memref<8x2x32xf32, #tpu.memory_space<vmem>>, vector<1x2x32xf32>
    %410 = vector.shape_cast %409 : vector<1x2x32xf32> to vector<2x32xf32>
    %411 = vector.shape_cast %407 : vector<2x32xf32> to vector<1x2x32xf32>
    tpu.vector_store %arg11[%408, %c0_132, %c0_133], %411 {strides = array<i32>} : memref<8x2x32xf32, #tpu.memory_space<vmem>>, vector<1x2x32xf32>,
    %c8_i32_134 = arith.constant 8 : i32
    %c0_135 = arith.constant 0 : index
    %c0_136 = arith.constant 0 : index
    %c0_137 = arith.constant 0 : index
    %412 = vector.load %arg11[%c0_135, %c0_136, %c0_137] : memref<8x2x32xf32, #tpu.memory_space<vmem>>, vector<8x2x32xf32>
    %413 = vector.shape_cast %412 : vector<8x2x32xf32> to vector<16x32xf32>
    %c1_138 = arith.constant 1 : index
    %c0_139 = arith.constant 0 : index
    %c0_140 = arith.constant 0 : index
    %414 = vector.load %arg2[%c1_138, %c0_139, %c0_140] : memref<2x32x128xf32, #tpu.memory_space<vmem>>, vector<1x32x128xf32>
    %415 = vector.shape_cast %414 : vector<1x32x128xf32> to vector<32x128xf32>
    %cst_141 = arith.constant dense<0.000000e+00> : vector<16x128xf32>
    %416 = tpu.matmul %413, %415, %cst_141 {dimension_numbers = #tpu.dot_dimension_numbers<[1], [0], [0], [1], [0, 0, 1, 1], [], []>} : vector<16x32xf32>, vector<32x128xf32>, vector<16x128xf32> -> vector<16x128xf32>
    %c2 = arith.constant 2 : index
    %c0_142 = arith.constant 0 : index
    %c0_143 = arith.constant 0 : index
    %417 = vector.load %arg4[%c2, %c0_142, %c0_143] : memref<3x1x128xf32, #tpu.memory_space<vmem>>, vector<1x1x128xf32>
    %418 = vector.shape_cast %417 : vector<1x1x128xf32> to vector<1x128xf32>
    %419 = vector.broadcast %418 : vector<1x128xf32> to vector<16x128xf32>
    %420 = arith.addf %416, %419 : vector<16x128xf32>
    %421 = vector.shape_cast %420 : vector<16x128xf32> to vector<8x2x128xf32>
    %c0_144 = arith.constant 0 : index
    %c0_145 = arith.constant 0 : index
    %c0_146 = arith.constant 0 : index
    %422 = vector.load %arg10[%c0_144, %c0_145, %c0_146] : memref<8x2x128xf32, #tpu.memory_space<vmem>>, vector<8x2x128xf32>
    tpu.vector_store %arg10[%c0_144, %c0_145, %c0_146], %421 {strides = array<i32>} : memref<8x2x128xf32, #tpu.memory_space<vmem>>, vector<8x2x128xf32>,
    %c2_147 = arith.constant 2 : index
    %c0_148 = arith.constant 0 : index
    %c0_149 = arith.constant 0 : index
    %423 = vector.load %arg3[%c2_147, %c0_148, %c0_149] : memref<3x32x128xf32, #tpu.memory_space<vmem>>, vector<1x32x128xf32>
    %424 = vector.shape_cast %423 : vector<1x32x128xf32> to vector<32x128xf32>
    %cst_150 = arith.constant 0.000000e+00 : f32
    %425 = vector.broadcast %cst_150 : f32 to vector<2x32xf32>
    %c0_i32_151 = arith.constant 0 : i32
    %426 = arith.index_cast %c0_i32_151 : i32 to index
    %c0_152 = arith.constant 0 : index
    %c0_153 = arith.constant 0 : index
    %427 = vector.load %arg10[%426, %c0_152, %c0_153] : memref<8x2x128xf32, #tpu.memory_space<vmem>>, vector<1x2x128xf32>
    %428 = vector.shape_cast %427 : vector<1x2x128xf32> to vector<2x128xf32>
    %cst_154 = arith.constant dense<0.000000e+00> : vector<2x128xf32>
    %429 = tpu.matmul %425, %424, %cst_154 {dimension_numbers = #tpu.dot_dimension_numbers<[1], [0], [0], [1], [0, 0, 1, 1], [], []>} : vector<2x32xf32>, vector<32x128xf32>, vector<2x128xf32> -> vector<2x128xf32>
    %430 = arith.addf %428, %429 : vector<2x128xf32>
    %431 = arith.negf %430 : vector<2x128xf32>
    %432 = math.exp %431 : vector<2x128xf32>
    %cst_155 = arith.constant 1.000000e+00 : f32
    %433 = vector.broadcast %cst_155 : f32 to vector<2x128xf32>
    %434 = arith.addf %433, %432 : vector<2x128xf32>
    %435 = arith.divf %433, %434 : vector<2x128xf32>
    %436 = math.tanh %430 : vector<2x128xf32>
    %437 = vector.extract_strided_slice %435 {offsets = [0, 0], sizes = [2, 32], strides = [1, 1]} : vector<2x128xf32> to vector<2x32xf32>
    %438 = vector.extract_strided_slice %435 {offsets = [0, 32], sizes = [2, 32], strides = [1, 1]} : vector<2x128xf32> to vector<2x32xf32>
    %439 = vector.extract_strided_slice %436 {offsets = [0, 64], sizes = [2, 32], strides = [1, 1]} : vector<2x128xf32> to vector<2x32xf32>
    %440 = vector.extract_strided_slice %435 {offsets = [0, 96], sizes = [2, 32], strides = [1, 1]} : vector<2x128xf32> to vector<2x32xf32>
    %441 = arith.mulf %438, %425 : vector<2x32xf32>
    %442 = arith.mulf %437, %439 : vector<2x32xf32>
    %443 = arith.addf %441, %442 : vector<2x32xf32>
    %444 = math.tanh %443 : vector<2x32xf32>
    %445 = arith.mulf %440, %444 : vector<2x32xf32>
    %446 = arith.index_cast %c0_i32_151 : i32 to index
    %c0_156 = arith.constant 0 : index
    %c0_157 = arith.constant 0 : index
    %447 = vector.load %arg11[%446, %c0_156, %c0_157] : memref<8x2x32xf32, #tpu.memory_space<vmem>>, vector<1x2x32xf32>
    %448 = vector.shape_cast %447 : vector<1x2x32xf32> to vector<2x32xf32>
    %449 = vector.shape_cast %445 : vector<2x32xf32> to vector<1x2x32xf32>
    tpu.vector_store %arg11[%446, %c0_156, %c0_157], %449 {strides = array<i32>} : memref<8x2x32xf32, #tpu.memory_space<vmem>>, vector<1x2x32xf32>,
    %c1_i32_158 = arith.constant 1 : i32
    %450 = arith.index_cast %c1_i32_158 : i32 to index
    %c0_159 = arith.constant 0 : index
    %c0_160 = arith.constant 0 : index
    %451 = vector.load %arg10[%450, %c0_159, %c0_160] : memref<8x2x128xf32, #tpu.memory_space<vmem>>, vector<1x2x128xf32>
    %452 = vector.shape_cast %451 : vector<1x2x128xf32> to vector<2x128xf32>
    %cst_161 = arith.constant dense<0.000000e+00> : vector<2x128xf32>
    %453 = tpu.matmul %445, %424, %cst_161 {dimension_numbers = #tpu.dot_dimension_numbers<[1], [0], [0], [1], [0, 0, 1, 1], [], []>} : vector<2x32xf32>, vector<32x128xf32>, vector<2x128xf32> -> vector<2x128xf32>
    %454 = arith.addf %452, %453 : vector<2x128xf32>
    %455 = arith.negf %454 : vector<2x128xf32>
    %456 = math.exp %455 : vector<2x128xf32>
    %cst_162 = arith.constant 1.000000e+00 : f32
    %457 = vector.broadcast %cst_162 : f32 to vector<2x128xf32>
    %458 = arith.addf %457, %456 : vector<2x128xf32>
    %459 = arith.divf %457, %458 : vector<2x128xf32>
    %460 = math.tanh %454 : vector<2x128xf32>
    %461 = vector.extract_strided_slice %459 {offsets = [0, 0], sizes = [2, 32], strides = [1, 1]} : vector<2x128xf32> to vector<2x32xf32>
    %462 = vector.extract_strided_slice %459 {offsets = [0, 32], sizes = [2, 32], strides = [1, 1]} : vector<2x128xf32> to vector<2x32xf32>
    %463 = vector.extract_strided_slice %460 {offsets = [0, 64], sizes = [2, 32], strides = [1, 1]} : vector<2x128xf32> to vector<2x32xf32>
    %464 = vector.extract_strided_slice %459 {offsets = [0, 96], sizes = [2, 32], strides = [1, 1]} : vector<2x128xf32> to vector<2x32xf32>
    %465 = arith.mulf %462, %443 : vector<2x32xf32>
    %466 = arith.mulf %461, %463 : vector<2x32xf32>
    %467 = arith.addf %465, %466 : vector<2x32xf32>
    %468 = math.tanh %467 : vector<2x32xf32>
    %469 = arith.mulf %464, %468 : vector<2x32xf32>
    %470 = arith.index_cast %c1_i32_158 : i32 to index
    %c0_163 = arith.constant 0 : index
    %c0_164 = arith.constant 0 : index
    %471 = vector.load %arg11[%470, %c0_163, %c0_164] : memref<8x2x32xf32, #tpu.memory_space<vmem>>, vector<1x2x32xf32>
    %472 = vector.shape_cast %471 : vector<1x2x32xf32> to vector<2x32xf32>
    %473 = vector.shape_cast %469 : vector<2x32xf32> to vector<1x2x32xf32>
    tpu.vector_store %arg11[%470, %c0_163, %c0_164], %473 {strides = array<i32>} : memref<8x2x32xf32, #tpu.memory_space<vmem>>, vector<1x2x32xf32>,
    %c2_i32_165 = arith.constant 2 : i32
    %474 = arith.index_cast %c2_i32_165 : i32 to index
    %c0_166 = arith.constant 0 : index
    %c0_167 = arith.constant 0 : index
    %475 = vector.load %arg10[%474, %c0_166, %c0_167] : memref<8x2x128xf32, #tpu.memory_space<vmem>>, vector<1x2x128xf32>
    %476 = vector.shape_cast %475 : vector<1x2x128xf32> to vector<2x128xf32>
    %cst_168 = arith.constant dense<0.000000e+00> : vector<2x128xf32>
    %477 = tpu.matmul %469, %424, %cst_168 {dimension_numbers = #tpu.dot_dimension_numbers<[1], [0], [0], [1], [0, 0, 1, 1], [], []>} : vector<2x32xf32>, vector<32x128xf32>, vector<2x128xf32> -> vector<2x128xf32>
    %478 = arith.addf %476, %477 : vector<2x128xf32>
    %479 = arith.negf %478 : vector<2x128xf32>
    %480 = math.exp %479 : vector<2x128xf32>
    %cst_169 = arith.constant 1.000000e+00 : f32
    %481 = vector.broadcast %cst_169 : f32 to vector<2x128xf32>
    %482 = arith.addf %481, %480 : vector<2x128xf32>
    %483 = arith.divf %481, %482 : vector<2x128xf32>
    %484 = math.tanh %478 : vector<2x128xf32>
    %485 = vector.extract_strided_slice %483 {offsets = [0, 0], sizes = [2, 32], strides = [1, 1]} : vector<2x128xf32> to vector<2x32xf32>
    %486 = vector.extract_strided_slice %483 {offsets = [0, 32], sizes = [2, 32], strides = [1, 1]} : vector<2x128xf32> to vector<2x32xf32>
    %487 = vector.extract_strided_slice %484 {offsets = [0, 64], sizes = [2, 32], strides = [1, 1]} : vector<2x128xf32> to vector<2x32xf32>
    %488 = vector.extract_strided_slice %483 {offsets = [0, 96], sizes = [2, 32], strides = [1, 1]} : vector<2x128xf32> to vector<2x32xf32>
    %489 = arith.mulf %486, %467 : vector<2x32xf32>
    %490 = arith.mulf %485, %487 : vector<2x32xf32>
    %491 = arith.addf %489, %490 : vector<2x32xf32>
    %492 = math.tanh %491 : vector<2x32xf32>
    %493 = arith.mulf %488, %492 : vector<2x32xf32>
    %494 = arith.index_cast %c2_i32_165 : i32 to index
    %c0_170 = arith.constant 0 : index
    %c0_171 = arith.constant 0 : index
    %495 = vector.load %arg11[%494, %c0_170, %c0_171] : memref<8x2x32xf32, #tpu.memory_space<vmem>>, vector<1x2x32xf32>
    %496 = vector.shape_cast %495 : vector<1x2x32xf32> to vector<2x32xf32>
    %497 = vector.shape_cast %493 : vector<2x32xf32> to vector<1x2x32xf32>
    tpu.vector_store %arg11[%494, %c0_170, %c0_171], %497 {strides = array<i32>} : memref<8x2x32xf32, #tpu.memory_space<vmem>>, vector<1x2x32xf32>,
    %c3_i32_172 = arith.constant 3 : i32
    %498 = arith.index_cast %c3_i32_172 : i32 to index
    %c0_173 = arith.constant 0 : index
    %c0_174 = arith.constant 0 : index
    %499 = vector.load %arg10[%498, %c0_173, %c0_174] : memref<8x2x128xf32, #tpu.memory_space<vmem>>, vector<1x2x128xf32>
    %500 = vector.shape_cast %499 : vector<1x2x128xf32> to vector<2x128xf32>
    %cst_175 = arith.constant dense<0.000000e+00> : vector<2x128xf32>
    %501 = tpu.matmul %493, %424, %cst_175 {dimension_numbers = #tpu.dot_dimension_numbers<[1], [0], [0], [1], [0, 0, 1, 1], [], []>} : vector<2x32xf32>, vector<32x128xf32>, vector<2x128xf32> -> vector<2x128xf32>
    %502 = arith.addf %500, %501 : vector<2x128xf32>
    %503 = arith.negf %502 : vector<2x128xf32>
    %504 = math.exp %503 : vector<2x128xf32>
    %cst_176 = arith.constant 1.000000e+00 : f32
    %505 = vector.broadcast %cst_176 : f32 to vector<2x128xf32>
    %506 = arith.addf %505, %504 : vector<2x128xf32>
    %507 = arith.divf %505, %506 : vector<2x128xf32>
    %508 = math.tanh %502 : vector<2x128xf32>
    %509 = vector.extract_strided_slice %507 {offsets = [0, 0], sizes = [2, 32], strides = [1, 1]} : vector<2x128xf32> to vector<2x32xf32>
    %510 = vector.extract_strided_slice %507 {offsets = [0, 32], sizes = [2, 32], strides = [1, 1]} : vector<2x128xf32> to vector<2x32xf32>
    %511 = vector.extract_strided_slice %508 {offsets = [0, 64], sizes = [2, 32], strides = [1, 1]} : vector<2x128xf32> to vector<2x32xf32>
    %512 = vector.extract_strided_slice %507 {offsets = [0, 96], sizes = [2, 32], strides = [1, 1]} : vector<2x128xf32> to vector<2x32xf32>
    %513 = arith.mulf %510, %491 : vector<2x32xf32>
    %514 = arith.mulf %509, %511 : vector<2x32xf32>
    %515 = arith.addf %513, %514 : vector<2x32xf32>
    %516 = math.tanh %515 : vector<2x32xf32>
    %517 = arith.mulf %512, %516 : vector<2x32xf32>
    %518 = arith.index_cast %c3_i32_172 : i32 to index
    %c0_177 = arith.constant 0 : index
    %c0_178 = arith.constant 0 : index
    %519 = vector.load %arg11[%518, %c0_177, %c0_178] : memref<8x2x32xf32, #tpu.memory_space<vmem>>, vector<1x2x32xf32>
    %520 = vector.shape_cast %519 : vector<1x2x32xf32> to vector<2x32xf32>
    %521 = vector.shape_cast %517 : vector<2x32xf32> to vector<1x2x32xf32>
    tpu.vector_store %arg11[%518, %c0_177, %c0_178], %521 {strides = array<i32>} : memref<8x2x32xf32, #tpu.memory_space<vmem>>, vector<1x2x32xf32>,
    %c4_i32_179 = arith.constant 4 : i32
    %522 = arith.index_cast %c4_i32_179 : i32 to index
    %c0_180 = arith.constant 0 : index
    %c0_181 = arith.constant 0 : index
    %523 = vector.load %arg10[%522, %c0_180, %c0_181] : memref<8x2x128xf32, #tpu.memory_space<vmem>>, vector<1x2x128xf32>
    %524 = vector.shape_cast %523 : vector<1x2x128xf32> to vector<2x128xf32>
    %cst_182 = arith.constant dense<0.000000e+00> : vector<2x128xf32>
    %525 = tpu.matmul %517, %424, %cst_182 {dimension_numbers = #tpu.dot_dimension_numbers<[1], [0], [0], [1], [0, 0, 1, 1], [], []>} : vector<2x32xf32>, vector<32x128xf32>, vector<2x128xf32> -> vector<2x128xf32>
    %526 = arith.addf %524, %525 : vector<2x128xf32>
    %527 = arith.negf %526 : vector<2x128xf32>
    %528 = math.exp %527 : vector<2x128xf32>
    %cst_183 = arith.constant 1.000000e+00 : f32
    %529 = vector.broadcast %cst_183 : f32 to vector<2x128xf32>
    %530 = arith.addf %529, %528 : vector<2x128xf32>
    %531 = arith.divf %529, %530 : vector<2x128xf32>
    %532 = math.tanh %526 : vector<2x128xf32>
    %533 = vector.extract_strided_slice %531 {offsets = [0, 0], sizes = [2, 32], strides = [1, 1]} : vector<2x128xf32> to vector<2x32xf32>
    %534 = vector.extract_strided_slice %531 {offsets = [0, 32], sizes = [2, 32], strides = [1, 1]} : vector<2x128xf32> to vector<2x32xf32>
    %535 = vector.extract_strided_slice %532 {offsets = [0, 64], sizes = [2, 32], strides = [1, 1]} : vector<2x128xf32> to vector<2x32xf32>
    %536 = vector.extract_strided_slice %531 {offsets = [0, 96], sizes = [2, 32], strides = [1, 1]} : vector<2x128xf32> to vector<2x32xf32>
    %537 = arith.mulf %534, %515 : vector<2x32xf32>
    %538 = arith.mulf %533, %535 : vector<2x32xf32>
    %539 = arith.addf %537, %538 : vector<2x32xf32>
    %540 = math.tanh %539 : vector<2x32xf32>
    %541 = arith.mulf %536, %540 : vector<2x32xf32>
    %542 = arith.index_cast %c4_i32_179 : i32 to index
    %c0_184 = arith.constant 0 : index
    %c0_185 = arith.constant 0 : index
    %543 = vector.load %arg11[%542, %c0_184, %c0_185] : memref<8x2x32xf32, #tpu.memory_space<vmem>>, vector<1x2x32xf32>
    %544 = vector.shape_cast %543 : vector<1x2x32xf32> to vector<2x32xf32>
    %545 = vector.shape_cast %541 : vector<2x32xf32> to vector<1x2x32xf32>
    tpu.vector_store %arg11[%542, %c0_184, %c0_185], %545 {strides = array<i32>} : memref<8x2x32xf32, #tpu.memory_space<vmem>>, vector<1x2x32xf32>,
    %c5_i32_186 = arith.constant 5 : i32
    %546 = arith.index_cast %c5_i32_186 : i32 to index
    %c0_187 = arith.constant 0 : index
    %c0_188 = arith.constant 0 : index
    %547 = vector.load %arg10[%546, %c0_187, %c0_188] : memref<8x2x128xf32, #tpu.memory_space<vmem>>, vector<1x2x128xf32>
    %548 = vector.shape_cast %547 : vector<1x2x128xf32> to vector<2x128xf32>
    %cst_189 = arith.constant dense<0.000000e+00> : vector<2x128xf32>
    %549 = tpu.matmul %541, %424, %cst_189 {dimension_numbers = #tpu.dot_dimension_numbers<[1], [0], [0], [1], [0, 0, 1, 1], [], []>} : vector<2x32xf32>, vector<32x128xf32>, vector<2x128xf32> -> vector<2x128xf32>
    %550 = arith.addf %548, %549 : vector<2x128xf32>
    %551 = arith.negf %550 : vector<2x128xf32>
    %552 = math.exp %551 : vector<2x128xf32>
    %cst_190 = arith.constant 1.000000e+00 : f32
    %553 = vector.broadcast %cst_190 : f32 to vector<2x128xf32>
    %554 = arith.addf %553, %552 : vector<2x128xf32>
    %555 = arith.divf %553, %554 : vector<2x128xf32>
    %556 = math.tanh %550 : vector<2x128xf32>
    %557 = vector.extract_strided_slice %555 {offsets = [0, 0], sizes = [2, 32], strides = [1, 1]} : vector<2x128xf32> to vector<2x32xf32>
    %558 = vector.extract_strided_slice %555 {offsets = [0, 32], sizes = [2, 32], strides = [1, 1]} : vector<2x128xf32> to vector<2x32xf32>
    %559 = vector.extract_strided_slice %556 {offsets = [0, 64], sizes = [2, 32], strides = [1, 1]} : vector<2x128xf32> to vector<2x32xf32>
    %560 = vector.extract_strided_slice %555 {offsets = [0, 96], sizes = [2, 32], strides = [1, 1]} : vector<2x128xf32> to vector<2x32xf32>
    %561 = arith.mulf %558, %539 : vector<2x32xf32>
    %562 = arith.mulf %557, %559 : vector<2x32xf32>
    %563 = arith.addf %561, %562 : vector<2x32xf32>
    %564 = math.tanh %563 : vector<2x32xf32>
    %565 = arith.mulf %560, %564 : vector<2x32xf32>
    %566 = arith.index_cast %c5_i32_186 : i32 to index
    %c0_191 = arith.constant 0 : index
    %c0_192 = arith.constant 0 : index
    %567 = vector.load %arg11[%566, %c0_191, %c0_192] : memref<8x2x32xf32, #tpu.memory_space<vmem>>, vector<1x2x32xf32>
    %568 = vector.shape_cast %567 : vector<1x2x32xf32> to vector<2x32xf32>
    %569 = vector.shape_cast %565 : vector<2x32xf32> to vector<1x2x32xf32>
    tpu.vector_store %arg11[%566, %c0_191, %c0_192], %569 {strides = array<i32>} : memref<8x2x32xf32, #tpu.memory_space<vmem>>, vector<1x2x32xf32>,
    %c6_i32_193 = arith.constant 6 : i32
    %570 = arith.index_cast %c6_i32_193 : i32 to index
    %c0_194 = arith.constant 0 : index
    %c0_195 = arith.constant 0 : index
    %571 = vector.load %arg10[%570, %c0_194, %c0_195] : memref<8x2x128xf32, #tpu.memory_space<vmem>>, vector<1x2x128xf32>
    %572 = vector.shape_cast %571 : vector<1x2x128xf32> to vector<2x128xf32>
    %cst_196 = arith.constant dense<0.000000e+00> : vector<2x128xf32>
    %573 = tpu.matmul %565, %424, %cst_196 {dimension_numbers = #tpu.dot_dimension_numbers<[1], [0], [0], [1], [0, 0, 1, 1], [], []>} : vector<2x32xf32>, vector<32x128xf32>, vector<2x128xf32> -> vector<2x128xf32>
    %574 = arith.addf %572, %573 : vector<2x128xf32>
    %575 = arith.negf %574 : vector<2x128xf32>
    %576 = math.exp %575 : vector<2x128xf32>
    %cst_197 = arith.constant 1.000000e+00 : f32
    %577 = vector.broadcast %cst_197 : f32 to vector<2x128xf32>
    %578 = arith.addf %577, %576 : vector<2x128xf32>
    %579 = arith.divf %577, %578 : vector<2x128xf32>
    %580 = math.tanh %574 : vector<2x128xf32>
    %581 = vector.extract_strided_slice %579 {offsets = [0, 0], sizes = [2, 32], strides = [1, 1]} : vector<2x128xf32> to vector<2x32xf32>
    %582 = vector.extract_strided_slice %579 {offsets = [0, 32], sizes = [2, 32], strides = [1, 1]} : vector<2x128xf32> to vector<2x32xf32>
    %583 = vector.extract_strided_slice %580 {offsets = [0, 64], sizes = [2, 32], strides = [1, 1]} : vector<2x128xf32> to vector<2x32xf32>
    %584 = vector.extract_strided_slice %579 {offsets = [0, 96], sizes = [2, 32], strides = [1, 1]} : vector<2x128xf32> to vector<2x32xf32>
    %585 = arith.mulf %582, %563 : vector<2x32xf32>
    %586 = arith.mulf %581, %583 : vector<2x32xf32>
    %587 = arith.addf %585, %586 : vector<2x32xf32>
    %588 = math.tanh %587 : vector<2x32xf32>
    %589 = arith.mulf %584, %588 : vector<2x32xf32>
    %590 = arith.index_cast %c6_i32_193 : i32 to index
    %c0_198 = arith.constant 0 : index
    %c0_199 = arith.constant 0 : index
    %591 = vector.load %arg11[%590, %c0_198, %c0_199] : memref<8x2x32xf32, #tpu.memory_space<vmem>>, vector<1x2x32xf32>
    %592 = vector.shape_cast %591 : vector<1x2x32xf32> to vector<2x32xf32>
    %593 = vector.shape_cast %589 : vector<2x32xf32> to vector<1x2x32xf32>
    tpu.vector_store %arg11[%590, %c0_198, %c0_199], %593 {strides = array<i32>} : memref<8x2x32xf32, #tpu.memory_space<vmem>>, vector<1x2x32xf32>,
    %c7_i32_200 = arith.constant 7 : i32
    %594 = arith.index_cast %c7_i32_200 : i32 to index
    %c0_201 = arith.constant 0 : index
    %c0_202 = arith.constant 0 : index
    %595 = vector.load %arg10[%594, %c0_201, %c0_202] : memref<8x2x128xf32, #tpu.memory_space<vmem>>, vector<1x2x128xf32>
    %596 = vector.shape_cast %595 : vector<1x2x128xf32> to vector<2x128xf32>
    %cst_203 = arith.constant dense<0.000000e+00> : vector<2x128xf32>
    %597 = tpu.matmul %589, %424, %cst_203 {dimension_numbers = #tpu.dot_dimension_numbers<[1], [0], [0], [1], [0, 0, 1, 1], [], []>} : vector<2x32xf32>, vector<32x128xf32>, vector<2x128xf32> -> vector<2x128xf32>
    %598 = arith.addf %596, %597 : vector<2x128xf32>
    %599 = arith.negf %598 : vector<2x128xf32>
    %600 = math.exp %599 : vector<2x128xf32>
    %cst_204 = arith.constant 1.000000e+00 : f32
    %601 = vector.broadcast %cst_204 : f32 to vector<2x128xf32>
    %602 = arith.addf %601, %600 : vector<2x128xf32>
    %603 = arith.divf %601, %602 : vector<2x128xf32>
    %604 = math.tanh %598 : vector<2x128xf32>
    %605 = vector.extract_strided_slice %603 {offsets = [0, 0], sizes = [2, 32], strides = [1, 1]} : vector<2x128xf32> to vector<2x32xf32>
    %606 = vector.extract_strided_slice %603 {offsets = [0, 32], sizes = [2, 32], strides = [1, 1]} : vector<2x128xf32> to vector<2x32xf32>
    %607 = vector.extract_strided_slice %604 {offsets = [0, 64], sizes = [2, 32], strides = [1, 1]} : vector<2x128xf32> to vector<2x32xf32>
    %608 = vector.extract_strided_slice %603 {offsets = [0, 96], sizes = [2, 32], strides = [1, 1]} : vector<2x128xf32> to vector<2x32xf32>
    %609 = arith.mulf %606, %587 : vector<2x32xf32>
    %610 = arith.mulf %605, %607 : vector<2x32xf32>
    %611 = arith.addf %609, %610 : vector<2x32xf32>
    %612 = math.tanh %611 : vector<2x32xf32>
    %613 = arith.mulf %608, %612 : vector<2x32xf32>
    %614 = arith.index_cast %c7_i32_200 : i32 to index
    %c0_205 = arith.constant 0 : index
    %c0_206 = arith.constant 0 : index
    %615 = vector.load %arg11[%614, %c0_205, %c0_206] : memref<8x2x32xf32, #tpu.memory_space<vmem>>, vector<1x2x32xf32>
    %616 = vector.shape_cast %615 : vector<1x2x32xf32> to vector<2x32xf32>
    %617 = vector.shape_cast %613 : vector<2x32xf32> to vector<1x2x32xf32>
    tpu.vector_store %arg11[%614, %c0_205, %c0_206], %617 {strides = array<i32>} : memref<8x2x32xf32, #tpu.memory_space<vmem>>, vector<1x2x32xf32>,
    %c8_i32_207 = arith.constant 8 : i32
    %c0_208 = arith.constant 0 : index
    %c0_209 = arith.constant 0 : index
    %c0_210 = arith.constant 0 : index
    %618 = vector.load %arg11[%c0_208, %c0_209, %c0_210] : memref<8x2x32xf32, #tpu.memory_space<vmem>>, vector<8x2x32xf32>
    %619 = vector.shape_cast %618 : vector<8x2x32xf32> to vector<16x32xf32>
    %c0_211 = arith.constant 0 : index
    %c0_212 = arith.constant 0 : index
    %c0_213 = arith.constant 0 : index
    %620 = vector.load %arg5[%c0_211, %c0_212, %c0_213] : memref<7x32x32xf32, #tpu.memory_space<vmem>>, vector<1x32x32xf32>
    %621 = vector.shape_cast %620 : vector<1x32x32xf32> to vector<32x32xf32>
    %cst_214 = arith.constant dense<0.000000e+00> : vector<16x32xf32>
    %622 = tpu.matmul %619, %621, %cst_214 {dimension_numbers = #tpu.dot_dimension_numbers<[1], [0], [0], [1], [0, 0, 1, 1], [], []>} : vector<16x32xf32>, vector<32x32xf32>, vector<16x32xf32> -> vector<16x32xf32>
    %c0_215 = arith.constant 0 : index
    %c0_216 = arith.constant 0 : index
    %c0_217 = arith.constant 0 : index
    %623 = vector.load %arg6[%c0_215, %c0_216, %c0_217] : memref<7x1x32xf32, #tpu.memory_space<vmem>>, vector<1x1x32xf32>
    %624 = vector.shape_cast %623 : vector<1x1x32xf32> to vector<1x32xf32>
    %625 = vector.broadcast %624 : vector<1x32xf32> to vector<16x32xf32>
    %626 = arith.addf %622, %625 : vector<16x32xf32>
    %cst_218 = arith.constant 0.000000e+00 : f32
    %627 = vector.broadcast %cst_218 : f32 to vector<16x32xf32>
    %628 = arith.maximumf %626, %627 : vector<16x32xf32>
    %629 = arith.addf %628, %619 : vector<16x32xf32>
    %c1_219 = arith.constant 1 : index
    %c0_220 = arith.constant 0 : index
    %c0_221 = arith.constant 0 : index
    %630 = vector.load %arg5[%c1_219, %c0_220, %c0_221] : memref<7x32x32xf32, #tpu.memory_space<vmem>>, vector<1x32x32xf32>
    %631 = vector.shape_cast %630 : vector<1x32x32xf32> to vector<32x32xf32>
    %cst_222 = arith.constant dense<0.000000e+00> : vector<16x32xf32>
    %632 = tpu.matmul %629, %631, %cst_222 {dimension_numbers = #tpu.dot_dimension_numbers<[1], [0], [0], [1], [0, 0, 1, 1], [], []>} : vector<16x32xf32>, vector<32x32xf32>, vector<16x32xf32> -> vector<16x32xf32>
    %c1_223 = arith.constant 1 : index
    %c0_224 = arith.constant 0 : index
    %c0_225 = arith.constant 0 : index
    %633 = vector.load %arg6[%c1_223, %c0_224, %c0_225] : memref<7x1x32xf32, #tpu.memory_space<vmem>>, vector<1x1x32xf32>
    %634 = vector.shape_cast %633 : vector<1x1x32xf32> to vector<1x32xf32>
    %635 = vector.broadcast %634 : vector<1x32xf32> to vector<16x32xf32>
    %636 = arith.addf %632, %635 : vector<16x32xf32>
    %cst_226 = arith.constant 0.000000e+00 : f32
    %637 = vector.broadcast %cst_226 : f32 to vector<16x32xf32>
    %638 = arith.maximumf %636, %637 : vector<16x32xf32>
    %639 = arith.addf %638, %619 : vector<16x32xf32>
    %c2_227 = arith.constant 2 : index
    %c0_228 = arith.constant 0 : index
    %c0_229 = arith.constant 0 : index
    %640 = vector.load %arg5[%c2_227, %c0_228, %c0_229] : memref<7x32x32xf32, #tpu.memory_space<vmem>>, vector<1x32x32xf32>
    %641 = vector.shape_cast %640 : vector<1x32x32xf32> to vector<32x32xf32>
    %cst_230 = arith.constant dense<0.000000e+00> : vector<16x32xf32>
    %642 = tpu.matmul %639, %641, %cst_230 {dimension_numbers = #tpu.dot_dimension_numbers<[1], [0], [0], [1], [0, 0, 1, 1], [], []>} : vector<16x32xf32>, vector<32x32xf32>, vector<16x32xf32> -> vector<16x32xf32>
    %c2_231 = arith.constant 2 : index
    %c0_232 = arith.constant 0 : index
    %c0_233 = arith.constant 0 : index
    %643 = vector.load %arg6[%c2_231, %c0_232, %c0_233] : memref<7x1x32xf32, #tpu.memory_space<vmem>>, vector<1x1x32xf32>
    %644 = vector.shape_cast %643 : vector<1x1x32xf32> to vector<1x32xf32>
    %645 = vector.broadcast %644 : vector<1x32xf32> to vector<16x32xf32>
    %646 = arith.addf %642, %645 : vector<16x32xf32>
    %cst_234 = arith.constant 0.000000e+00 : f32
    %647 = vector.broadcast %cst_234 : f32 to vector<16x32xf32>
    %648 = arith.maximumf %646, %647 : vector<16x32xf32>
    %649 = arith.addf %648, %619 : vector<16x32xf32>
    %c3 = arith.constant 3 : index
    %c0_235 = arith.constant 0 : index
    %c0_236 = arith.constant 0 : index
    %650 = vector.load %arg5[%c3, %c0_235, %c0_236] : memref<7x32x32xf32, #tpu.memory_space<vmem>>, vector<1x32x32xf32>
    %651 = vector.shape_cast %650 : vector<1x32x32xf32> to vector<32x32xf32>
    %cst_237 = arith.constant dense<0.000000e+00> : vector<16x32xf32>
    %652 = tpu.matmul %649, %651, %cst_237 {dimension_numbers = #tpu.dot_dimension_numbers<[1], [0], [0], [1], [0, 0, 1, 1], [], []>} : vector<16x32xf32>, vector<32x32xf32>, vector<16x32xf32> -> vector<16x32xf32>
    %c3_238 = arith.constant 3 : index
    %c0_239 = arith.constant 0 : index
    %c0_240 = arith.constant 0 : index
    %653 = vector.load %arg6[%c3_238, %c0_239, %c0_240] : memref<7x1x32xf32, #tpu.memory_space<vmem>>, vector<1x1x32xf32>
    %654 = vector.shape_cast %653 : vector<1x1x32xf32> to vector<1x32xf32>
    %655 = vector.broadcast %654 : vector<1x32xf32> to vector<16x32xf32>
    %656 = arith.addf %652, %655 : vector<16x32xf32>
    %cst_241 = arith.constant 0.000000e+00 : f32
    %657 = vector.broadcast %cst_241 : f32 to vector<16x32xf32>
    %658 = arith.maximumf %656, %657 : vector<16x32xf32>
    %659 = arith.addf %658, %619 : vector<16x32xf32>
    %c4 = arith.constant 4 : index
    %c0_242 = arith.constant 0 : index
    %c0_243 = arith.constant 0 : index
    %660 = vector.load %arg5[%c4, %c0_242, %c0_243] : memref<7x32x32xf32, #tpu.memory_space<vmem>>, vector<1x32x32xf32>
    %661 = vector.shape_cast %660 : vector<1x32x32xf32> to vector<32x32xf32>
    %cst_244 = arith.constant dense<0.000000e+00> : vector<16x32xf32>
    %662 = tpu.matmul %659, %661, %cst_244 {dimension_numbers = #tpu.dot_dimension_numbers<[1], [0], [0], [1], [0, 0, 1, 1], [], []>} : vector<16x32xf32>, vector<32x32xf32>, vector<16x32xf32> -> vector<16x32xf32>
    %c4_245 = arith.constant 4 : index
    %c0_246 = arith.constant 0 : index
    %c0_247 = arith.constant 0 : index
    %663 = vector.load %arg6[%c4_245, %c0_246, %c0_247] : memref<7x1x32xf32, #tpu.memory_space<vmem>>, vector<1x1x32xf32>
    %664 = vector.shape_cast %663 : vector<1x1x32xf32> to vector<1x32xf32>
    %665 = vector.broadcast %664 : vector<1x32xf32> to vector<16x32xf32>
    %666 = arith.addf %662, %665 : vector<16x32xf32>
    %cst_248 = arith.constant 0.000000e+00 : f32
    %667 = vector.broadcast %cst_248 : f32 to vector<16x32xf32>
    %668 = arith.maximumf %666, %667 : vector<16x32xf32>
    %669 = arith.addf %668, %619 : vector<16x32xf32>
    %c5 = arith.constant 5 : index
    %c0_249 = arith.constant 0 : index
    %c0_250 = arith.constant 0 : index
    %670 = vector.load %arg5[%c5, %c0_249, %c0_250] : memref<7x32x32xf32, #tpu.memory_space<vmem>>, vector<1x32x32xf32>
    %671 = vector.shape_cast %670 : vector<1x32x32xf32> to vector<32x32xf32>
    %cst_251 = arith.constant dense<0.000000e+00> : vector<16x32xf32>
    %672 = tpu.matmul %669, %671, %cst_251 {dimension_numbers = #tpu.dot_dimension_numbers<[1], [0], [0], [1], [0, 0, 1, 1], [], []>} : vector<16x32xf32>, vector<32x32xf32>, vector<16x32xf32> -> vector<16x32xf32>
    %c5_252 = arith.constant 5 : index
    %c0_253 = arith.constant 0 : index
    %c0_254 = arith.constant 0 : index
    %673 = vector.load %arg6[%c5_252, %c0_253, %c0_254] : memref<7x1x32xf32, #tpu.memory_space<vmem>>, vector<1x1x32xf32>
    %674 = vector.shape_cast %673 : vector<1x1x32xf32> to vector<1x32xf32>
    %675 = vector.broadcast %674 : vector<1x32xf32> to vector<16x32xf32>
    %676 = arith.addf %672, %675 : vector<16x32xf32>
    %cst_255 = arith.constant 0.000000e+00 : f32
    %677 = vector.broadcast %cst_255 : f32 to vector<16x32xf32>
    %678 = arith.maximumf %676, %677 : vector<16x32xf32>
    %679 = arith.addf %678, %619 : vector<16x32xf32>
    %c6 = arith.constant 6 : index
    %c0_256 = arith.constant 0 : index
    %c0_257 = arith.constant 0 : index
    %680 = vector.load %arg5[%c6, %c0_256, %c0_257] : memref<7x32x32xf32, #tpu.memory_space<vmem>>, vector<1x32x32xf32>
    %681 = vector.shape_cast %680 : vector<1x32x32xf32> to vector<32x32xf32>
    %cst_258 = arith.constant dense<0.000000e+00> : vector<16x32xf32>
    %682 = tpu.matmul %679, %681, %cst_258 {dimension_numbers = #tpu.dot_dimension_numbers<[1], [0], [0], [1], [0, 0, 1, 1], [], []>} : vector<16x32xf32>, vector<32x32xf32>, vector<16x32xf32> -> vector<16x32xf32>
    %c6_259 = arith.constant 6 : index
    %c0_260 = arith.constant 0 : index
    %c0_261 = arith.constant 0 : index
    %683 = vector.load %arg6[%c6_259, %c0_260, %c0_261] : memref<7x1x32xf32, #tpu.memory_space<vmem>>, vector<1x1x32xf32>
    %684 = vector.shape_cast %683 : vector<1x1x32xf32> to vector<1x32xf32>
    %685 = vector.broadcast %684 : vector<1x32xf32> to vector<16x32xf32>
    %686 = arith.addf %682, %685 : vector<16x32xf32>
    %cst_262 = arith.constant 0.000000e+00 : f32
    %687 = vector.broadcast %cst_262 : f32 to vector<16x32xf32>
    %688 = arith.maximumf %686, %687 : vector<16x32xf32>
    %689 = arith.addf %688, %619 : vector<16x32xf32>
    %c0_263 = arith.constant 0 : index
    %c0_264 = arith.constant 0 : index
    %690 = vector.load %arg7[%c0_263, %c0_264] : memref<32x128xf32, #tpu.memory_space<vmem>>, vector<32x128xf32>
    %cst_265 = arith.constant dense<0.000000e+00> : vector<16x128xf32>
    %691 = tpu.matmul %689, %690, %cst_265 {dimension_numbers = #tpu.dot_dimension_numbers<[1], [0], [0], [1], [0, 0, 1, 1], [], []>} : vector<16x32xf32>, vector<32x128xf32>, vector<16x128xf32> -> vector<16x128xf32>
    %c0_266 = arith.constant 0 : index
    %c0_267 = arith.constant 0 : index
    %692 = vector.load %arg8[%c0_266, %c0_267] : memref<1x128xf32, #tpu.memory_space<vmem>>, vector<1x128xf32>
    %693 = vector.broadcast %692 : vector<1x128xf32> to vector<16x128xf32>
    %694 = arith.addf %691, %693 : vector<16x128xf32>
    %695 = vector.shape_cast %694 : vector<16x128xf32> to vector<8x2x128xf32>
    %696 = tpu.transpose %695, [1, 0, 2] : vector<8x2x128xf32> -> vector<2x8x128xf32>
    %c0_268 = arith.constant 0 : index
    %c0_269 = arith.constant 0 : index
    %c0_270 = arith.constant 0 : index
    %697 = vector.load %arg9[%c0_268, %c0_269, %c0_270] : memref<2x8x128xf32, #tpu.memory_space<vmem>>, vector<2x8x128xf32>
    tpu.vector_store %arg9[%c0_268, %c0_269, %c0_270], %696 {strides = array<i32>} : memref<2x8x128xf32, #tpu.memory_space<vmem>>, vector<2x8x128xf32>,
    return
  }
}

</mosaic_0001>

<llo_original>
// kernel: rnn_forward.1
$region0: #{rnn_forward.1}
  #allocation0 [shape = 'u32[]', space=smem, size = 0x4, offset = 0x4, fixed_abs, tag = 'smem constant byte address 0x4 - core index']
  #allocation1 [shape = 'u32[144,128]{1,0:T(1,128)}', space=vmem, size = 0x12000, scoped, tag = 'internal scratch']
  #allocation2 [shape = 'f32[8,2,128]{2,1,0:T(2,128)}', space=vmem, size = 0x2000, scoped, tag = 'scratch operand']
  #allocation3 [shape = 'f32[8,2,32]{2,1,0:T(2,128)}', space=vmem, size = 0x2000, scoped, tag = 'scratch operand']
  %s0 = inlined_call_operand.vmem [shape: f32[2,8,53], index: 0, kind: input, shape index: {}]
  %s1 = inlined_call_operand.hbm [shape: f32[53,128], index: 1, kind: input, shape index: {}]
  %s2 = inlined_call_operand.vmem [shape: f32[2,32,128], index: 2, kind: input, shape index: {}]
  %s3 = inlined_call_operand.hbm [shape: f32[3,32,128], index: 3, kind: input, shape index: {}]
  %s4 = inlined_call_operand.hbm [shape: f32[3,1,128], index: 4, kind: input, shape index: {}]
  %s5 = inlined_call_operand.hbm [shape: f32[7,32,32], index: 5, kind: input, shape index: {}]
  %s6 = inlined_call_operand.hbm [shape: f32[7,1,32], index: 6, kind: input, shape index: {}]
  %s7 = inlined_call_operand.vmem [shape: f32[32,128], index: 7, kind: input, shape index: {}]
  %s8 = inlined_call_operand.vmem [shape: f32[1,128], index: 8, kind: input, shape index: {}]
  %s9 = inlined_call_operand.hbm [shape: f32[2,8,128], index: 9, kind: output, shape index: {}]
  %s10 = sld [smem:[#allocation0]]
  $region66: #{rnn_forward.1} parent=0
    _
  %s12 = ssub.s32 1, %s10
  %s13 = scalar_select 0, %s12, %s10
  $region1: #{rnn_forward.1} parent=0
    #allocation4 [shape = 'u8[28672]{0}', space=vmem, size = 0x7000, scoped, tag = 'input window, operand 1, single buffered']
    #allocation5 [shape = 's32[1]{0}', space=sflag, size = 0x4, scoped, tag = 'scoped memory for rnn_forward.1']
    #allocation6 [shape = 's32[1]{0}', space=sflag, size = 0x4, scoped, tag = 'scoped memory for rnn_forward.1']
    #allocation7 [shape = 'u8[49152]{0}', space=vmem, size = 0xc000, scoped, tag = 'input window, operand 3, single buffered']
    #allocation8 [shape = 's32[1]{0}', space=sflag, size = 0x4, scoped, tag = 'scoped memory for rnn_forward.1']
    #allocation9 [shape = 'u8[1536]{0}', space=vmem, size = 0x800, scoped, tag = 'input window, operand 4, single buffered']
    #allocation10 [shape = 'u8[114688]{0}', space=vmem, size = 0x1c000, scoped, tag = 'input window, operand 5, single buffered']
    #allocation11 [shape = 's32[1]{0}', space=sflag, size = 0x4, scoped, tag = 'scoped memory for rnn_forward.1']
    #allocation12 [shape = 'u8[3584]{0}', space=vmem, size = 0x1000, scoped, tag = 'input window, operand 6, single buffered']
    #allocation13 [shape = 'u8[8192]{0}', space=vmem, size = 0x2000, scoped, tag = 'output window, operand 0, single buffered']
    %14 = vsyncpa [#allocation5], 0
    %15 = vsyncpa [#allocation8], 0
    %16 = vsyncpa [#allocation11], 0
    %17 = vsyncpa [#allocation6], 0
    // Predicated region
    $region2: #{rnn_forward.1} parent=1 // pred_check
      _
    $region3: #{rnn_forward.1} parent=1 // pred_check_branch
      %19 = sbr.rel (0) target = $region5
    $region4: #{rnn_forward.1} parent=1 // pred_region
      _
    $region5: #{rnn_forward.1} parent=1 // pred_fallthru
      _
    // Predicated region
    $region6: #{rnn_forward.1} parent=1 // pred_check
      _
    $region7: #{rnn_forward.1} parent=1 // pred_check_branch
      %21 = sbr.rel (0) target = $region9
    $region8: #{rnn_forward.1} parent=1 // pred_region
      %s23 = ssub.s32 896, 896
      %24 = vsyncadd [#allocation5], %s23
      %s25 = sshll.u32 [#allocation4], 4
      %s26 = int_to_ptr.vmem [resolvable:$true] %s25
      %31 = dma.hbm_to_vmem [thread:$0]  %s1, 896, %s26, [#allocation5], 128, 128, 8
    $region9: #{rnn_forward.1} parent=1 // pred_fallthru
      _
    // Predicated region
    $region10: #{rnn_forward.1} parent=1 // pred_check
      _
    $region11: #{rnn_forward.1} parent=1 // pred_check_branch
      %33 = sbr.rel (0) target = $region13
    $region12: #{rnn_forward.1} parent=1 // pred_region
      _
    $region13: #{rnn_forward.1} parent=1 // pred_fallthru
      _
    // Predicated region
    $region14: #{rnn_forward.1} parent=1 // pred_check
      _
    $region15: #{rnn_forward.1} parent=1 // pred_check_branch
      %35 = sbr.rel (0) target = $region17
    $region16: #{rnn_forward.1} parent=1 // pred_region
      %s37 = ssub.s32 1536, 1536
      %38 = vsyncadd [#allocation8], %s37
      %s39 = sshll.u32 [#allocation7], 4
      %s40 = int_to_ptr.vmem [resolvable:$true] %s39
      %45 = dma.hbm_to_vmem [thread:$0]  %s3, 1536, %s40, [#allocation8], 128, 128, 8
    $region17: #{rnn_forward.1} parent=1 // pred_fallthru
      _
    // Predicated region
    $region18: #{rnn_forward.1} parent=1 // pred_check
      _
    $region19: #{rnn_forward.1} parent=1 // pred_check_branch
      %47 = sbr.rel (0) target = $region21
    $region20: #{rnn_forward.1} parent=1 // pred_region
      %s49 = ssub.s32 48, 48
      %50 = vsyncadd [#allocation8], %s49
      %s51 = sshll.u32 [#allocation9], 4
      %s52 = int_to_ptr.vmem [resolvable:$true] %s51
      %57 = dma.hbm_to_vmem [thread:$0]  %s4, 48, %s52, [#allocation8], 16, 16, 1
    $region21: #{rnn_forward.1} parent=1 // pred_fallthru
      _
    // Predicated region
    $region22: #{rnn_forward.1} parent=1 // pred_check
      _
    $region23: #{rnn_forward.1} parent=1 // pred_check_branch
      %59 = sbr.rel (0) target = $region25
    $region24: #{rnn_forward.1} parent=1 // pred_region
      %s61 = ssub.s32 3584, 3584
      %62 = vsyncadd [#allocation11], %s61
      %s63 = sshll.u32 [#allocation10], 4
      %s64 = int_to_ptr.vmem [resolvable:$true] %s63
      %69 = dma.hbm_to_vmem [thread:$0]  %s5, 3584, %s64, [#allocation11], 128, 128, 8
    $region25: #{rnn_forward.1} parent=1 // pred_fallthru
      _
    // Predicated region
    $region26: #{rnn_forward.1} parent=1 // pred_check
      _
    $region27: #{rnn_forward.1} parent=1 // pred_check_branch
      %71 = sbr.rel (0) target = $region29
    $region28: #{rnn_forward.1} parent=1 // pred_region
      %s73 = ssub.s32 112, 112
      %74 = vsyncadd [#allocation11], %s73
      %s75 = sshll.u32 [#allocation12], 4
      %s76 = int_to_ptr.vmem [resolvable:$true] %s75
      %81 = dma.hbm_to_vmem [thread:$0]  %s6, 112, %s76, [#allocation11], 16, 16, 1
    $region29: #{rnn_forward.1} parent=1 // pred_fallthru
      _
    // Predicated region
    $region30: #{rnn_forward.1} parent=1 // pred_check
      _
    $region31: #{rnn_forward.1} parent=1 // pred_check_branch
      %83 = sbr.rel (0) target = $region33
    $region32: #{rnn_forward.1} parent=1 // pred_region
      _
    $region33: #{rnn_forward.1} parent=1 // pred_fallthru
      _
    // Predicated region
    $region34: #{rnn_forward.1} parent=1 // pred_check
      _
    $region35: #{rnn_forward.1} parent=1 // pred_check_branch
      %85 = sbr.rel (0) target = $region37
    $region36: #{rnn_forward.1} parent=1 // pred_region
      _
    $region37: #{rnn_forward.1} parent=1 // pred_fallthru
      _
    // Predicated region
    $region38: #{rnn_forward.1} parent=1 // pred_check
      _
    $region39: #{rnn_forward.1} parent=1 // pred_check_branch
      %87 = sbr.rel (0) target = $region41
    $region40: #{rnn_forward.1} parent=1 // pred_region
      %88 = dma.done [#allocation5], 896
    $region41: #{rnn_forward.1} parent=1 // pred_fallthru
      _
    // Predicated region
    $region42: #{rnn_forward.1} parent=1 // pred_check
      _
    $region43: #{rnn_forward.1} parent=1 // pred_check_branch
      %90 = sbr.rel (0) target = $region45
    $region44: #{rnn_forward.1} parent=1 // pred_region
      %91 = dma.done [#allocation8], 1536
    $region45: #{rnn_forward.1} parent=1 // pred_fallthru
      _
    // Predicated region
    $region46: #{rnn_forward.1} parent=1 // pred_check
      _
    $region47: #{rnn_forward.1} parent=1 // pred_check_branch
      %93 = sbr.rel (0) target = $region49
    $region48: #{rnn_forward.1} parent=1 // pred_region
      %94 = dma.done [#allocation8], 48
    $region49: #{rnn_forward.1} parent=1 // pred_fallthru
      _
    // Predicated region
    $region50: #{rnn_forward.1} parent=1 // pred_check
      _
    $region51: #{rnn_forward.1} parent=1 // pred_check_branch
      %96 = sbr.rel (0) target = $region53
    $region52: #{rnn_forward.1} parent=1 // pred_region
      %97 = dma.done [#allocation11], 3584
    $region53: #{rnn_forward.1} parent=1 // pred_fallthru
      _
    // Predicated region
    $region54: #{rnn_forward.1} parent=1 // pred_check
      _
    $region55: #{rnn_forward.1} parent=1 // pred_check_branch
      %99 = sbr.rel (0) target = $region57
    $region56: #{rnn_forward.1} parent=1 // pred_region
      %100 = dma.done [#allocation11], 112
    $region57: #{rnn_forward.1} parent=1 // pred_fallthru
      _
    %v101 = vld [vmem:[%s0] sm:$0xff]
    %v102 = vld [vmem:[%s0 + $0x8] sm:$0xff]
    %v103 = vld [vmem:[#allocation4] sm:$0xff]
    %v104 = vld [vmem:[#allocation4 + $0x8] sm:$0xff]
    %v105 = vld [vmem:[#allocation4 + $0x10] sm:$0xff]
    %v106 = vld [vmem:[#allocation4 + $0x18] sm:$0xff]
    %v107 = vld [vmem:[#allocation4 + $0x20] sm:$0xff]
    %v108 = vld [vmem:[#allocation4 + $0x28] sm:$0xff]
    %v109 = vld [vmem:[#allocation4 + $0x30] sm:$0x1f]
    %v110 = vld [vmem:[#allocation9] sm:$0x1]
    %v112 = vlaneseq
    %v113 = vshrl.u32 %v112, 7
    %v114 = vsub.s32 0, %v113
    %v115 = vrot.slane %v110, %v114
    %vm117 = vcmask 433152
    %v119 = vsel %vm117, %v101, 0
    %v122 = vsel %vm117, %v102, 0
    %vm124 = vcmask 1044480
    %v126 = vsel %vm124, %v109, 0
    %128 = vmatprep.subr.mxu0 0.0
    %129 = vmatpush1.msra.mxu0 0.0
    %130 = vmatprep.subr.mxu0 0.0
    %131 = vmatpush1.msra.mxu0 0.0
    %132 = vmatprep.subr.mxu0 0.0
    %133 = vmatpush1.msra.mxu0 0.0
    %134 = vmatprep.subr.mxu0 0.0
    %135 = vmatpush1.msra.mxu0 0.0
    %136 = vmatprep.subr.mxu0 0.0
    %137 = vmatpush1.msra.mxu0 0.0
    %138 = vmatprep.subr.mxu0 0.0
    %139 = vmatpush1.msra.mxu0 0.0
    %140 = vmatprep.subr.mxu0 0.0
    %141 = vmatpush1.msra.mxu0 0.0
    %142 = vmatprep.subr.mxu0 0.0
    %143 = vmatpush1.msra.mxu0 0.0
    %144 = vmatprep.subr.mxu0 0.0
    %145 = vmatpush1.msra.mxu0 0.0
    %146 = vmatprep.subr.mxu0 0.0
    %147 = vmatpush1.msra.mxu0 %v126
    %148 = vmatprep.subr.mxu0 0.0
    %149 = vmatpush1.msra.mxu0 %v108
    %150 = vmatprep.subr.mxu0 0.0
    %151 = vmatpush1.msra.mxu0 %v107
    %152 = vmatprep.subr.mxu0 0.0
    %153 = vmatpush1.msra.mxu0 %v106
    %154 = vmatprep.subr.mxu0 0.0
    %155 = vmatpush1.msra.mxu0 %v105
    %156 = vmatprep.subr.mxu0 0.0
    %157 = vmatpush1.msra.mxu0 %v104
    %158 = vmatprep.subr.mxu0 0.0
    %159 = vmatpush1.msra.mxu0 %v103
    %160 = vmatprep.subr.mxu0 0.0
    %161 = vmatpush2.msra.mxu0 0.0
    %162 = vmatprep.subr.mxu0 0.0
    %163 = vmatpush2.msra.mxu0 0.0
    %164 = vmatprep.subr.mxu0 0.0
    %165 = vmatpush2.msra.mxu0 0.0
    %166 = vmatprep.subr.mxu0 0.0
    %167 = vmatpush2.msra.mxu0 0.0
    %168 = vmatprep.subr.mxu0 0.0
    %169 = vmatpush2.msra.mxu0 0.0
    %170 = vmatprep.subr.mxu0 0.0
    %171 = vmatpush2.msra.mxu0 0.0
    %172 = vmatprep.subr.mxu0 0.0
    %173 = vmatpush2.msra.mxu0 0.0
    %174 = vmatprep.subr.mxu0 0.0
    %175 = vmatpush2.msra.mxu0 0.0
    %176 = vmatprep.subr.mxu0 0.0
    %177 = vmatpush2.msra.mxu0 0.0
    %178 = vmatprep.subr.mxu0 0.0
    %179 = vmatpush2.msra.mxu0 0.0
    %180 = vmatprep.subr.mxu0 0.0
    %181 = vmatpush2.msra.mxu0 0.0
    %182 = vmatprep.subr.mxu0 0.0
    %183 = vmatpush2.msra.mxu0 0.0
    %184 = vmatprep.subr.mxu0 0.0
    %185 = vmatpush2.msra.mxu0 0.0
    %186 = vmatprep.subr.mxu0 0.0
    %187 = vmatpush2.msra.mxu0 0.0
    %188 = vmatprep.subr.mxu0 0.0
    %189 = vmatpush2.msra.mxu0 0.0
    %190 = vmatprep.subr.mxu0 0.0
    %191 = vmatpush2.msra.mxu0 0.0
    %192 = vmatprep.mubr.f32.mxu0 0.0
    %193 = vmatmul.mubr.f32.gmra.mxu0 %v119
    %v194 = vpop.f32.mrf.mxu0
    %v195 = vadd.f32 %v115, %v194
    %v196 = vpop.f32.mrf.mxu0
    %197 = vmatprep.mubr.f32.mxu0 0.0
    %198 = vmatmul.mubr.f32.gmra.mxu0 %v122
    %v199 = vpop.f32.mrf.mxu0
    %v200 = vadd.f32 %v115, %v199
    %v201 = vpop.f32.mrf.mxu0
    %202 = vdwg.mxu0
    %v203 = vcombine.high %v195, 0.0
    %v205 = vunpack.c.l.s4 1983009808
    %v206 = vunpack.c.0.s8 %v205
    %v207 = vlaneseq
    %v208 = vshrl.u32 %v207, 7
    %v209 = vsub.s32 %v206, %v208
    %v210 = vrot.slane %v195, %v209
    %v212 = vunpack.c.l.s4 1983009808
    %v213 = vunpack.c.0.s8 %v212
    %v214 = vlaneseq
    %v215 = vshrl.u32 %v214, 7
    %v216 = vsub.s32 %v213, %v215
    %v217 = vrot.slane %v203, %v216
    %v218 = vcombine.high %v200, 0.0
    %v220 = vunpack.c.l.s4 1983009808
    %v221 = vunpack.c.0.s8 %v220
    %v222 = vlaneseq
    %v223 = vshrl.u32 %v222, 7
    %v224 = vsub.s32 %v221, %v223
    %v225 = vrot.slane %v200, %v224
    %v227 = vunpack.c.l.s4 1983009808
    %v228 = vunpack.c.0.s8 %v227
    %v229 = vlaneseq
    %v230 = vshrl.u32 %v229, 7
    %v231 = vsub.s32 %v228, %v230
    %v232 = vrot.slane %v218, %v231
    %v233 = vcombine.low %v210, %v225
    %v234 = vcombine.high %v210, %v225
    %v236 = vunpack.c.l.s4 1934713408
    %v237 = vunpack.c.0.s8 %v236
    %v238 = vlaneseq
    %v239 = vshrl.u32 %v238, 7
    %v240 = vsub.s32 %v237, %v239
    %v241 = vrot.slane %v233, %v240
    %v243 = vunpack.c.l.s4 1934713408
    %v244 = vunpack.c.0.s8 %v243
    %v245 = vlaneseq
    %v246 = vshrl.u32 %v245, 7
    %v247 = vsub.s32 %v244, %v246
    %v248 = vrot.slane %v234, %v247
    %v249 = vcombine.low %v217, %v232
    %v250 = vcombine.high %v217, %v232
    %v252 = vunpack.c.l.s4 1934713408
    %v253 = vunpack.c.0.s8 %v252
    %v254 = vlaneseq
    %v255 = vshrl.u32 %v254, 7
    %v256 = vsub.s32 %v253, %v255
    %v257 = vrot.slane %v249, %v256
    %v259 = vunpack.c.l.s4 1934713408
    %v260 = vunpack.c.0.s8 %v259
    %v261 = vlaneseq
    %v262 = vshrl.u32 %v261, 7
    %v263 = vsub.s32 %v260, %v262
    %v264 = vrot.slane %v250, %v263
    %v265 = vcombine.high %v241, 0.0
    %v266 = vcombine.high %v248, 0.0
    %v267 = vcombine.high %v257, 0.0
    %v268 = vcombine.high %v264, 0.0
    %269 = vst [vmem:[#allocation2] sm:$0x3] %v241
    %270 = vst [vmem:[#allocation2 + $0x2] sm:$0x3] %v265
    %271 = vst [vmem:[#allocation2 + $0x4] sm:$0x3] %v248
    %272 = vst [vmem:[#allocation2 + $0x6] sm:$0x3] %v266
    %273 = vst [vmem:[#allocation2 + $0x8] sm:$0x3] %v257
    %274 = vst [vmem:[#allocation2 + $0xa] sm:$0x3] %v267
    %275 = vst [vmem:[#allocation2 + $0xc] sm:$0x3] %v264
    %276 = vst [vmem:[#allocation2 + $0xe] sm:$0x3] %v268
    %v277 = vld [vmem:[#allocation7] sm:$0xff]
    %v278 = vld [vmem:[#allocation7 + $0x8] sm:$0xff]
    %v279 = vld [vmem:[#allocation7 + $0x10] sm:$0xff]
    %v280 = vld [vmem:[#allocation7 + $0x18] sm:$0xff]
    %v281 = vld [vmem:[#allocation2] sm:$0x3]
    %vm282 = vcmask 261120
    %v284 = vsel %vm282, 0.0, 0
    %286 = vmatprep.subr.mxu0 0.0
    %287 = vmatpush1.msra.mxu0 0.0
    %288 = vmatprep.subr.mxu0 0.0
    %289 = vmatpush1.msra.mxu0 0.0
    %290 = vmatprep.subr.mxu0 0.0
    %291 = vmatpush1.msra.mxu0 0.0
    %292 = vmatprep.subr.mxu0 0.0
    %293 = vmatpush1.msra.mxu0 0.0
    %294 = vmatprep.subr.mxu0 0.0
    %295 = vmatpush1.msra.mxu0 0.0
    %296 = vmatprep.subr.mxu0 0.0
    %297 = vmatpush1.msra.mxu0 0.0
    %298 = vmatprep.subr.mxu0 0.0
    %299 = vmatpush1.msra.mxu0 0.0
    %300 = vmatprep.subr.mxu0 0.0
    %301 = vmatpush1.msra.mxu0 0.0
    %302 = vmatprep.subr.mxu0 0.0
    %303 = vmatpush1.msra.mxu0 0.0
    %304 = vmatprep.subr.mxu0 0.0
    %305 = vmatpush1.msra.mxu0 0.0
    %306 = vmatprep.subr.mxu0 0.0
    %307 = vmatpush1.msra.mxu0 0.0
    %308 = vmatprep.subr.mxu0 0.0
    %309 = vmatpush1.msra.mxu0 0.0
    %310 = vmatprep.subr.mxu0 0.0
    %311 = vmatpush1.msra.mxu0 %v280
    %312 = vmatprep.subr.mxu0 0.0
    %313 = vmatpush1.msra.mxu0 %v279
    %314 = vmatprep.subr.mxu0 0.0
    %315 = vmatpush1.msra.mxu0 %v278
    %316 = vmatprep.subr.mxu0 0.0
    %317 = vmatpush1.msra.mxu0 %v277
    %318 = vmatprep.subr.mxu0 0.0
    %319 = vmatpush2.msra.mxu0 0.0
    %320 = vmatprep.subr.mxu0 0.0
    %321 = vmatpush2.msra.mxu0 0.0
    %322 = vmatprep.subr.mxu0 0.0
    %323 = vmatpush2.msra.mxu0 0.0
    %324 = vmatprep.subr.mxu0 0.0
    %325 = vmatpush2.msra.mxu0 0.0
    %326 = vmatprep.subr.mxu0 0.0
    %327 = vmatpush2.msra.mxu0 0.0
    %328 = vmatprep.subr.mxu0 0.0
    %329 = vmatpush2.msra.mxu0 0.0
    %330 = vmatprep.subr.mxu0 0.0
    %331 = vmatpush2.msra.mxu0 0.0
    %332 = vmatprep.subr.mxu0 0.0
    %333 = vmatpush2.msra.mxu0 0.0
    %334 = vmatprep.subr.mxu0 0.0
    %335 = vmatpush2.msra.mxu0 0.0
    %336 = vmatprep.subr.mxu0 0.0
    %337 = vmatpush2.msra.mxu0 0.0
    %338 = vmatprep.subr.mxu0 0.0
    %339 = vmatpush2.msra.mxu0 0.0
    %340 = vmatprep.subr.mxu0 0.0
    %341 = vmatpush2.msra.mxu0 0.0
    %342 = vmatprep.subr.mxu0 0.0
    %343 = vmatpush2.msra.mxu0 0.0
    %344 = vmatprep.subr.mxu0 0.0
    %345 = vmatpush2.msra.mxu0 0.0
    %346 = vmatprep.subr.mxu0 0.0
    %347 = vmatpush2.msra.mxu0 0.0
    %348 = vmatprep.subr.mxu0 0.0
    %349 = vmatpush2.msra.mxu0 0.0
    %350 = vmatprep.mubr.f32.mxu0 0.0
    %351 = vmatmul.mubr.f32.gmra.mxu0 %v284
    %v352 = vpop.f32.mrf.mxu0
    %v353 = vadd.f32 0.0, %v352
    %v354 = vpop.f32.mrf.mxu0
    %355 = vdwg.mxu0
    %v356 = vadd.f32 %v281, %v353
    %v357 = vxor.u32 %v356, 2147483648
    %v358 = vmul.f32 %v357, 1.442695
    %v359 = vpow.pop %v358
    %v360 = vadd.f32 %v359, 1.0
    %v361 = vrcp.pop %v360
    %v362 = vmul.f32 1.0, %v361
    %v363 = vtanh.pop %v356
    %v364 = vmul.f32 %v362, 0.0
    %366 = vrot.lane.b32.xlu0 %v363, 64
    %v367 = vpop.permute.xlu0 %366
    %v369 = vmul.f32 %v362, %v367
    %371 = vrot.lane.b32.xlu0 %v369, 32
    %v372 = vpop.permute.xlu0 %371
    %v374 = vadd.f32 %v364, %v372
    %v375 = vtanh.pop %v374
    %377 = vrot.lane.b32.xlu0 %v375, 64
    %v378 = vpop.permute.xlu0 %377
    %v380 = vmul.f32 %v362, %v378
    %382 = vrot.lane.b32.xlu0 %v380, 32
    %v383 = vpop.permute.xlu0 %382
    %vm385 = vcmask 254976
    %386 = vst.msk [vmem:[#allocation3] sm:$0x3] %vm385, %v383
    %s387 = scalar_lea.vmem [#allocation2], 2
    %v388 = vld [vmem:[%s387] sm:$0x3]
    %v389 = vsel %vm282, %v383, 0
    %391 = vmatprep.subr.mxu0 0.0
    %392 = vmatpush1.msra.mxu0 0.0
    %393 = vmatprep.subr.mxu0 0.0
    %394 = vmatpush1.msra.mxu0 0.0
    %395 = vmatprep.subr.mxu0 0.0
    %396 = vmatpush1.msra.mxu0 0.0
    %397 = vmatprep.subr.mxu0 0.0
    %398 = vmatpush1.msra.mxu0 0.0
    %399 = vmatprep.subr.mxu0 0.0
    %400 = vmatpush1.msra.mxu0 0.0
    %401 = vmatprep.subr.mxu0 0.0
    %402 = vmatpush1.msra.mxu0 0.0
    %403 = vmatprep.subr.mxu0 0.0
    %404 = vmatpush1.msra.mxu0 0.0
    %405 = vmatprep.subr.mxu0 0.0
    %406 = vmatpush1.msra.mxu0 0.0
    %407 = vmatprep.subr.mxu0 0.0
    %408 = vmatpush1.msra.mxu0 0.0
    %409 = vmatprep.subr.mxu0 0.0
    %410 = vmatpush1.msra.mxu0 0.0
    %411 = vmatprep.subr.mxu0 0.0
    %412 = vmatpush1.msra.mxu0 0.0
    %413 = vmatprep.subr.mxu0 0.0
    %414 = vmatpush1.msra.mxu0 0.0
    %415 = vmatprep.subr.mxu0 0.0
    %416 = vmatpush1.msra.mxu0 %v280
    %417 = vmatprep.subr.mxu0 0.0
    %418 = vmatpush1.msra.mxu0 %v279
    %419 = vmatprep.subr.mxu0 0.0
    %420 = vmatpush1.msra.mxu0 %v278
    %421 = vmatprep.subr.mxu0 0.0
    %422 = vmatpush1.msra.mxu0 %v277
    %423 = vmatprep.subr.mxu0 0.0
    %424 = vmatpush2.msra.mxu0 0.0
    %425 = vmatprep.subr.mxu0 0.0
    %426 = vmatpush2.msra.mxu0 0.0
    %427 = vmatprep.subr.mxu0 0.0
    %428 = vmatpush2.msra.mxu0 0.0
    %429 = vmatprep.subr.mxu0 0.0
    %430 = vmatpush2.msra.mxu0 0.0
    %431 = vmatprep.subr.mxu0 0.0
    %432 = vmatpush2.msra.mxu0 0.0
    %433 = vmatprep.subr.mxu0 0.0
    %434 = vmatpush2.msra.mxu0 0.0
    %435 = vmatprep.subr.mxu0 0.0
    %436 = vmatpush2.msra.mxu0 0.0
    %437 = vmatprep.subr.mxu0 0.0
    %438 = vmatpush2.msra.mxu0 0.0
    %439 = vmatprep.subr.mxu0 0.0
    %440 = vmatpush2.msra.mxu0 0.0
    %441 = vmatprep.subr.mxu0 0.0
    %442 = vmatpush2.msra.mxu0 0.0
    %443 = vmatprep.subr.mxu0 0.0
    %444 = vmatpush2.msra.mxu0 0.0
    %445 = vmatprep.subr.mxu0 0.0
    %446 = vmatpush2.msra.mxu0 0.0
    %447 = vmatprep.subr.mxu0 0.0
    %448 = vmatpush2.msra.mxu0 0.0
    %449 = vmatprep.subr.mxu0 0.0
    %450 = vmatpush2.msra.mxu0 0.0
    %451 = vmatprep.subr.mxu0 0.0
    %452 = vmatpush2.msra.mxu0 0.0
    %453 = vmatprep.subr.mxu0 0.0
    %454 = vmatpush2.msra.mxu0 0.0
    %455 = vmatprep.mubr.f32.mxu0 0.0
    %456 = vmatmul.mubr.f32.gmra.mxu0 %v389
    %v457 = vpop.f32.mrf.mxu0
    %v458 = vadd.f32 0.0, %v457
    %v459 = vpop.f32.mrf.mxu0
    %460 = vdwg.mxu0
    %v461 = vadd.f32 %v388, %v458
    %v462 = vxor.u32 %v461, 2147483648
    %v463 = vmul.f32 %v462, 1.442695
    %v464 = vpow.pop %v463
    %v465 = vadd.f32 %v464, 1.0
    %v466 = vrcp.pop %v465
    %v467 = vmul.f32 1.0, %v466
    %v468 = vtanh.pop %v461
    %v469 = vmul.f32 %v467, %v374
    %471 = vrot.lane.b32.xlu0 %v468, 64
    %v472 = vpop.permute.xlu0 %471
    %v474 = vmul.f32 %v467, %v472
    %476 = vrot.lane.b32.xlu0 %v474, 32
    %v477 = vpop.permute.xlu0 %476
    %v479 = vadd.f32 %v469, %v477
    %v480 = vtanh.pop %v479
    %482 = vrot.lane.b32.xlu0 %v480, 64
    %v483 = vpop.permute.xlu0 %482
    %v485 = vmul.f32 %v467, %v483
    %487 = vrot.lane.b32.xlu0 %v485, 32
    %v488 = vpop.permute.xlu0 %487
    %s490 = scalar_lea.vmem [#allocation3], 2
    %491 = vst.msk [vmem:[%s490] sm:$0x3] %vm385, %v488
    %s492 = scalar_lea.vmem [#allocation2], 4
    %v493 = vld [vmem:[%s492] sm:$0x3]
    %v494 = vsel %vm282, %v488, 0
    %496 = vmatprep.subr.mxu0 0.0
    %497 = vmatpush1.msra.mxu0 0.0
    %498 = vmatprep.subr.mxu0 0.0
    %499 = vmatpush1.msra.mxu0 0.0
    %500 = vmatprep.subr.mxu0 0.0
    %501 = vmatpush1.msra.mxu0 0.0
    %502 = vmatprep.subr.mxu0 0.0
    %503 = vmatpush1.msra.mxu0 0.0
    %504 = vmatprep.subr.mxu0 0.0
    %505 = vmatpush1.msra.mxu0 0.0
    %506 = vmatprep.subr.mxu0 0.0
    %507 = vmatpush1.msra.mxu0 0.0
    %508 = vmatprep.subr.mxu0 0.0
    %509 = vmatpush1.msra.mxu0 0.0
    %510 = vmatprep.subr.mxu0 0.0
    %511 = vmatpush1.msra.mxu0 0.0
    %512 = vmatprep.subr.mxu0 0.0
    %513 = vmatpush1.msra.mxu0 0.0
    %514 = vmatprep.subr.mxu0 0.0
    %515 = vmatpush1.msra.mxu0 0.0
    %516 = vmatprep.subr.mxu0 0.0
    %517 = vmatpush1.msra.mxu0 0.0
    %518 = vmatprep.subr.mxu0 0.0
    %519 = vmatpush1.msra.mxu0 0.0
    %520 = vmatprep.subr.mxu0 0.0
    %521 = vmatpush1.msra.mxu0 %v280
    %522 = vmatprep.subr.mxu0 0.0
    %523 = vmatpush1.msra.mxu0 %v279
    %524 = vmatprep.subr.mxu0 0.0
    %525 = vmatpush1.msra.mxu0 %v278
    %526 = vmatprep.subr.mxu0 0.0
    %527 = vmatpush1.msra.mxu0 %v277
    %528 = vmatprep.subr.mxu0 0.0
    %529 = vmatpush2.msra.mxu0 0.0
    %530 = vmatprep.subr.mxu0 0.0
    %531 = vmatpush2.msra.mxu0 0.0
    %532 = vmatprep.subr.mxu0 0.0
    %533 = vmatpush2.msra.mxu0 0.0
    %534 = vmatprep.subr.mxu0 0.0
    %535 = vmatpush2.msra.mxu0 0.0
    %536 = vmatprep.subr.mxu0 0.0
    %537 = vmatpush2.msra.mxu0 0.0
    %538 = vmatprep.subr.mxu0 0.0
    %539 = vmatpush2.msra.mxu0 0.0
    %540 = vmatprep.subr.mxu0 0.0
    %541 = vmatpush2.msra.mxu0 0.0
    %542 = vmatprep.subr.mxu0 0.0
    %543 = vmatpush2.msra.mxu0 0.0
    %544 = vmatprep.subr.mxu0 0.0
    %545 = vmatpush2.msra.mxu0 0.0
    %546 = vmatprep.subr.mxu0 0.0
    %547 = vmatpush2.msra.mxu0 0.0
    %548 = vmatprep.subr.mxu0 0.0
    %549 = vmatpush2.msra.mxu0 0.0
    %550 = vmatprep.subr.mxu0 0.0
    %551 = vmatpush2.msra.mxu0 0.0
    %552 = vmatprep.subr.mxu0 0.0
    %553 = vmatpush2.msra.mxu0 0.0
    %554 = vmatprep.subr.mxu0 0.0
    %555 = vmatpush2.msra.mxu0 0.0
    %556 = vmatprep.subr.mxu0 0.0
    %557 = vmatpush2.msra.mxu0 0.0
    %558 = vmatprep.subr.mxu0 0.0
    %559 = vmatpush2.msra.mxu0 0.0
    %560 = vmatprep.mubr.f32.mxu0 0.0
    %561 = vmatmul.mubr.f32.gmra.mxu0 %v494
    %v562 = vpop.f32.mrf.mxu0
    %v563 = vadd.f32 0.0, %v562
    %v564 = vpop.f32.mrf.mxu0
    %565 = vdwg.mxu0
    %v566 = vadd.f32 %v493, %v563
    %v567 = vxor.u32 %v566, 2147483648
    %v568 = vmul.f32 %v567, 1.442695
    %v569 = vpow.pop %v568
    %v570 = vadd.f32 %v569, 1.0
    %v571 = vrcp.pop %v570
    %v572 = vmul.f32 1.0, %v571
    %v573 = vtanh.pop %v566
    %v574 = vmul.f32 %v572, %v479
    %576 = vrot.lane.b32.xlu0 %v573, 64
    %v577 = vpop.permute.xlu0 %576
    %v579 = vmul.f32 %v572, %v577
    %581 = vrot.lane.b32.xlu0 %v579, 32
    %v582 = vpop.permute.xlu0 %581
    %v584 = vadd.f32 %v574, %v582
    %v585 = vtanh.pop %v584
    %587 = vrot.lane.b32.xlu0 %v585, 64
    %v588 = vpop.permute.xlu0 %587
    %v590 = vmul.f32 %v572, %v588
    %592 = vrot.lane.b32.xlu0 %v590, 32
    %v593 = vpop.permute.xlu0 %592
    %s595 = scalar_lea.vmem [#allocation3], 4
    %596 = vst.msk [vmem:[%s595] sm:$0x3] %vm385, %v593
    %s597 = scalar_lea.vmem [#allocation2], 6
    %v598 = vld [vmem:[%s597] sm:$0x3]
    %v599 = vsel %vm282, %v593, 0
    %601 = vmatprep.subr.mxu0 0.0
    %602 = vmatpush1.msra.mxu0 0.0
    %603 = vmatprep.subr.mxu0 0.0
    %604 = vmatpush1.msra.mxu0 0.0
    %605 = vmatprep.subr.mxu0 0.0
    %606 = vmatpush1.msra.mxu0 0.0
    %607 = vmatprep.subr.mxu0 0.0
    %608 = vmatpush1.msra.mxu0 0.0
    %609 = vmatprep.subr.mxu0 0.0
    %610 = vmatpush1.msra.mxu0 0.0
    %611 = vmatprep.subr.mxu0 0.0
    %612 = vmatpush1.msra.mxu0 0.0
    %613 = vmatprep.subr.mxu0 0.0
    %614 = vmatpush1.msra.mxu0 0.0
    %615 = vmatprep.subr.mxu0 0.0
    %616 = vmatpush1.msra.mxu0 0.0
    %617 = vmatprep.subr.mxu0 0.0
    %618 = vmatpush1.msra.mxu0 0.0
    %619 = vmatprep.subr.mxu0 0.0
    %620 = vmatpush1.msra.mxu0 0.0
    %621 = vmatprep.subr.mxu0 0.0
    %622 = vmatpush1.msra.mxu0 0.0
    %623 = vmatprep.subr.mxu0 0.0
    %624 = vmatpush1.msra.mxu0 0.0
    %625 = vmatprep.subr.mxu0 0.0
    %626 = vmatpush1.msra.mxu0 %v280
    %627 = vmatprep.subr.mxu0 0.0
    %628 = vmatpush1.msra.mxu0 %v279
    %629 = vmatprep.subr.mxu0 0.0
    %630 = vmatpush1.msra.mxu0 %v278
    %631 = vmatprep.subr.mxu0 0.0
    %632 = vmatpush1.msra.mxu0 %v277
    %633 = vmatprep.subr.mxu0 0.0
    %634 = vmatpush2.msra.mxu0 0.0
    %635 = vmatprep.subr.mxu0 0.0
    %636 = vmatpush2.msra.mxu0 0.0
    %637 = vmatprep.subr.mxu0 0.0
    %638 = vmatpush2.msra.mxu0 0.0
    %639 = vmatprep.subr.mxu0 0.0
    %640 = vmatpush2.msra.mxu0 0.0
    %641 = vmatprep.subr.mxu0 0.0
    %642 = vmatpush2.msra.mxu0 0.0
    %643 = vmatprep.subr.mxu0 0.0
    %644 = vmatpush2.msra.mxu0 0.0
    %645 = vmatprep.subr.mxu0 0.0
    %646 = vmatpush2.msra.mxu0 0.0
    %647 = vmatprep.subr.mxu0 0.0
    %648 = vmatpush2.msra.mxu0 0.0
    %649 = vmatprep.subr.mxu0 0.0
    %650 = vmatpush2.msra.mxu0 0.0
    %651 = vmatprep.subr.mxu0 0.0
    %652 = vmatpush2.msra.mxu0 0.0
    %653 = vmatprep.subr.mxu0 0.0
    %654 = vmatpush2.msra.mxu0 0.0
    %655 = vmatprep.subr.mxu0 0.0
    %656 = vmatpush2.msra.mxu0 0.0
    %657 = vmatprep.subr.mxu0 0.0
    %658 = vmatpush2.msra.mxu0 0.0
    %659 = vmatprep.subr.mxu0 0.0
    %660 = vmatpush2.msra.mxu0 0.0
    %661 = vmatprep.subr.mxu0 0.0
    %662 = vmatpush2.msra.mxu0 0.0
    %663 = vmatprep.subr.mxu0 0.0
    %664 = vmatpush2.msra.mxu0 0.0
    %665 = vmatprep.mubr.f32.mxu0 0.0
    %666 = vmatmul.mubr.f32.gmra.mxu0 %v599
    %v667 = vpop.f32.mrf.mxu0
    %v668 = vadd.f32 0.0, %v667
    %v669 = vpop.f32.mrf.mxu0
    %670 = vdwg.mxu0
    %v671 = vadd.f32 %v598, %v668
    %v672 = vxor.u32 %v671, 2147483648
    %v673 = vmul.f32 %v672, 1.442695
    %v674 = vpow.pop %v673
    %v675 = vadd.f32 %v674, 1.0
    %v676 = vrcp.pop %v675
    %v677 = vmul.f32 1.0, %v676
    %v678 = vtanh.pop %v671
    %v679 = vmul.f32 %v677, %v584
    %681 = vrot.lane.b32.xlu0 %v678, 64
    %v682 = vpop.permute.xlu0 %681
    %v684 = vmul.f32 %v677, %v682
    %686 = vrot.lane.b32.xlu0 %v684, 32
    %v687 = vpop.permute.xlu0 %686
    %v689 = vadd.f32 %v679, %v687
    %v690 = vtanh.pop %v689
    %692 = vrot.lane.b32.xlu0 %v690, 64
    %v693 = vpop.permute.xlu0 %692
    %v695 = vmul.f32 %v677, %v693
    %697 = vrot.lane.b32.xlu0 %v695, 32
    %v698 = vpop.permute.xlu0 %697
    %s700 = scalar_lea.vmem [#allocation3], 6
    %701 = vst.msk [vmem:[%s700] sm:$0x3] %vm385, %v698
    %s702 = scalar_lea.vmem [#allocation2], 8
    %v703 = vld [vmem:[%s702] sm:$0x3]
    %v704 = vsel %vm282, %v698, 0
    %706 = vmatprep.subr.mxu0 0.0
    %707 = vmatpush1.msra.mxu0 0.0
    %708 = vmatprep.subr.mxu0 0.0
    %709 = vmatpush1.msra.mxu0 0.0
    %710 = vmatprep.subr.mxu0 0.0
    %711 = vmatpush1.msra.mxu0 0.0
    %712 = vmatprep.subr.mxu0 0.0
    %713 = vmatpush1.msra.mxu0 0.0
    %714 = vmatprep.subr.mxu0 0.0
    %715 = vmatpush1.msra.mxu0 0.0
    %716 = vmatprep.subr.mxu0 0.0
    %717 = vmatpush1.msra.mxu0 0.0
    %718 = vmatprep.subr.mxu0 0.0
    %719 = vmatpush1.msra.mxu0 0.0
    %720 = vmatprep.subr.mxu0 0.0
    %721 = vmatpush1.msra.mxu0 0.0
    %722 = vmatprep.subr.mxu0 0.0
    %723 = vmatpush1.msra.mxu0 0.0
    %724 = vmatprep.subr.mxu0 0.0
    %725 = vmatpush1.msra.mxu0 0.0
    %726 = vmatprep.subr.mxu0 0.0
    %727 = vmatpush1.msra.mxu0 0.0
    %728 = vmatprep.subr.mxu0 0.0
    %729 = vmatpush1.msra.mxu0 0.0
    %730 = vmatprep.subr.mxu0 0.0
    %731 = vmatpush1.msra.mxu0 %v280
    %732 = vmatprep.subr.mxu0 0.0
    %733 = vmatpush1.msra.mxu0 %v279
    %734 = vmatprep.subr.mxu0 0.0
    %735 = vmatpush1.msra.mxu0 %v278
    %736 = vmatprep.subr.mxu0 0.0
    %737 = vmatpush1.msra.mxu0 %v277
    %738 = vmatprep.subr.mxu0 0.0
    %739 = vmatpush2.msra.mxu0 0.0
    %740 = vmatprep.subr.mxu0 0.0
    %741 = vmatpush2.msra.mxu0 0.0
    %742 = vmatprep.subr.mxu0 0.0
    %743 = vmatpush2.msra.mxu0 0.0
    %744 = vmatprep.subr.mxu0 0.0
    %745 = vmatpush2.msra.mxu0 0.0
    %746 = vmatprep.subr.mxu0 0.0
    %747 = vmatpush2.msra.mxu0 0.0
    %748 = vmatprep.subr.mxu0 0.0
    %749 = vmatpush2.msra.mxu0 0.0
    %750 = vmatprep.subr.mxu0 0.0
    %751 = vmatpush2.msra.mxu0 0.0
    %752 = vmatprep.subr.mxu0 0.0
    %753 = vmatpush2.msra.mxu0 0.0
    %754 = vmatprep.subr.mxu0 0.0
    %755 = vmatpush2.msra.mxu0 0.0
    %756 = vmatprep.subr.mxu0 0.0
    %757 = vmatpush2.msra.mxu0 0.0
    %758 = vmatprep.subr.mxu0 0.0
    %759 = vmatpush2.msra.mxu0 0.0
    %760 = vmatprep.subr.mxu0 0.0
    %761 = vmatpush2.msra.mxu0 0.0
    %762 = vmatprep.subr.mxu0 0.0
    %763 = vmatpush2.msra.mxu0 0.0
    %764 = vmatprep.subr.mxu0 0.0
    %765 = vmatpush2.msra.mxu0 0.0
    %766 = vmatprep.subr.mxu0 0.0
    %767 = vmatpush2.msra.mxu0 0.0
    %768 = vmatprep.subr.mxu0 0.0
    %769 = vmatpush2.msra.mxu0 0.0
    %770 = vmatprep.mubr.f32.mxu0 0.0
    %771 = vmatmul.mubr.f32.gmra.mxu0 %v704
    %v772 = vpop.f32.mrf.mxu0
    %v773 = vadd.f32 0.0, %v772
    %v774 = vpop.f32.mrf.mxu0
    %775 = vdwg.mxu0
    %v776 = vadd.f32 %v703, %v773
    %v777 = vxor.u32 %v776, 2147483648
    %v778 = vmul.f32 %v777, 1.442695
    %v779 = vpow.pop %v778
    %v780 = vadd.f32 %v779, 1.0
    %v781 = vrcp.pop %v780
    %v782 = vmul.f32 1.0, %v781
    %v783 = vtanh.pop %v776
    %v784 = vmul.f32 %v782, %v689
    %786 = vrot.lane.b32.xlu0 %v783, 64
    %v787 = vpop.permute.xlu0 %786
    %v789 = vmul.f32 %v782, %v787
    %791 = vrot.lane.b32.xlu0 %v789, 32
    %v792 = vpop.permute.xlu0 %791
    %v794 = vadd.f32 %v784, %v792
    %v795 = vtanh.pop %v794
    %797 = vrot.lane.b32.xlu0 %v795, 64
    %v798 = vpop.permute.xlu0 %797
    %v800 = vmul.f32 %v782, %v798
    %802 = vrot.lane.b32.xlu0 %v800, 32
    %v803 = vpop.permute.xlu0 %802
    %s805 = scalar_lea.vmem [#allocation3], 8
    %806 = vst.msk [vmem:[%s805] sm:$0x3] %vm385, %v803
    %s807 = scalar_lea.vmem [#allocation2], 10
    %v808 = vld [vmem:[%s807] sm:$0x3]
    %v809 = vsel %vm282, %v803, 0
    %811 = vmatprep.subr.mxu0 0.0
    %812 = vmatpush1.msra.mxu0 0.0
    %813 = vmatprep.subr.mxu0 0.0
    %814 = vmatpush1.msra.mxu0 0.0
    %815 = vmatprep.subr.mxu0 0.0
    %816 = vmatpush1.msra.mxu0 0.0
    %817 = vmatprep.subr.mxu0 0.0
    %818 = vmatpush1.msra.mxu0 0.0
    %819 = vmatprep.subr.mxu0 0.0
    %820 = vmatpush1.msra.mxu0 0.0
    %821 = vmatprep.subr.mxu0 0.0
    %822 = vmatpush1.msra.mxu0 0.0
    %823 = vmatprep.subr.mxu0 0.0
    %824 = vmatpush1.msra.mxu0 0.0
    %825 = vmatprep.subr.mxu0 0.0
    %826 = vmatpush1.msra.mxu0 0.0
    %827 = vmatprep.subr.mxu0 0.0
    %828 = vmatpush1.msra.mxu0 0.0
    %829 = vmatprep.subr.mxu0 0.0
    %830 = vmatpush1.msra.mxu0 0.0
    %831 = vmatprep.subr.mxu0 0.0
    %832 = vmatpush1.msra.mxu0 0.0
    %833 = vmatprep.subr.mxu0 0.0
    %834 = vmatpush1.msra.mxu0 0.0
    %835 = vmatprep.subr.mxu0 0.0
    %836 = vmatpush1.msra.mxu0 %v280
    %837 = vmatprep.subr.mxu0 0.0
    %838 = vmatpush1.msra.mxu0 %v279
    %839 = vmatprep.subr.mxu0 0.0
    %840 = vmatpush1.msra.mxu0 %v278
    %841 = vmatprep.subr.mxu0 0.0
    %842 = vmatpush1.msra.mxu0 %v277
    %843 = vmatprep.subr.mxu0 0.0
    %844 = vmatpush2.msra.mxu0 0.0
    %845 = vmatprep.subr.mxu0 0.0
    %846 = vmatpush2.msra.mxu0 0.0
    %847 = vmatprep.subr.mxu0 0.0
    %848 = vmatpush2.msra.mxu0 0.0
    %849 = vmatprep.subr.mxu0 0.0
    %850 = vmatpush2.msra.mxu0 0.0
    %851 = vmatprep.subr.mxu0 0.0
    %852 = vmatpush2.msra.mxu0 0.0
    %853 = vmatprep.subr.mxu0 0.0
    %854 = vmatpush2.msra.mxu0 0.0
    %855 = vmatprep.subr.mxu0 0.0
    %856 = vmatpush2.msra.mxu0 0.0
    %857 = vmatprep.subr.mxu0 0.0
    %858 = vmatpush2.msra.mxu0 0.0
    %859 = vmatprep.subr.mxu0 0.0
    %860 = vmatpush2.msra.mxu0 0.0
    %861 = vmatprep.subr.mxu0 0.0
    %862 = vmatpush2.msra.mxu0 0.0
    %863 = vmatprep.subr.mxu0 0.0
    %864 = vmatpush2.msra.mxu0 0.0
    %865 = vmatprep.subr.mxu0 0.0
    %866 = vmatpush2.msra.mxu0 0.0
    %867 = vmatprep.subr.mxu0 0.0
    %868 = vmatpush2.msra.mxu0 0.0
    %869 = vmatprep.subr.mxu0 0.0
    %870 = vmatpush2.msra.mxu0 0.0
    %871 = vmatprep.subr.mxu0 0.0
    %872 = vmatpush2.msra.mxu0 0.0
    %873 = vmatprep.subr.mxu0 0.0
    %874 = vmatpush2.msra.mxu0 0.0
    %875 = vmatprep.mubr.f32.mxu0 0.0
    %876 = vmatmul.mubr.f32.gmra.mxu0 %v809
    %v877 = vpop.f32.mrf.mxu0
    %v878 = vadd.f32 0.0, %v877
    %v879 = vpop.f32.mrf.mxu0
    %880 = vdwg.mxu0
    %v881 = vadd.f32 %v808, %v878
    %v882 = vxor.u32 %v881, 2147483648
    %v883 = vmul.f32 %v882, 1.442695
    %v884 = vpow.pop %v883
    %v885 = vadd.f32 %v884, 1.0
    %v886 = vrcp.pop %v885
    %v887 = vmul.f32 1.0, %v886
    %v888 = vtanh.pop %v881
    %v889 = vmul.f32 %v887, %v794
    %891 = vrot.lane.b32.xlu0 %v888, 64
    %v892 = vpop.permute.xlu0 %891
    %v894 = vmul.f32 %v887, %v892
    %896 = vrot.lane.b32.xlu0 %v894, 32
    %v897 = vpop.permute.xlu0 %896
    %v899 = vadd.f32 %v889, %v897
    %v900 = vtanh.pop %v899
    %902 = vrot.lane.b32.xlu0 %v900, 64
    %v903 = vpop.permute.xlu0 %902
    %v905 = vmul.f32 %v887, %v903
    %907 = vrot.lane.b32.xlu0 %v905, 32
    %v908 = vpop.permute.xlu0 %907
    %s910 = scalar_lea.vmem [#allocation3], 10
    %911 = vst.msk [vmem:[%s910] sm:$0x3] %vm385, %v908
    %s912 = scalar_lea.vmem [#allocation2], 12
    %v913 = vld [vmem:[%s912] sm:$0x3]
    %v914 = vsel %vm282, %v908, 0
    %916 = vmatprep.subr.mxu0 0.0
    %917 = vmatpush1.msra.mxu0 0.0
    %918 = vmatprep.subr.mxu0 0.0
    %919 = vmatpush1.msra.mxu0 0.0
    %920 = vmatprep.subr.mxu0 0.0
    %921 = vmatpush1.msra.mxu0 0.0
    %922 = vmatprep.subr.mxu0 0.0
    %923 = vmatpush1.msra.mxu0 0.0
    %924 = vmatprep.subr.mxu0 0.0
    %925 = vmatpush1.msra.mxu0 0.0
    %926 = vmatprep.subr.mxu0 0.0
    %927 = vmatpush1.msra.mxu0 0.0
    %928 = vmatprep.subr.mxu0 0.0
    %929 = vmatpush1.msra.mxu0 0.0
    %930 = vmatprep.subr.mxu0 0.0
    %931 = vmatpush1.msra.mxu0 0.0
    %932 = vmatprep.subr.mxu0 0.0
    %933 = vmatpush1.msra.mxu0 0.0
    %934 = vmatprep.subr.mxu0 0.0
    %935 = vmatpush1.msra.mxu0 0.0
    %936 = vmatprep.subr.mxu0 0.0
    %937 = vmatpush1.msra.mxu0 0.0
    %938 = vmatprep.subr.mxu0 0.0
    %939 = vmatpush1.msra.mxu0 0.0
    %940 = vmatprep.subr.mxu0 0.0
    %941 = vmatpush1.msra.mxu0 %v280
    %942 = vmatprep.subr.mxu0 0.0
    %943 = vmatpush1.msra.mxu0 %v279
    %944 = vmatprep.subr.mxu0 0.0
    %945 = vmatpush1.msra.mxu0 %v278
    %946 = vmatprep.subr.mxu0 0.0
    %947 = vmatpush1.msra.mxu0 %v277
    %948 = vmatprep.subr.mxu0 0.0
    %949 = vmatpush2.msra.mxu0 0.0
    %950 = vmatprep.subr.mxu0 0.0
    %951 = vmatpush2.msra.mxu0 0.0
    %952 = vmatprep.subr.mxu0 0.0
    %953 = vmatpush2.msra.mxu0 0.0
    %954 = vmatprep.subr.mxu0 0.0
    %955 = vmatpush2.msra.mxu0 0.0
    %956 = vmatprep.subr.mxu0 0.0
    %957 = vmatpush2.msra.mxu0 0.0
    %958 = vmatprep.subr.mxu0 0.0
    %959 = vmatpush2.msra.mxu0 0.0
    %960 = vmatprep.subr.mxu0 0.0
    %961 = vmatpush2.msra.mxu0 0.0
    %962 = vmatprep.subr.mxu0 0.0
    %963 = vmatpush2.msra.mxu0 0.0
    %964 = vmatprep.subr.mxu0 0.0
    %965 = vmatpush2.msra.mxu0 0.0
    %966 = vmatprep.subr.mxu0 0.0
    %967 = vmatpush2.msra.mxu0 0.0
    %968 = vmatprep.subr.mxu0 0.0
    %969 = vmatpush2.msra.mxu0 0.0
    %970 = vmatprep.subr.mxu0 0.0
    %971 = vmatpush2.msra.mxu0 0.0
    %972 = vmatprep.subr.mxu0 0.0
    %973 = vmatpush2.msra.mxu0 0.0
    %974 = vmatprep.subr.mxu0 0.0
    %975 = vmatpush2.msra.mxu0 0.0
    %976 = vmatprep.subr.mxu0 0.0
    %977 = vmatpush2.msra.mxu0 0.0
    %978 = vmatprep.subr.mxu0 0.0
    %979 = vmatpush2.msra.mxu0 0.0
    %980 = vmatprep.mubr.f32.mxu0 0.0
    %981 = vmatmul.mubr.f32.gmra.mxu0 %v914
    %v982 = vpop.f32.mrf.mxu0
    %v983 = vadd.f32 0.0, %v982
    %v984 = vpop.f32.mrf.mxu0
    %985 = vdwg.mxu0
    %v986 = vadd.f32 %v913, %v983
    %v987 = vxor.u32 %v986, 2147483648
    %v988 = vmul.f32 %v987, 1.442695
    %v989 = vpow.pop %v988
    %v990 = vadd.f32 %v989, 1.0
    %v991 = vrcp.pop %v990
    %v992 = vmul.f32 1.0, %v991
    %v993 = vtanh.pop %v986
    %v994 = vmul.f32 %v992, %v899
    %996 = vrot.lane.b32.xlu0 %v993, 64
    %v997 = vpop.permute.xlu0 %996
    %v999 = vmul.f32 %v992, %v997
    %1001 = vrot.lane.b32.xlu0 %v999, 32
    %v1002 = vpop.permute.xlu0 %1001
    %v1004 = vadd.f32 %v994, %v1002
    %v1005 = vtanh.pop %v1004
    %1007 = vrot.lane.b32.xlu0 %v1005, 64
    %v1008 = vpop.permute.xlu0 %1007
    %v1010 = vmul.f32 %v992, %v1008
    %1012 = vrot.lane.b32.xlu0 %v1010, 32
    %v1013 = vpop.permute.xlu0 %1012
    %s1015 = scalar_lea.vmem [#allocation3], 12
    %1016 = vst.msk [vmem:[%s1015] sm:$0x3] %vm385, %v1013
    %s1017 = scalar_lea.vmem [#allocation2], 14
    %v1018 = vld [vmem:[%s1017] sm:$0x3]
    %v1019 = vsel %vm282, %v1013, 0
    %1021 = vmatprep.subr.mxu0 0.0
    %1022 = vmatpush1.msra.mxu0 0.0
    %1023 = vmatprep.subr.mxu0 0.0
    %1024 = vmatpush1.msra.mxu0 0.0
    %1025 = vmatprep.subr.mxu0 0.0
    %1026 = vmatpush1.msra.mxu0 0.0
    %1027 = vmatprep.subr.mxu0 0.0
    %1028 = vmatpush1.msra.mxu0 0.0
    %1029 = vmatprep.subr.mxu0 0.0
    %1030 = vmatpush1.msra.mxu0 0.0
    %1031 = vmatprep.subr.mxu0 0.0
    %1032 = vmatpush1.msra.mxu0 0.0
    %1033 = vmatprep.subr.mxu0 0.0
    %1034 = vmatpush1.msra.mxu0 0.0
    %1035 = vmatprep.subr.mxu0 0.0
    %1036 = vmatpush1.msra.mxu0 0.0
    %1037 = vmatprep.subr.mxu0 0.0
    %1038 = vmatpush1.msra.mxu0 0.0
    %1039 = vmatprep.subr.mxu0 0.0
    %1040 = vmatpush1.msra.mxu0 0.0
    %1041 = vmatprep.subr.mxu0 0.0
    %1042 = vmatpush1.msra.mxu0 0.0
    %1043 = vmatprep.subr.mxu0 0.0
    %1044 = vmatpush1.msra.mxu0 0.0
    %1045 = vmatprep.subr.mxu0 0.0
    %1046 = vmatpush1.msra.mxu0 %v280
    %1047 = vmatprep.subr.mxu0 0.0
    %1048 = vmatpush1.msra.mxu0 %v279
    %1049 = vmatprep.subr.mxu0 0.0
    %1050 = vmatpush1.msra.mxu0 %v278
    %1051 = vmatprep.subr.mxu0 0.0
    %1052 = vmatpush1.msra.mxu0 %v277
    %1053 = vmatprep.subr.mxu0 0.0
    %1054 = vmatpush2.msra.mxu0 0.0
    %1055 = vmatprep.subr.mxu0 0.0
    %1056 = vmatpush2.msra.mxu0 0.0
    %1057 = vmatprep.subr.mxu0 0.0
    %1058 = vmatpush2.msra.mxu0 0.0
    %1059 = vmatprep.subr.mxu0 0.0
    %1060 = vmatpush2.msra.mxu0 0.0
    %1061 = vmatprep.subr.mxu0 0.0
    %1062 = vmatpush2.msra.mxu0 0.0
    %1063 = vmatprep.subr.mxu0 0.0
    %1064 = vmatpush2.msra.mxu0 0.0
    %1065 = vmatprep.subr.mxu0 0.0
    %1066 = vmatpush2.msra.mxu0 0.0
    %1067 = vmatprep.subr.mxu0 0.0
    %1068 = vmatpush2.msra.mxu0 0.0
    %1069 = vmatprep.subr.mxu0 0.0
    %1070 = vmatpush2.msra.mxu0 0.0
    %1071 = vmatprep.subr.mxu0 0.0
    %1072 = vmatpush2.msra.mxu0 0.0
    %1073 = vmatprep.subr.mxu0 0.0
    %1074 = vmatpush2.msra.mxu0 0.0
    %1075 = vmatprep.subr.mxu0 0.0
    %1076 = vmatpush2.msra.mxu0 0.0
    %1077 = vmatprep.subr.mxu0 0.0
    %1078 = vmatpush2.msra.mxu0 0.0
    %1079 = vmatprep.subr.mxu0 0.0
    %1080 = vmatpush2.msra.mxu0 0.0
    %1081 = vmatprep.subr.mxu0 0.0
    %1082 = vmatpush2.msra.mxu0 0.0
    %1083 = vmatprep.subr.mxu0 0.0
    %1084 = vmatpush2.msra.mxu0 0.0
    %1085 = vmatprep.mubr.f32.mxu0 0.0
    %1086 = vmatmul.mubr.f32.gmra.mxu0 %v1019
    %v1087 = vpop.f32.mrf.mxu0
    %v1088 = vadd.f32 0.0, %v1087
    %v1089 = vpop.f32.mrf.mxu0
    %1090 = vdwg.mxu0
    %v1091 = vadd.f32 %v1018, %v1088
    %v1092 = vxor.u32 %v1091, 2147483648
    %v1093 = vmul.f32 %v1092, 1.442695
    %v1094 = vpow.pop %v1093
    %v1095 = vadd.f32 %v1094, 1.0
    %v1096 = vrcp.pop %v1095
    %v1097 = vmul.f32 1.0, %v1096
    %v1098 = vtanh.pop %v1091
    %v1099 = vmul.f32 %v1097, %v1004
    %1101 = vrot.lane.b32.xlu0 %v1098, 64
    %v1102 = vpop.permute.xlu0 %1101
    %v1104 = vmul.f32 %v1097, %v1102
    %1106 = vrot.lane.b32.xlu0 %v1104, 32
    %v1107 = vpop.permute.xlu0 %1106
    %v1109 = vadd.f32 %v1099, %v1107
    %v1110 = vtanh.pop %v1109
    %1112 = vrot.lane.b32.xlu0 %v1110, 64
    %v1113 = vpop.permute.xlu0 %1112
    %v1115 = vmul.f32 %v1097, %v1113
    %1117 = vrot.lane.b32.xlu0 %v1115, 32
    %v1118 = vpop.permute.xlu0 %1117
    %s1120 = scalar_lea.vmem [#allocation3], 14
    %1121 = vst.msk [vmem:[%s1120] sm:$0x3] %vm385, %v1118
    %v1122 = vld [vmem:[#allocation3] sm:$0x3]
    %v1123 = vld [vmem:[#allocation3 + $0x2] sm:$0x3]
    %v1124 = vld [vmem:[#allocation3 + $0x4] sm:$0x3]
    %v1125 = vld [vmem:[#allocation3 + $0x6] sm:$0x3]
    %v1126 = vld [vmem:[#allocation3 + $0x8] sm:$0x3]
    %v1127 = vld [vmem:[#allocation3 + $0xa] sm:$0x3]
    %v1128 = vld [vmem:[#allocation3 + $0xc] sm:$0x3]
    %v1129 = vld [vmem:[#allocation3 + $0xe] sm:$0x3]
    %v1130 = vld [vmem:[%s2] sm:$0xff]
    %v1131 = vld [vmem:[%s2 + $0x8] sm:$0xff]
    %v1132 = vld [vmem:[%s2 + $0x10] sm:$0xff]
    %v1133 = vld [vmem:[%s2 + $0x18] sm:$0xff]
    %s1134 = scalar_lea.vmem [#allocation9], 1
    %v1135 = vld [vmem:[%s1134] sm:$0x1]
    %v1137 = vlaneseq
    %v1138 = vshrl.u32 %v1137, 7
    %v1139 = vsub.s32 0, %v1138
    %v1140 = vrot.slane %v1135, %v1139
    %v1150 = vcombine.low %v1122, %v1123
    %v1151 = vcombine.low %v1124, %v1125
    %v1153 = vunpack.c.l.s4 1983009808
    %v1154 = vunpack.c.0.s8 %v1153
    %v1155 = vlaneseq
    %v1156 = vshrl.u32 %v1155, 7
    %v1157 = vsub.s32 %v1154, %v1156
    %v1158 = vrot.slane %v1150, %v1157
    %v1160 = vunpack.c.l.s4 1983009808
    %v1161 = vunpack.c.0.s8 %v1160
    %v1162 = vlaneseq
    %v1163 = vshrl.u32 %v1162, 7
    %v1164 = vsub.s32 %v1161, %v1163
    %v1165 = vrot.slane %v1151, %v1164
    %v1166 = vcombine.low %v1158, %v1165
    %v1167 = vcombine.low %v1126, %v1127
    %v1168 = vcombine.low %v1128, %v1129
    %v1170 = vunpack.c.l.s4 1983009808
    %v1171 = vunpack.c.0.s8 %v1170
    %v1172 = vlaneseq
    %v1173 = vshrl.u32 %v1172, 7
    %v1174 = vsub.s32 %v1171, %v1173
    %v1175 = vrot.slane %v1167, %v1174
    %v1177 = vunpack.c.l.s4 1983009808
    %v1178 = vunpack.c.0.s8 %v1177
    %v1179 = vlaneseq
    %v1180 = vshrl.u32 %v1179, 7
    %v1181 = vsub.s32 %v1178, %v1180
    %v1182 = vrot.slane %v1168, %v1181
    %v1183 = vcombine.low %v1175, %v1182
    %v1184 = vsel %vm282, %v1166, 0
    %v1186 = vsel %vm282, %v1183, 0
    %1188 = vmatprep.subr.mxu0 0.0
    %1189 = vmatpush1.msra.mxu0 0.0
    %1190 = vmatprep.subr.mxu0 0.0
    %1191 = vmatpush1.msra.mxu0 0.0
    %1192 = vmatprep.subr.mxu0 0.0
    %1193 = vmatpush1.msra.mxu0 0.0
    %1194 = vmatprep.subr.mxu0 0.0
    %1195 = vmatpush1.msra.mxu0 0.0
    %1196 = vmatprep.subr.mxu0 0.0
    %1197 = vmatpush1.msra.mxu0 0.0
    %1198 = vmatprep.subr.mxu0 0.0
    %1199 = vmatpush1.msra.mxu0 0.0
    %1200 = vmatprep.subr.mxu0 0.0
    %1201 = vmatpush1.msra.mxu0 0.0
    %1202 = vmatprep.subr.mxu0 0.0
    %1203 = vmatpush1.msra.mxu0 0.0
    %1204 = vmatprep.subr.mxu0 0.0
    %1205 = vmatpush1.msra.mxu0 0.0
    %1206 = vmatprep.subr.mxu0 0.0
    %1207 = vmatpush1.msra.mxu0 0.0
    %1208 = vmatprep.subr.mxu0 0.0
    %1209 = vmatpush1.msra.mxu0 0.0
    %1210 = vmatprep.subr.mxu0 0.0
    %1211 = vmatpush1.msra.mxu0 0.0
    %1212 = vmatprep.subr.mxu0 0.0
    %1213 = vmatpush1.msra.mxu0 %v1133
    %1214 = vmatprep.subr.mxu0 0.0
    %1215 = vmatpush1.msra.mxu0 %v1132
    %1216 = vmatprep.subr.mxu0 0.0
    %1217 = vmatpush1.msra.mxu0 %v1131
    %1218 = vmatprep.subr.mxu0 0.0
    %1219 = vmatpush1.msra.mxu0 %v1130
    %1220 = vmatprep.subr.mxu0 0.0
    %1221 = vmatpush2.msra.mxu0 0.0
    %1222 = vmatprep.subr.mxu0 0.0
    %1223 = vmatpush2.msra.mxu0 0.0
    %1224 = vmatprep.subr.mxu0 0.0
    %1225 = vmatpush2.msra.mxu0 0.0
    %1226 = vmatprep.subr.mxu0 0.0
    %1227 = vmatpush2.msra.mxu0 0.0
    %1228 = vmatprep.subr.mxu0 0.0
    %1229 = vmatpush2.msra.mxu0 0.0
    %1230 = vmatprep.subr.mxu0 0.0
    %1231 = vmatpush2.msra.mxu0 0.0
    %1232 = vmatprep.subr.mxu0 0.0
    %1233 = vmatpush2.msra.mxu0 0.0
    %1234 = vmatprep.subr.mxu0 0.0
    %1235 = vmatpush2.msra.mxu0 0.0
    %1236 = vmatprep.subr.mxu0 0.0
    %1237 = vmatpush2.msra.mxu0 0.0
    %1238 = vmatprep.subr.mxu0 0.0
    %1239 = vmatpush2.msra.mxu0 0.0
    %1240 = vmatprep.subr.mxu0 0.0
    %1241 = vmatpush2.msra.mxu0 0.0
    %1242 = vmatprep.subr.mxu0 0.0
    %1243 = vmatpush2.msra.mxu0 0.0
    %1244 = vmatprep.subr.mxu0 0.0
    %1245 = vmatpush2.msra.mxu0 0.0
    %1246 = vmatprep.subr.mxu0 0.0
    %1247 = vmatpush2.msra.mxu0 0.0
    %1248 = vmatprep.subr.mxu0 0.0
    %1249 = vmatpush2.msra.mxu0 0.0
    %1250 = vmatprep.subr.mxu0 0.0
    %1251 = vmatpush2.msra.mxu0 0.0
    %1252 = vmatprep.mubr.f32.mxu0 0.0
    %1253 = vmatmul.mubr.f32.gmra.mxu0 %v1184
    %v1254 = vpop.f32.mrf.mxu0
    %v1255 = vadd.f32 %v1140, %v1254
    %v1256 = vpop.f32.mrf.mxu0
    %1257 = vmatprep.mubr.f32.mxu0 0.0
    %1258 = vmatmul.mubr.f32.gmra.mxu0 %v1186
    %v1259 = vpop.f32.mrf.mxu0
    %v1260 = vadd.f32 %v1140, %v1259
    %v1261 = vpop.f32.mrf.mxu0
    %1262 = vdwg.mxu0
    %v1265 = vcombine.high %v1255, %v1255
    %v1267 = vunpack.c.l.s4 1983009808
    %v1268 = vunpack.c.0.s8 %v1267
    %v1269 = vlaneseq
    %v1270 = vshrl.u32 %v1269, 7
    %v1271 = vsub.s32 %v1268, %v1270
    %v1272 = vrot.slane %v1255, %v1271
    %v1274 = vunpack.c.l.s4 1983009808
    %v1275 = vunpack.c.0.s8 %v1274
    %v1276 = vlaneseq
    %v1277 = vshrl.u32 %v1276, 7
    %v1278 = vsub.s32 %v1275, %v1277
    %v1279 = vrot.slane %v1265, %v1278
    %v1280 = vcombine.high %v1272, %v1272
    %v1281 = vcombine.high %v1279, %v1279
    %v1282 = vcombine.high %v1260, %v1260
    %v1284 = vunpack.c.l.s4 1983009808
    %v1285 = vunpack.c.0.s8 %v1284
    %v1286 = vlaneseq
    %v1287 = vshrl.u32 %v1286, 7
    %v1288 = vsub.s32 %v1285, %v1287
    %v1289 = vrot.slane %v1260, %v1288
    %v1291 = vunpack.c.l.s4 1983009808
    %v1292 = vunpack.c.0.s8 %v1291
    %v1293 = vlaneseq
    %v1294 = vshrl.u32 %v1293, 7
    %v1295 = vsub.s32 %v1292, %v1294
    %v1296 = vrot.slane %v1282, %v1295
    %v1297 = vcombine.high %v1289, %v1289
    %v1298 = vcombine.high %v1296, %v1296
    %1307 = vst [vmem:[#allocation2] sm:$0x3] %v1272
    %1308 = vst [vmem:[#allocation2 + $0x2] sm:$0x3] %v1280
    %1309 = vst [vmem:[#allocation2 + $0x4] sm:$0x3] %v1279
    %1310 = vst [vmem:[#allocation2 + $0x6] sm:$0x3] %v1281
    %1311 = vst [vmem:[#allocation2 + $0x8] sm:$0x3] %v1289
    %1312 = vst [vmem:[#allocation2 + $0xa] sm:$0x3] %v1297
    %1313 = vst [vmem:[#allocation2 + $0xc] sm:$0x3] %v1296
    %1314 = vst [vmem:[#allocation2 + $0xe] sm:$0x3] %v1298
    %s1315 = scalar_lea.vmem [#allocation7], 32
    %v1316 = vld [vmem:[%s1315] sm:$0xff]
    %v1317 = vld [vmem:[%s1315 + $0x8] sm:$0xff]
    %v1318 = vld [vmem:[%s1315 + $0x10] sm:$0xff]
    %v1319 = vld [vmem:[%s1315 + $0x18] sm:$0xff]
    %v1320 = vld [vmem:[#allocation2] sm:$0x3]
    %1321 = vmatprep.subr.mxu0 0.0
    %1322 = vmatpush1.msra.mxu0 0.0
    %1323 = vmatprep.subr.mxu0 0.0
    %1324 = vmatpush1.msra.mxu0 0.0
    %1325 = vmatprep.subr.mxu0 0.0
    %1326 = vmatpush1.msra.mxu0 0.0
    %1327 = vmatprep.subr.mxu0 0.0
    %1328 = vmatpush1.msra.mxu0 0.0
    %1329 = vmatprep.subr.mxu0 0.0
    %1330 = vmatpush1.msra.mxu0 0.0
    %1331 = vmatprep.subr.mxu0 0.0
    %1332 = vmatpush1.msra.mxu0 0.0
    %1333 = vmatprep.subr.mxu0 0.0
    %1334 = vmatpush1.msra.mxu0 0.0
    %1335 = vmatprep.subr.mxu0 0.0
    %1336 = vmatpush1.msra.mxu0 0.0
    %1337 = vmatprep.subr.mxu0 0.0
    %1338 = vmatpush1.msra.mxu0 0.0
    %1339 = vmatprep.subr.mxu0 0.0
    %1340 = vmatpush1.msra.mxu0 0.0
    %1341 = vmatprep.subr.mxu0 0.0
    %1342 = vmatpush1.msra.mxu0 0.0
    %1343 = vmatprep.subr.mxu0 0.0
    %1344 = vmatpush1.msra.mxu0 0.0
    %1345 = vmatprep.subr.mxu0 0.0
    %1346 = vmatpush1.msra.mxu0 %v1319
    %1347 = vmatprep.subr.mxu0 0.0
    %1348 = vmatpush1.msra.mxu0 %v1318
    %1349 = vmatprep.subr.mxu0 0.0
    %1350 = vmatpush1.msra.mxu0 %v1317
    %1351 = vmatprep.subr.mxu0 0.0
    %1352 = vmatpush1.msra.mxu0 %v1316
    %1353 = vmatprep.subr.mxu0 0.0
    %1354 = vmatpush2.msra.mxu0 0.0
    %1355 = vmatprep.subr.mxu0 0.0
    %1356 = vmatpush2.msra.mxu0 0.0
    %1357 = vmatprep.subr.mxu0 0.0
    %1358 = vmatpush2.msra.mxu0 0.0
    %1359 = vmatprep.subr.mxu0 0.0
    %1360 = vmatpush2.msra.mxu0 0.0
    %1361 = vmatprep.subr.mxu0 0.0
    %1362 = vmatpush2.msra.mxu0 0.0
    %1363 = vmatprep.subr.mxu0 0.0
    %1364 = vmatpush2.msra.mxu0 0.0
    %1365 = vmatprep.subr.mxu0 0.0
    %1366 = vmatpush2.msra.mxu0 0.0
    %1367 = vmatprep.subr.mxu0 0.0
    %1368 = vmatpush2.msra.mxu0 0.0
    %1369 = vmatprep.subr.mxu0 0.0
    %1370 = vmatpush2.msra.mxu0 0.0
    %1371 = vmatprep.subr.mxu0 0.0
    %1372 = vmatpush2.msra.mxu0 0.0
    %1373 = vmatprep.subr.mxu0 0.0
    %1374 = vmatpush2.msra.mxu0 0.0
    %1375 = vmatprep.subr.mxu0 0.0
    %1376 = vmatpush2.msra.mxu0 0.0
    %1377 = vmatprep.subr.mxu0 0.0
    %1378 = vmatpush2.msra.mxu0 0.0
    %1379 = vmatprep.subr.mxu0 0.0
    %1380 = vmatpush2.msra.mxu0 0.0
    %1381 = vmatprep.subr.mxu0 0.0
    %1382 = vmatpush2.msra.mxu0 0.0
    %1383 = vmatprep.subr.mxu0 0.0
    %1384 = vmatpush2.msra.mxu0 0.0
    %1385 = vmatprep.mubr.f32.mxu0 0.0
    %1386 = vmatmul.mubr.f32.gmra.mxu0 %v284
    %v1387 = vpop.f32.mrf.mxu0
    %v1388 = vadd.f32 0.0, %v1387
    %v1389 = vpop.f32.mrf.mxu0
    %1390 = vdwg.mxu0
    %v1391 = vadd.f32 %v1320, %v1388
    %v1392 = vxor.u32 %v1391, 2147483648
    %v1393 = vmul.f32 %v1392, 1.442695
    %v1394 = vpow.pop %v1393
    %v1395 = vadd.f32 %v1394, 1.0
    %v1396 = vrcp.pop %v1395
    %v1397 = vmul.f32 1.0, %v1396
    %v1398 = vtanh.pop %v1391
    %v1399 = vmul.f32 %v1397, 0.0
    %1401 = vrot.lane.b32.xlu0 %v1398, 64
    %v1402 = vpop.permute.xlu0 %1401
    %v1404 = vmul.f32 %v1397, %v1402
    %1406 = vrot.lane.b32.xlu0 %v1404, 32
    %v1407 = vpop.permute.xlu0 %1406
    %v1409 = vadd.f32 %v1399, %v1407
    %v1410 = vtanh.pop %v1409
    %1412 = vrot.lane.b32.xlu0 %v1410, 64
    %v1413 = vpop.permute.xlu0 %1412
    %v1415 = vmul.f32 %v1397, %v1413
    %1417 = vrot.lane.b32.xlu0 %v1415, 32
    %v1418 = vpop.permute.xlu0 %1417
    %1420 = vst.msk [vmem:[#allocation3] sm:$0x3] %vm385, %v1418
    %v1421 = vld [vmem:[%s387] sm:$0x3]
    %v1422 = vsel %vm282, %v1418, 0
    %1424 = vmatprep.subr.mxu0 0.0
    %1425 = vmatpush1.msra.mxu0 0.0
    %1426 = vmatprep.subr.mxu0 0.0
    %1427 = vmatpush1.msra.mxu0 0.0
    %1428 = vmatprep.subr.mxu0 0.0
    %1429 = vmatpush1.msra.mxu0 0.0
    %1430 = vmatprep.subr.mxu0 0.0
    %1431 = vmatpush1.msra.mxu0 0.0
    %1432 = vmatprep.subr.mxu0 0.0
    %1433 = vmatpush1.msra.mxu0 0.0
    %1434 = vmatprep.subr.mxu0 0.0
    %1435 = vmatpush1.msra.mxu0 0.0
    %1436 = vmatprep.subr.mxu0 0.0
    %1437 = vmatpush1.msra.mxu0 0.0
    %1438 = vmatprep.subr.mxu0 0.0
    %1439 = vmatpush1.msra.mxu0 0.0
    %1440 = vmatprep.subr.mxu0 0.0
    %1441 = vmatpush1.msra.mxu0 0.0
    %1442 = vmatprep.subr.mxu0 0.0
    %1443 = vmatpush1.msra.mxu0 0.0
    %1444 = vmatprep.subr.mxu0 0.0
    %1445 = vmatpush1.msra.mxu0 0.0
    %1446 = vmatprep.subr.mxu0 0.0
    %1447 = vmatpush1.msra.mxu0 0.0
    %1448 = vmatprep.subr.mxu0 0.0
    %1449 = vmatpush1.msra.mxu0 %v1319
    %1450 = vmatprep.subr.mxu0 0.0
    %1451 = vmatpush1.msra.mxu0 %v1318
    %1452 = vmatprep.subr.mxu0 0.0
    %1453 = vmatpush1.msra.mxu0 %v1317
    %1454 = vmatprep.subr.mxu0 0.0
    %1455 = vmatpush1.msra.mxu0 %v1316
    %1456 = vmatprep.subr.mxu0 0.0
    %1457 = vmatpush2.msra.mxu0 0.0
    %1458 = vmatprep.subr.mxu0 0.0
    %1459 = vmatpush2.msra.mxu0 0.0
    %1460 = vmatprep.subr.mxu0 0.0
    %1461 = vmatpush2.msra.mxu0 0.0
    %1462 = vmatprep.subr.mxu0 0.0
    %1463 = vmatpush2.msra.mxu0 0.0
    %1464 = vmatprep.subr.mxu0 0.0
    %1465 = vmatpush2.msra.mxu0 0.0
    %1466 = vmatprep.subr.mxu0 0.0
    %1467 = vmatpush2.msra.mxu0 0.0
    %1468 = vmatprep.subr.mxu0 0.0
    %1469 = vmatpush2.msra.mxu0 0.0
    %1470 = vmatprep.subr.mxu0 0.0
    %1471 = vmatpush2.msra.mxu0 0.0
    %1472 = vmatprep.subr.mxu0 0.0
    %1473 = vmatpush2.msra.mxu0 0.0
    %1474 = vmatprep.subr.mxu0 0.0
    %1475 = vmatpush2.msra.mxu0 0.0
    %1476 = vmatprep.subr.mxu0 0.0
    %1477 = vmatpush2.msra.mxu0 0.0
    %1478 = vmatprep.subr.mxu0 0.0
    %1479 = vmatpush2.msra.mxu0 0.0
    %1480 = vmatprep.subr.mxu0 0.0
    %1481 = vmatpush2.msra.mxu0 0.0
    %1482 = vmatprep.subr.mxu0 0.0
    %1483 = vmatpush2.msra.mxu0 0.0
    %1484 = vmatprep.subr.mxu0 0.0
    %1485 = vmatpush2.msra.mxu0 0.0
    %1486 = vmatprep.subr.mxu0 0.0
    %1487 = vmatpush2.msra.mxu0 0.0
    %1488 = vmatprep.mubr.f32.mxu0 0.0
    %1489 = vmatmul.mubr.f32.gmra.mxu0 %v1422
    %v1490 = vpop.f32.mrf.mxu0
    %v1491 = vadd.f32 0.0, %v1490
    %v1492 = vpop.f32.mrf.mxu0
    %1493 = vdwg.mxu0
    %v1494 = vadd.f32 %v1421, %v1491
    %v1495 = vxor.u32 %v1494, 2147483648
    %v1496 = vmul.f32 %v1495, 1.442695
    %v1497 = vpow.pop %v1496
    %v1498 = vadd.f32 %v1497, 1.0
    %v1499 = vrcp.pop %v1498
    %v1500 = vmul.f32 1.0, %v1499
    %v1501 = vtanh.pop %v1494
    %v1502 = vmul.f32 %v1500, %v1409
    %1504 = vrot.lane.b32.xlu0 %v1501, 64
    %v1505 = vpop.permute.xlu0 %1504
    %v1507 = vmul.f32 %v1500, %v1505
    %1509 = vrot.lane.b32.xlu0 %v1507, 32
    %v1510 = vpop.permute.xlu0 %1509
    %v1512 = vadd.f32 %v1502, %v1510
    %v1513 = vtanh.pop %v1512
    %1515 = vrot.lane.b32.xlu0 %v1513, 64
    %v1516 = vpop.permute.xlu0 %1515
    %v1518 = vmul.f32 %v1500, %v1516
    %1520 = vrot.lane.b32.xlu0 %v1518, 32
    %v1521 = vpop.permute.xlu0 %1520
    %1523 = vst.msk [vmem:[%s490] sm:$0x3] %vm385, %v1521
    %v1524 = vld [vmem:[%s492] sm:$0x3]
    %v1525 = vsel %vm282, %v1521, 0
    %1527 = vmatprep.subr.mxu0 0.0
    %1528 = vmatpush1.msra.mxu0 0.0
    %1529 = vmatprep.subr.mxu0 0.0
    %1530 = vmatpush1.msra.mxu0 0.0
    %1531 = vmatprep.subr.mxu0 0.0
    %1532 = vmatpush1.msra.mxu0 0.0
    %1533 = vmatprep.subr.mxu0 0.0
    %1534 = vmatpush1.msra.mxu0 0.0
    %1535 = vmatprep.subr.mxu0 0.0
    %1536 = vmatpush1.msra.mxu0 0.0
    %1537 = vmatprep.subr.mxu0 0.0
    %1538 = vmatpush1.msra.mxu0 0.0
    %1539 = vmatprep.subr.mxu0 0.0
    %1540 = vmatpush1.msra.mxu0 0.0
    %1541 = vmatprep.subr.mxu0 0.0
    %1542 = vmatpush1.msra.mxu0 0.0
    %1543 = vmatprep.subr.mxu0 0.0
    %1544 = vmatpush1.msra.mxu0 0.0
    %1545 = vmatprep.subr.mxu0 0.0
    %1546 = vmatpush1.msra.mxu0 0.0
    %1547 = vmatprep.subr.mxu0 0.0
    %1548 = vmatpush1.msra.mxu0 0.0
    %1549 = vmatprep.subr.mxu0 0.0
    %1550 = vmatpush1.msra.mxu0 0.0
    %1551 = vmatprep.subr.mxu0 0.0
    %1552 = vmatpush1.msra.mxu0 %v1319
    %1553 = vmatprep.subr.mxu0 0.0
    %1554 = vmatpush1.msra.mxu0 %v1318
    %1555 = vmatprep.subr.mxu0 0.0
    %1556 = vmatpush1.msra.mxu0 %v1317
    %1557 = vmatprep.subr.mxu0 0.0
    %1558 = vmatpush1.msra.mxu0 %v1316
    %1559 = vmatprep.subr.mxu0 0.0
    %1560 = vmatpush2.msra.mxu0 0.0
    %1561 = vmatprep.subr.mxu0 0.0
    %1562 = vmatpush2.msra.mxu0 0.0
    %1563 = vmatprep.subr.mxu0 0.0
    %1564 = vmatpush2.msra.mxu0 0.0
    %1565 = vmatprep.subr.mxu0 0.0
    %1566 = vmatpush2.msra.mxu0 0.0
    %1567 = vmatprep.subr.mxu0 0.0
    %1568 = vmatpush2.msra.mxu0 0.0
    %1569 = vmatprep.subr.mxu0 0.0
    %1570 = vmatpush2.msra.mxu0 0.0
    %1571 = vmatprep.subr.mxu0 0.0
    %1572 = vmatpush2.msra.mxu0 0.0
    %1573 = vmatprep.subr.mxu0 0.0
    %1574 = vmatpush2.msra.mxu0 0.0
    %1575 = vmatprep.subr.mxu0 0.0
    %1576 = vmatpush2.msra.mxu0 0.0
    %1577 = vmatprep.subr.mxu0 0.0
    %1578 = vmatpush2.msra.mxu0 0.0
    %1579 = vmatprep.subr.mxu0 0.0
    %1580 = vmatpush2.msra.mxu0 0.0
    %1581 = vmatprep.subr.mxu0 0.0
    %1582 = vmatpush2.msra.mxu0 0.0
    %1583 = vmatprep.subr.mxu0 0.0
    %1584 = vmatpush2.msra.mxu0 0.0
    %1585 = vmatprep.subr.mxu0 0.0
    %1586 = vmatpush2.msra.mxu0 0.0
    %1587 = vmatprep.subr.mxu0 0.0
    %1588 = vmatpush2.msra.mxu0 0.0
    %1589 = vmatprep.subr.mxu0 0.0
    %1590 = vmatpush2.msra.mxu0 0.0
    %1591 = vmatprep.mubr.f32.mxu0 0.0
    %1592 = vmatmul.mubr.f32.gmra.mxu0 %v1525
    %v1593 = vpop.f32.mrf.mxu0
    %v1594 = vadd.f32 0.0, %v1593
    %v1595 = vpop.f32.mrf.mxu0
    %1596 = vdwg.mxu0
    %v1597 = vadd.f32 %v1524, %v1594
    %v1598 = vxor.u32 %v1597, 2147483648
    %v1599 = vmul.f32 %v1598, 1.442695
    %v1600 = vpow.pop %v1599
    %v1601 = vadd.f32 %v1600, 1.0
    %v1602 = vrcp.pop %v1601
    %v1603 = vmul.f32 1.0, %v1602
    %v1604 = vtanh.pop %v1597
    %v1605 = vmul.f32 %v1603, %v1512
    %1607 = vrot.lane.b32.xlu0 %v1604, 64
    %v1608 = vpop.permute.xlu0 %1607
    %v1610 = vmul.f32 %v1603, %v1608
    %1612 = vrot.lane.b32.xlu0 %v1610, 32
    %v1613 = vpop.permute.xlu0 %1612
    %v1615 = vadd.f32 %v1605, %v1613
    %v1616 = vtanh.pop %v1615
    %1618 = vrot.lane.b32.xlu0 %v1616, 64
    %v1619 = vpop.permute.xlu0 %1618
    %v1621 = vmul.f32 %v1603, %v1619
    %1623 = vrot.lane.b32.xlu0 %v1621, 32
    %v1624 = vpop.permute.xlu0 %1623
    %1626 = vst.msk [vmem:[%s595] sm:$0x3] %vm385, %v1624
    %v1627 = vld [vmem:[%s597] sm:$0x3]
    %v1628 = vsel %vm282, %v1624, 0
    %1630 = vmatprep.subr.mxu0 0.0
    %1631 = vmatpush1.msra.mxu0 0.0
    %1632 = vmatprep.subr.mxu0 0.0
    %1633 = vmatpush1.msra.mxu0 0.0
    %1634 = vmatprep.subr.mxu0 0.0
    %1635 = vmatpush1.msra.mxu0 0.0
    %1636 = vmatprep.subr.mxu0 0.0
    %1637 = vmatpush1.msra.mxu0 0.0
    %1638 = vmatprep.subr.mxu0 0.0
    %1639 = vmatpush1.msra.mxu0 0.0
    %1640 = vmatprep.subr.mxu0 0.0
    %1641 = vmatpush1.msra.mxu0 0.0
    %1642 = vmatprep.subr.mxu0 0.0
    %1643 = vmatpush1.msra.mxu0 0.0
    %1644 = vmatprep.subr.mxu0 0.0
    %1645 = vmatpush1.msra.mxu0 0.0
    %1646 = vmatprep.subr.mxu0 0.0
    %1647 = vmatpush1.msra.mxu0 0.0
    %1648 = vmatprep.subr.mxu0 0.0
    %1649 = vmatpush1.msra.mxu0 0.0
    %1650 = vmatprep.subr.mxu0 0.0
    %1651 = vmatpush1.msra.mxu0 0.0
    %1652 = vmatprep.subr.mxu0 0.0
    %1653 = vmatpush1.msra.mxu0 0.0
    %1654 = vmatprep.subr.mxu0 0.0
    %1655 = vmatpush1.msra.mxu0 %v1319
    %1656 = vmatprep.subr.mxu0 0.0
    %1657 = vmatpush1.msra.mxu0 %v1318
    %1658 = vmatprep.subr.mxu0 0.0
    %1659 = vmatpush1.msra.mxu0 %v1317
    %1660 = vmatprep.subr.mxu0 0.0
    %1661 = vmatpush1.msra.mxu0 %v1316
    %1662 = vmatprep.subr.mxu0 0.0
    %1663 = vmatpush2.msra.mxu0 0.0
    %1664 = vmatprep.subr.mxu0 0.0
    %1665 = vmatpush2.msra.mxu0 0.0
    %1666 = vmatprep.subr.mxu0 0.0
    %1667 = vmatpush2.msra.mxu0 0.0
    %1668 = vmatprep.subr.mxu0 0.0
    %1669 = vmatpush2.msra.mxu0 0.0
    %1670 = vmatprep.subr.mxu0 0.0
    %1671 = vmatpush2.msra.mxu0 0.0
    %1672 = vmatprep.subr.mxu0 0.0
    %1673 = vmatpush2.msra.mxu0 0.0
    %1674 = vmatprep.subr.mxu0 0.0
    %1675 = vmatpush2.msra.mxu0 0.0
    %1676 = vmatprep.subr.mxu0 0.0
    %1677 = vmatpush2.msra.mxu0 0.0
    %1678 = vmatprep.subr.mxu0 0.0
    %1679 = vmatpush2.msra.mxu0 0.0
    %1680 = vmatprep.subr.mxu0 0.0
    %1681 = vmatpush2.msra.mxu0 0.0
    %1682 = vmatprep.subr.mxu0 0.0
    %1683 = vmatpush2.msra.mxu0 0.0
    %1684 = vmatprep.subr.mxu0 0.0
    %1685 = vmatpush2.msra.mxu0 0.0
    %1686 = vmatprep.subr.mxu0 0.0
    %1687 = vmatpush2.msra.mxu0 0.0
    %1688 = vmatprep.subr.mxu0 0.0
    %1689 = vmatpush2.msra.mxu0 0.0
    %1690 = vmatprep.subr.mxu0 0.0
    %1691 = vmatpush2.msra.mxu0 0.0
    %1692 = vmatprep.subr.mxu0 0.0
    %1693 = vmatpush2.msra.mxu0 0.0
    %1694 = vmatprep.mubr.f32.mxu0 0.0
    %1695 = vmatmul.mubr.f32.gmra.mxu0 %v1628
    %v1696 = vpop.f32.mrf.mxu0
    %v1697 = vadd.f32 0.0, %v1696
    %v1698 = vpop.f32.mrf.mxu0
    %1699 = vdwg.mxu0
    %v1700 = vadd.f32 %v1627, %v1697
    %v1701 = vxor.u32 %v1700, 2147483648
    %v1702 = vmul.f32 %v1701, 1.442695
    %v1703 = vpow.pop %v1702
    %v1704 = vadd.f32 %v1703, 1.0
    %v1705 = vrcp.pop %v1704
    %v1706 = vmul.f32 1.0, %v1705
    %v1707 = vtanh.pop %v1700
    %v1708 = vmul.f32 %v1706, %v1615
    %1710 = vrot.lane.b32.xlu0 %v1707, 64
    %v1711 = vpop.permute.xlu0 %1710
    %v1713 = vmul.f32 %v1706, %v1711
    %1715 = vrot.lane.b32.xlu0 %v1713, 32
    %v1716 = vpop.permute.xlu0 %1715
    %v1718 = vadd.f32 %v1708, %v1716
    %v1719 = vtanh.pop %v1718
    %1721 = vrot.lane.b32.xlu0 %v1719, 64
    %v1722 = vpop.permute.xlu0 %1721
    %v1724 = vmul.f32 %v1706, %v1722
    %1726 = vrot.lane.b32.xlu0 %v1724, 32
    %v1727 = vpop.permute.xlu0 %1726
    %1729 = vst.msk [vmem:[%s700] sm:$0x3] %vm385, %v1727
    %v1730 = vld [vmem:[%s702] sm:$0x3]
    %v1731 = vsel %vm282, %v1727, 0
    %1733 = vmatprep.subr.mxu0 0.0
    %1734 = vmatpush1.msra.mxu0 0.0
    %1735 = vmatprep.subr.mxu0 0.0
    %1736 = vmatpush1.msra.mxu0 0.0
    %1737 = vmatprep.subr.mxu0 0.0
    %1738 = vmatpush1.msra.mxu0 0.0
    %1739 = vmatprep.subr.mxu0 0.0
    %1740 = vmatpush1.msra.mxu0 0.0
    %1741 = vmatprep.subr.mxu0 0.0
    %1742 = vmatpush1.msra.mxu0 0.0
    %1743 = vmatprep.subr.mxu0 0.0
    %1744 = vmatpush1.msra.mxu0 0.0
    %1745 = vmatprep.subr.mxu0 0.0
    %1746 = vmatpush1.msra.mxu0 0.0
    %1747 = vmatprep.subr.mxu0 0.0
    %1748 = vmatpush1.msra.mxu0 0.0
    %1749 = vmatprep.subr.mxu0 0.0
    %1750 = vmatpush1.msra.mxu0 0.0
    %1751 = vmatprep.subr.mxu0 0.0
    %1752 = vmatpush1.msra.mxu0 0.0
    %1753 = vmatprep.subr.mxu0 0.0
    %1754 = vmatpush1.msra.mxu0 0.0
    %1755 = vmatprep.subr.mxu0 0.0
    %1756 = vmatpush1.msra.mxu0 0.0
    %1757 = vmatprep.subr.mxu0 0.0
    %1758 = vmatpush1.msra.mxu0 %v1319
    %1759 = vmatprep.subr.mxu0 0.0
    %1760 = vmatpush1.msra.mxu0 %v1318
    %1761 = vmatprep.subr.mxu0 0.0
    %1762 = vmatpush1.msra.mxu0 %v1317
    %1763 = vmatprep.subr.mxu0 0.0
    %1764 = vmatpush1.msra.mxu0 %v1316
    %1765 = vmatprep.subr.mxu0 0.0
    %1766 = vmatpush2.msra.mxu0 0.0
    %1767 = vmatprep.subr.mxu0 0.0
    %1768 = vmatpush2.msra.mxu0 0.0
    %1769 = vmatprep.subr.mxu0 0.0
    %1770 = vmatpush2.msra.mxu0 0.0
    %1771 = vmatprep.subr.mxu0 0.0
    %1772 = vmatpush2.msra.mxu0 0.0
    %1773 = vmatprep.subr.mxu0 0.0
    %1774 = vmatpush2.msra.mxu0 0.0
    %1775 = vmatprep.subr.mxu0 0.0
    %1776 = vmatpush2.msra.mxu0 0.0
    %1777 = vmatprep.subr.mxu0 0.0
    %1778 = vmatpush2.msra.mxu0 0.0
    %1779 = vmatprep.subr.mxu0 0.0
    %1780 = vmatpush2.msra.mxu0 0.0
    %1781 = vmatprep.subr.mxu0 0.0
    %1782 = vmatpush2.msra.mxu0 0.0
    %1783 = vmatprep.subr.mxu0 0.0
    %1784 = vmatpush2.msra.mxu0 0.0
    %1785 = vmatprep.subr.mxu0 0.0
    %1786 = vmatpush2.msra.mxu0 0.0
    %1787 = vmatprep.subr.mxu0 0.0
    %1788 = vmatpush2.msra.mxu0 0.0
    %1789 = vmatprep.subr.mxu0 0.0
    %1790 = vmatpush2.msra.mxu0 0.0
    %1791 = vmatprep.subr.mxu0 0.0
    %1792 = vmatpush2.msra.mxu0 0.0
    %1793 = vmatprep.subr.mxu0 0.0
    %1794 = vmatpush2.msra.mxu0 0.0
    %1795 = vmatprep.subr.mxu0 0.0
    %1796 = vmatpush2.msra.mxu0 0.0
    %1797 = vmatprep.mubr.f32.mxu0 0.0
    %1798 = vmatmul.mubr.f32.gmra.mxu0 %v1731
    %v1799 = vpop.f32.mrf.mxu0
    %v1800 = vadd.f32 0.0, %v1799
    %v1801 = vpop.f32.mrf.mxu0
    %1802 = vdwg.mxu0
    %v1803 = vadd.f32 %v1730, %v1800
    %v1804 = vxor.u32 %v1803, 2147483648
    %v1805 = vmul.f32 %v1804, 1.442695
    %v1806 = vpow.pop %v1805
    %v1807 = vadd.f32 %v1806, 1.0
    %v1808 = vrcp.pop %v1807
    %v1809 = vmul.f32 1.0, %v1808
    %v1810 = vtanh.pop %v1803
    %v1811 = vmul.f32 %v1809, %v1718
    %1813 = vrot.lane.b32.xlu0 %v1810, 64
    %v1814 = vpop.permute.xlu0 %1813
    %v1816 = vmul.f32 %v1809, %v1814
    %1818 = vrot.lane.b32.xlu0 %v1816, 32
    %v1819 = vpop.permute.xlu0 %1818
    %v1821 = vadd.f32 %v1811, %v1819
    %v1822 = vtanh.pop %v1821
    %1824 = vrot.lane.b32.xlu0 %v1822, 64
    %v1825 = vpop.permute.xlu0 %1824
    %v1827 = vmul.f32 %v1809, %v1825
    %1829 = vrot.lane.b32.xlu0 %v1827, 32
    %v1830 = vpop.permute.xlu0 %1829
    %1832 = vst.msk [vmem:[%s805] sm:$0x3] %vm385, %v1830
    %v1833 = vld [vmem:[%s807] sm:$0x3]
    %v1834 = vsel %vm282, %v1830, 0
    %1836 = vmatprep.subr.mxu0 0.0
    %1837 = vmatpush1.msra.mxu0 0.0
    %1838 = vmatprep.subr.mxu0 0.0
    %1839 = vmatpush1.msra.mxu0 0.0
    %1840 = vmatprep.subr.mxu0 0.0
    %1841 = vmatpush1.msra.mxu0 0.0
    %1842 = vmatprep.subr.mxu0 0.0
    %1843 = vmatpush1.msra.mxu0 0.0
    %1844 = vmatprep.subr.mxu0 0.0
    %1845 = vmatpush1.msra.mxu0 0.0
    %1846 = vmatprep.subr.mxu0 0.0
    %1847 = vmatpush1.msra.mxu0 0.0
    %1848 = vmatprep.subr.mxu0 0.0
    %1849 = vmatpush1.msra.mxu0 0.0
    %1850 = vmatprep.subr.mxu0 0.0
    %1851 = vmatpush1.msra.mxu0 0.0
    %1852 = vmatprep.subr.mxu0 0.0
    %1853 = vmatpush1.msra.mxu0 0.0
    %1854 = vmatprep.subr.mxu0 0.0
    %1855 = vmatpush1.msra.mxu0 0.0
    %1856 = vmatprep.subr.mxu0 0.0
    %1857 = vmatpush1.msra.mxu0 0.0
    %1858 = vmatprep.subr.mxu0 0.0
    %1859 = vmatpush1.msra.mxu0 0.0
    %1860 = vmatprep.subr.mxu0 0.0
    %1861 = vmatpush1.msra.mxu0 %v1319
    %1862 = vmatprep.subr.mxu0 0.0
    %1863 = vmatpush1.msra.mxu0 %v1318
    %1864 = vmatprep.subr.mxu0 0.0
    %1865 = vmatpush1.msra.mxu0 %v1317
    %1866 = vmatprep.subr.mxu0 0.0
    %1867 = vmatpush1.msra.mxu0 %v1316
    %1868 = vmatprep.subr.mxu0 0.0
    %1869 = vmatpush2.msra.mxu0 0.0
    %1870 = vmatprep.subr.mxu0 0.0
    %1871 = vmatpush2.msra.mxu0 0.0
    %1872 = vmatprep.subr.mxu0 0.0
    %1873 = vmatpush2.msra.mxu0 0.0
    %1874 = vmatprep.subr.mxu0 0.0
    %1875 = vmatpush2.msra.mxu0 0.0
    %1876 = vmatprep.subr.mxu0 0.0
    %1877 = vmatpush2.msra.mxu0 0.0
    %1878 = vmatprep.subr.mxu0 0.0
    %1879 = vmatpush2.msra.mxu0 0.0
    %1880 = vmatprep.subr.mxu0 0.0
    %1881 = vmatpush2.msra.mxu0 0.0
    %1882 = vmatprep.subr.mxu0 0.0
    %1883 = vmatpush2.msra.mxu0 0.0
    %1884 = vmatprep.subr.mxu0 0.0
    %1885 = vmatpush2.msra.mxu0 0.0
    %1886 = vmatprep.subr.mxu0 0.0
    %1887 = vmatpush2.msra.mxu0 0.0
    %1888 = vmatprep.subr.mxu0 0.0
    %1889 = vmatpush2.msra.mxu0 0.0
    %1890 = vmatprep.subr.mxu0 0.0
    %1891 = vmatpush2.msra.mxu0 0.0
    %1892 = vmatprep.subr.mxu0 0.0
    %1893 = vmatpush2.msra.mxu0 0.0
    %1894 = vmatprep.subr.mxu0 0.0
    %1895 = vmatpush2.msra.mxu0 0.0
    %1896 = vmatprep.subr.mxu0 0.0
    %1897 = vmatpush2.msra.mxu0 0.0
    %1898 = vmatprep.subr.mxu0 0.0
    %1899 = vmatpush2.msra.mxu0 0.0
    %1900 = vmatprep.mubr.f32.mxu0 0.0
    %1901 = vmatmul.mubr.f32.gmra.mxu0 %v1834
    %v1902 = vpop.f32.mrf.mxu0
    %v1903 = vadd.f32 0.0, %v1902
    %v1904 = vpop.f32.mrf.mxu0
    %1905 = vdwg.mxu0
    %v1906 = vadd.f32 %v1833, %v1903
    %v1907 = vxor.u32 %v1906, 2147483648
    %v1908 = vmul.f32 %v1907, 1.442695
    %v1909 = vpow.pop %v1908
    %v1910 = vadd.f32 %v1909, 1.0
    %v1911 = vrcp.pop %v1910
    %v1912 = vmul.f32 1.0, %v1911
    %v1913 = vtanh.pop %v1906
    %v1914 = vmul.f32 %v1912, %v1821
    %1916 = vrot.lane.b32.xlu0 %v1913, 64
    %v1917 = vpop.permute.xlu0 %1916
    %v1919 = vmul.f32 %v1912, %v1917
    %1921 = vrot.lane.b32.xlu0 %v1919, 32
    %v1922 = vpop.permute.xlu0 %1921
    %v1924 = vadd.f32 %v1914, %v1922
    %v1925 = vtanh.pop %v1924
    %1927 = vrot.lane.b32.xlu0 %v1925, 64
    %v1928 = vpop.permute.xlu0 %1927
    %v1930 = vmul.f32 %v1912, %v1928
    %1932 = vrot.lane.b32.xlu0 %v1930, 32
    %v1933 = vpop.permute.xlu0 %1932
    %1935 = vst.msk [vmem:[%s910] sm:$0x3] %vm385, %v1933
    %v1936 = vld [vmem:[%s912] sm:$0x3]
    %v1937 = vsel %vm282, %v1933, 0
    %1939 = vmatprep.subr.mxu0 0.0
    %1940 = vmatpush1.msra.mxu0 0.0
    %1941 = vmatprep.subr.mxu0 0.0
    %1942 = vmatpush1.msra.mxu0 0.0
    %1943 = vmatprep.subr.mxu0 0.0
    %1944 = vmatpush1.msra.mxu0 0.0
    %1945 = vmatprep.subr.mxu0 0.0
    %1946 = vmatpush1.msra.mxu0 0.0
    %1947 = vmatprep.subr.mxu0 0.0
    %1948 = vmatpush1.msra.mxu0 0.0
    %1949 = vmatprep.subr.mxu0 0.0
    %1950 = vmatpush1.msra.mxu0 0.0
    %1951 = vmatprep.subr.mxu0 0.0
    %1952 = vmatpush1.msra.mxu0 0.0
    %1953 = vmatprep.subr.mxu0 0.0
    %1954 = vmatpush1.msra.mxu0 0.0
    %1955 = vmatprep.subr.mxu0 0.0
    %1956 = vmatpush1.msra.mxu0 0.0
    %1957 = vmatprep.subr.mxu0 0.0
    %1958 = vmatpush1.msra.mxu0 0.0
    %1959 = vmatprep.subr.mxu0 0.0
    %1960 = vmatpush1.msra.mxu0 0.0
    %1961 = vmatprep.subr.mxu0 0.0
    %1962 = vmatpush1.msra.mxu0 0.0
    %1963 = vmatprep.subr.mxu0 0.0
    %1964 = vmatpush1.msra.mxu0 %v1319
    %1965 = vmatprep.subr.mxu0 0.0
    %1966 = vmatpush1.msra.mxu0 %v1318
    %1967 = vmatprep.subr.mxu0 0.0
    %1968 = vmatpush1.msra.mxu0 %v1317
    %1969 = vmatprep.subr.mxu0 0.0
    %1970 = vmatpush1.msra.mxu0 %v1316
    %1971 = vmatprep.subr.mxu0 0.0
    %1972 = vmatpush2.msra.mxu0 0.0
    %1973 = vmatprep.subr.mxu0 0.0
    %1974 = vmatpush2.msra.mxu0 0.0
    %1975 = vmatprep.subr.mxu0 0.0
    %1976 = vmatpush2.msra.mxu0 0.0
    %1977 = vmatprep.subr.mxu0 0.0
    %1978 = vmatpush2.msra.mxu0 0.0
    %1979 = vmatprep.subr.mxu0 0.0
    %1980 = vmatpush2.msra.mxu0 0.0
    %1981 = vmatprep.subr.mxu0 0.0
    %1982 = vmatpush2.msra.mxu0 0.0
    %1983 = vmatprep.subr.mxu0 0.0
    %1984 = vmatpush2.msra.mxu0 0.0
    %1985 = vmatprep.subr.mxu0 0.0
    %1986 = vmatpush2.msra.mxu0 0.0
    %1987 = vmatprep.subr.mxu0 0.0
    %1988 = vmatpush2.msra.mxu0 0.0
    %1989 = vmatprep.subr.mxu0 0.0
    %1990 = vmatpush2.msra.mxu0 0.0
    %1991 = vmatprep.subr.mxu0 0.0
    %1992 = vmatpush2.msra.mxu0 0.0
    %1993 = vmatprep.subr.mxu0 0.0
    %1994 = vmatpush2.msra.mxu0 0.0
    %1995 = vmatprep.subr.mxu0 0.0
    %1996 = vmatpush2.msra.mxu0 0.0
    %1997 = vmatprep.subr.mxu0 0.0
    %1998 = vmatpush2.msra.mxu0 0.0
    %1999 = vmatprep.subr.mxu0 0.0
    %2000 = vmatpush2.msra.mxu0 0.0
    %2001 = vmatprep.subr.mxu0 0.0
    %2002 = vmatpush2.msra.mxu0 0.0
    %2003 = vmatprep.mubr.f32.mxu0 0.0
    %2004 = vmatmul.mubr.f32.gmra.mxu0 %v1937
    %v2005 = vpop.f32.mrf.mxu0
    %v2006 = vadd.f32 0.0, %v2005
    %v2007 = vpop.f32.mrf.mxu0
    %2008 = vdwg.mxu0
    %v2009 = vadd.f32 %v1936, %v2006
    %v2010 = vxor.u32 %v2009, 2147483648
    %v2011 = vmul.f32 %v2010, 1.442695
    %v2012 = vpow.pop %v2011
    %v2013 = vadd.f32 %v2012, 1.0
    %v2014 = vrcp.pop %v2013
    %v2015 = vmul.f32 1.0, %v2014
    %v2016 = vtanh.pop %v2009
    %v2017 = vmul.f32 %v2015, %v1924
    %2019 = vrot.lane.b32.xlu0 %v2016, 64
    %v2020 = vpop.permute.xlu0 %2019
    %v2022 = vmul.f32 %v2015, %v2020
    %2024 = vrot.lane.b32.xlu0 %v2022, 32
    %v2025 = vpop.permute.xlu0 %2024
    %v2027 = vadd.f32 %v2017, %v2025
    %v2028 = vtanh.pop %v2027
    %2030 = vrot.lane.b32.xlu0 %v2028, 64
    %v2031 = vpop.permute.xlu0 %2030
    %v2033 = vmul.f32 %v2015, %v2031
    %2035 = vrot.lane.b32.xlu0 %v2033, 32
    %v2036 = vpop.permute.xlu0 %2035
    %2038 = vst.msk [vmem:[%s1015] sm:$0x3] %vm385, %v2036
    %v2039 = vld [vmem:[%s1017] sm:$0x3]
    %v2040 = vsel %vm282, %v2036, 0
    %2042 = vmatprep.subr.mxu0 0.0
    %2043 = vmatpush1.msra.mxu0 0.0
    %2044 = vmatprep.subr.mxu0 0.0
    %2045 = vmatpush1.msra.mxu0 0.0
    %2046 = vmatprep.subr.mxu0 0.0
    %2047 = vmatpush1.msra.mxu0 0.0
    %2048 = vmatprep.subr.mxu0 0.0
    %2049 = vmatpush1.msra.mxu0 0.0
    %2050 = vmatprep.subr.mxu0 0.0
    %2051 = vmatpush1.msra.mxu0 0.0
    %2052 = vmatprep.subr.mxu0 0.0
    %2053 = vmatpush1.msra.mxu0 0.0
    %2054 = vmatprep.subr.mxu0 0.0
    %2055 = vmatpush1.msra.mxu0 0.0
    %2056 = vmatprep.subr.mxu0 0.0
    %2057 = vmatpush1.msra.mxu0 0.0
    %2058 = vmatprep.subr.mxu0 0.0
    %2059 = vmatpush1.msra.mxu0 0.0
    %2060 = vmatprep.subr.mxu0 0.0
    %2061 = vmatpush1.msra.mxu0 0.0
    %2062 = vmatprep.subr.mxu0 0.0
    %2063 = vmatpush1.msra.mxu0 0.0
    %2064 = vmatprep.subr.mxu0 0.0
    %2065 = vmatpush1.msra.mxu0 0.0
    %2066 = vmatprep.subr.mxu0 0.0
    %2067 = vmatpush1.msra.mxu0 %v1319
    %2068 = vmatprep.subr.mxu0 0.0
    %2069 = vmatpush1.msra.mxu0 %v1318
    %2070 = vmatprep.subr.mxu0 0.0
    %2071 = vmatpush1.msra.mxu0 %v1317
    %2072 = vmatprep.subr.mxu0 0.0
    %2073 = vmatpush1.msra.mxu0 %v1316
    %2074 = vmatprep.subr.mxu0 0.0
    %2075 = vmatpush2.msra.mxu0 0.0
    %2076 = vmatprep.subr.mxu0 0.0
    %2077 = vmatpush2.msra.mxu0 0.0
    %2078 = vmatprep.subr.mxu0 0.0
    %2079 = vmatpush2.msra.mxu0 0.0
    %2080 = vmatprep.subr.mxu0 0.0
    %2081 = vmatpush2.msra.mxu0 0.0
    %2082 = vmatprep.subr.mxu0 0.0
    %2083 = vmatpush2.msra.mxu0 0.0
    %2084 = vmatprep.subr.mxu0 0.0
    %2085 = vmatpush2.msra.mxu0 0.0
    %2086 = vmatprep.subr.mxu0 0.0
    %2087 = vmatpush2.msra.mxu0 0.0
    %2088 = vmatprep.subr.mxu0 0.0
    %2089 = vmatpush2.msra.mxu0 0.0
    %2090 = vmatprep.subr.mxu0 0.0
    %2091 = vmatpush2.msra.mxu0 0.0
    %2092 = vmatprep.subr.mxu0 0.0
    %2093 = vmatpush2.msra.mxu0 0.0
    %2094 = vmatprep.subr.mxu0 0.0
    %2095 = vmatpush2.msra.mxu0 0.0
    %2096 = vmatprep.subr.mxu0 0.0
    %2097 = vmatpush2.msra.mxu0 0.0
    %2098 = vmatprep.subr.mxu0 0.0
    %2099 = vmatpush2.msra.mxu0 0.0
    %2100 = vmatprep.subr.mxu0 0.0
    %2101 = vmatpush2.msra.mxu0 0.0
    %2102 = vmatprep.subr.mxu0 0.0
    %2103 = vmatpush2.msra.mxu0 0.0
    %2104 = vmatprep.subr.mxu0 0.0
    %2105 = vmatpush2.msra.mxu0 0.0
    %2106 = vmatprep.mubr.f32.mxu0 0.0
    %2107 = vmatmul.mubr.f32.gmra.mxu0 %v2040
    %v2108 = vpop.f32.mrf.mxu0
    %v2109 = vadd.f32 0.0, %v2108
    %v2110 = vpop.f32.mrf.mxu0
    %2111 = vdwg.mxu0
    %v2112 = vadd.f32 %v2039, %v2109
    %v2113 = vxor.u32 %v2112, 2147483648
    %v2114 = vmul.f32 %v2113, 1.442695
    %v2115 = vpow.pop %v2114
    %v2116 = vadd.f32 %v2115, 1.0
    %v2117 = vrcp.pop %v2116
    %v2118 = vmul.f32 1.0, %v2117
    %v2119 = vtanh.pop %v2112
    %v2120 = vmul.f32 %v2118, %v2027
    %2122 = vrot.lane.b32.xlu0 %v2119, 64
    %v2123 = vpop.permute.xlu0 %2122
    %v2125 = vmul.f32 %v2118, %v2123
    %2127 = vrot.lane.b32.xlu0 %v2125, 32
    %v2128 = vpop.permute.xlu0 %2127
    %v2130 = vadd.f32 %v2120, %v2128
    %v2131 = vtanh.pop %v2130
    %2133 = vrot.lane.b32.xlu0 %v2131, 64
    %v2134 = vpop.permute.xlu0 %2133
    %v2136 = vmul.f32 %v2118, %v2134
    %2138 = vrot.lane.b32.xlu0 %v2136, 32
    %v2139 = vpop.permute.xlu0 %2138
    %2141 = vst.msk [vmem:[%s1120] sm:$0x3] %vm385, %v2139
    %v2142 = vld [vmem:[#allocation3] sm:$0x3]
    %v2143 = vld [vmem:[#allocation3 + $0x2] sm:$0x3]
    %v2144 = vld [vmem:[#allocation3 + $0x4] sm:$0x3]
    %v2145 = vld [vmem:[#allocation3 + $0x6] sm:$0x3]
    %v2146 = vld [vmem:[#allocation3 + $0x8] sm:$0x3]
    %v2147 = vld [vmem:[#allocation3 + $0xa] sm:$0x3]
    %v2148 = vld [vmem:[#allocation3 + $0xc] sm:$0x3]
    %v2149 = vld [vmem:[#allocation3 + $0xe] sm:$0x3]
    %s2150 = scalar_lea.vmem %s2, 32
    %v2151 = vld [vmem:[%s2150] sm:$0xff]
    %v2152 = vld [vmem:[%s2150 + $0x8] sm:$0xff]
    %v2153 = vld [vmem:[%s2150 + $0x10] sm:$0xff]
    %v2154 = vld [vmem:[%s2150 + $0x18] sm:$0xff]
    %s2155 = scalar_lea.vmem [#allocation9], 2
    %v2156 = vld [vmem:[%s2155] sm:$0x1]
    %v2158 = vlaneseq
    %v2159 = vshrl.u32 %v2158, 7
    %v2160 = vsub.s32 0, %v2159
    %v2161 = vrot.slane %v2156, %v2160
    %v2171 = vcombine.low %v2142, %v2143
    %v2172 = vcombine.low %v2144, %v2145
    %v2174 = vunpack.c.l.s4 1983009808
    %v2175 = vunpack.c.0.s8 %v2174
    %v2176 = vlaneseq
    %v2177 = vshrl.u32 %v2176, 7
    %v2178 = vsub.s32 %v2175, %v2177
    %v2179 = vrot.slane %v2171, %v2178
    %v2181 = vunpack.c.l.s4 1983009808
    %v2182 = vunpack.c.0.s8 %v2181
    %v2183 = vlaneseq
    %v2184 = vshrl.u32 %v2183, 7
    %v2185 = vsub.s32 %v2182, %v2184
    %v2186 = vrot.slane %v2172, %v2185
    %v2187 = vcombine.low %v2179, %v2186
    %v2188 = vcombine.low %v2146, %v2147
    %v2189 = vcombine.low %v2148, %v2149
    %v2191 = vunpack.c.l.s4 1983009808
    %v2192 = vunpack.c.0.s8 %v2191
    %v2193 = vlaneseq
    %v2194 = vshrl.u32 %v2193, 7
    %v2195 = vsub.s32 %v2192, %v2194
    %v2196 = vrot.slane %v2188, %v2195
    %v2198 = vunpack.c.l.s4 1983009808
    %v2199 = vunpack.c.0.s8 %v2198
    %v2200 = vlaneseq
    %v2201 = vshrl.u32 %v2200, 7
    %v2202 = vsub.s32 %v2199, %v2201
    %v2203 = vrot.slane %v2189, %v2202
    %v2204 = vcombine.low %v2196, %v2203
    %v2205 = vsel %vm282, %v2187, 0
    %v2207 = vsel %vm282, %v2204, 0
    %2209 = vmatprep.subr.mxu0 0.0
    %2210 = vmatpush1.msra.mxu0 0.0
    %2211 = vmatprep.subr.mxu0 0.0
    %2212 = vmatpush1.msra.mxu0 0.0
    %2213 = vmatprep.subr.mxu0 0.0
    %2214 = vmatpush1.msra.mxu0 0.0
    %2215 = vmatprep.subr.mxu0 0.0
    %2216 = vmatpush1.msra.mxu0 0.0
    %2217 = vmatprep.subr.mxu0 0.0
    %2218 = vmatpush1.msra.mxu0 0.0
    %2219 = vmatprep.subr.mxu0 0.0
    %2220 = vmatpush1.msra.mxu0 0.0
    %2221 = vmatprep.subr.mxu0 0.0
    %2222 = vmatpush1.msra.mxu0 0.0
    %2223 = vmatprep.subr.mxu0 0.0
    %2224 = vmatpush1.msra.mxu0 0.0
    %2225 = vmatprep.subr.mxu0 0.0
    %2226 = vmatpush1.msra.mxu0 0.0
    %2227 = vmatprep.subr.mxu0 0.0
    %2228 = vmatpush1.msra.mxu0 0.0
    %2229 = vmatprep.subr.mxu0 0.0
    %2230 = vmatpush1.msra.mxu0 0.0
    %2231 = vmatprep.subr.mxu0 0.0
    %2232 = vmatpush1.msra.mxu0 0.0
    %2233 = vmatprep.subr.mxu0 0.0
    %2234 = vmatpush1.msra.mxu0 %v2154
    %2235 = vmatprep.subr.mxu0 0.0
    %2236 = vmatpush1.msra.mxu0 %v2153
    %2237 = vmatprep.subr.mxu0 0.0
    %2238 = vmatpush1.msra.mxu0 %v2152
    %2239 = vmatprep.subr.mxu0 0.0
    %2240 = vmatpush1.msra.mxu0 %v2151
    %2241 = vmatprep.subr.mxu0 0.0
    %2242 = vmatpush2.msra.mxu0 0.0
    %2243 = vmatprep.subr.mxu0 0.0
    %2244 = vmatpush2.msra.mxu0 0.0
    %2245 = vmatprep.subr.mxu0 0.0
    %2246 = vmatpush2.msra.mxu0 0.0
    %2247 = vmatprep.subr.mxu0 0.0
    %2248 = vmatpush2.msra.mxu0 0.0
    %2249 = vmatprep.subr.mxu0 0.0
    %2250 = vmatpush2.msra.mxu0 0.0
    %2251 = vmatprep.subr.mxu0 0.0
    %2252 = vmatpush2.msra.mxu0 0.0
    %2253 = vmatprep.subr.mxu0 0.0
    %2254 = vmatpush2.msra.mxu0 0.0
    %2255 = vmatprep.subr.mxu0 0.0
    %2256 = vmatpush2.msra.mxu0 0.0
    %2257 = vmatprep.subr.mxu0 0.0
    %2258 = vmatpush2.msra.mxu0 0.0
    %2259 = vmatprep.subr.mxu0 0.0
    %2260 = vmatpush2.msra.mxu0 0.0
    %2261 = vmatprep.subr.mxu0 0.0
    %2262 = vmatpush2.msra.mxu0 0.0
    %2263 = vmatprep.subr.mxu0 0.0
    %2264 = vmatpush2.msra.mxu0 0.0
    %2265 = vmatprep.subr.mxu0 0.0
    %2266 = vmatpush2.msra.mxu0 0.0
    %2267 = vmatprep.subr.mxu0 0.0
    %2268 = vmatpush2.msra.mxu0 0.0
    %2269 = vmatprep.subr.mxu0 0.0
    %2270 = vmatpush2.msra.mxu0 0.0
    %2271 = vmatprep.subr.mxu0 0.0
    %2272 = vmatpush2.msra.mxu0 0.0
    %2273 = vmatprep.mubr.f32.mxu0 0.0
    %2274 = vmatmul.mubr.f32.gmra.mxu0 %v2205
    %v2275 = vpop.f32.mrf.mxu0
    %v2276 = vadd.f32 %v2161, %v2275
    %v2277 = vpop.f32.mrf.mxu0
    %2278 = vmatprep.mubr.f32.mxu0 0.0
    %2279 = vmatmul.mubr.f32.gmra.mxu0 %v2207
    %v2280 = vpop.f32.mrf.mxu0
    %v2281 = vadd.f32 %v2161, %v2280
    %v2282 = vpop.f32.mrf.mxu0
    %2283 = vdwg.mxu0
    %v2286 = vcombine.high %v2276, %v2276
    %v2288 = vunpack.c.l.s4 1983009808
    %v2289 = vunpack.c.0.s8 %v2288
    %v2290 = vlaneseq
    %v2291 = vshrl.u32 %v2290, 7
    %v2292 = vsub.s32 %v2289, %v2291
    %v2293 = vrot.slane %v2276, %v2292
    %v2295 = vunpack.c.l.s4 1983009808
    %v2296 = vunpack.c.0.s8 %v2295
    %v2297 = vlaneseq
    %v2298 = vshrl.u32 %v2297, 7
    %v2299 = vsub.s32 %v2296, %v2298
    %v2300 = vrot.slane %v2286, %v2299
    %v2301 = vcombine.high %v2293, %v2293
    %v2302 = vcombine.high %v2300, %v2300
    %v2303 = vcombine.high %v2281, %v2281
    %v2305 = vunpack.c.l.s4 1983009808
    %v2306 = vunpack.c.0.s8 %v2305
    %v2307 = vlaneseq
    %v2308 = vshrl.u32 %v2307, 7
    %v2309 = vsub.s32 %v2306, %v2308
    %v2310 = vrot.slane %v2281, %v2309
    %v2312 = vunpack.c.l.s4 1983009808
    %v2313 = vunpack.c.0.s8 %v2312
    %v2314 = vlaneseq
    %v2315 = vshrl.u32 %v2314, 7
    %v2316 = vsub.s32 %v2313, %v2315
    %v2317 = vrot.slane %v2303, %v2316
    %v2318 = vcombine.high %v2310, %v2310
    %v2319 = vcombine.high %v2317, %v2317
    %2328 = vst [vmem:[#allocation2] sm:$0x3] %v2293
    %2329 = vst [vmem:[#allocation2 + $0x2] sm:$0x3] %v2301
    %2330 = vst [vmem:[#allocation2 + $0x4] sm:$0x3] %v2300
    %2331 = vst [vmem:[#allocation2 + $0x6] sm:$0x3] %v2302
    %2332 = vst [vmem:[#allocation2 + $0x8] sm:$0x3] %v2310
    %2333 = vst [vmem:[#allocation2 + $0xa] sm:$0x3] %v2318
    %2334 = vst [vmem:[#allocation2 + $0xc] sm:$0x3] %v2317
    %2335 = vst [vmem:[#allocation2 + $0xe] sm:$0x3] %v2319
    %s2336 = scalar_lea.vmem [#allocation7], 64
    %v2337 = vld [vmem:[%s2336] sm:$0xff]
    %v2338 = vld [vmem:[%s2336 + $0x8] sm:$0xff]
    %v2339 = vld [vmem:[%s2336 + $0x10] sm:$0xff]
    %v2340 = vld [vmem:[%s2336 + $0x18] sm:$0xff]
    %v2341 = vld [vmem:[#allocation2] sm:$0x3]
    %2342 = vmatprep.subr.mxu0 0.0
    %2343 = vmatpush1.msra.mxu0 0.0
    %2344 = vmatprep.subr.mxu0 0.0
    %2345 = vmatpush1.msra.mxu0 0.0
    %2346 = vmatprep.subr.mxu0 0.0
    %2347 = vmatpush1.msra.mxu0 0.0
    %2348 = vmatprep.subr.mxu0 0.0
    %2349 = vmatpush1.msra.mxu0 0.0
    %2350 = vmatprep.subr.mxu0 0.0
    %2351 = vmatpush1.msra.mxu0 0.0
    %2352 = vmatprep.subr.mxu0 0.0
    %2353 = vmatpush1.msra.mxu0 0.0
    %2354 = vmatprep.subr.mxu0 0.0
    %2355 = vmatpush1.msra.mxu0 0.0
    %2356 = vmatprep.subr.mxu0 0.0
    %2357 = vmatpush1.msra.mxu0 0.0
    %2358 = vmatprep.subr.mxu0 0.0
    %2359 = vmatpush1.msra.mxu0 0.0
    %2360 = vmatprep.subr.mxu0 0.0
    %2361 = vmatpush1.msra.mxu0 0.0
    %2362 = vmatprep.subr.mxu0 0.0
    %2363 = vmatpush1.msra.mxu0 0.0
    %2364 = vmatprep.subr.mxu0 0.0
    %2365 = vmatpush1.msra.mxu0 0.0
    %2366 = vmatprep.subr.mxu0 0.0
    %2367 = vmatpush1.msra.mxu0 %v2340
    %2368 = vmatprep.subr.mxu0 0.0
    %2369 = vmatpush1.msra.mxu0 %v2339
    %2370 = vmatprep.subr.mxu0 0.0
    %2371 = vmatpush1.msra.mxu0 %v2338
    %2372 = vmatprep.subr.mxu0 0.0
    %2373 = vmatpush1.msra.mxu0 %v2337
    %2374 = vmatprep.subr.mxu0 0.0
    %2375 = vmatpush2.msra.mxu0 0.0
    %2376 = vmatprep.subr.mxu0 0.0
    %2377 = vmatpush2.msra.mxu0 0.0
    %2378 = vmatprep.subr.mxu0 0.0
    %2379 = vmatpush2.msra.mxu0 0.0
    %2380 = vmatprep.subr.mxu0 0.0
    %2381 = vmatpush2.msra.mxu0 0.0
    %2382 = vmatprep.subr.mxu0 0.0
    %2383 = vmatpush2.msra.mxu0 0.0
    %2384 = vmatprep.subr.mxu0 0.0
    %2385 = vmatpush2.msra.mxu0 0.0
    %2386 = vmatprep.subr.mxu0 0.0
    %2387 = vmatpush2.msra.mxu0 0.0
    %2388 = vmatprep.subr.mxu0 0.0
    %2389 = vmatpush2.msra.mxu0 0.0
    %2390 = vmatprep.subr.mxu0 0.0
    %2391 = vmatpush2.msra.mxu0 0.0
    %2392 = vmatprep.subr.mxu0 0.0
    %2393 = vmatpush2.msra.mxu0 0.0
    %2394 = vmatprep.subr.mxu0 0.0
    %2395 = vmatpush2.msra.mxu0 0.0
    %2396 = vmatprep.subr.mxu0 0.0
    %2397 = vmatpush2.msra.mxu0 0.0
    %2398 = vmatprep.subr.mxu0 0.0
    %2399 = vmatpush2.msra.mxu0 0.0
    %2400 = vmatprep.subr.mxu0 0.0
    %2401 = vmatpush2.msra.mxu0 0.0
    %2402 = vmatprep.subr.mxu0 0.0
    %2403 = vmatpush2.msra.mxu0 0.0
    %2404 = vmatprep.subr.mxu0 0.0
    %2405 = vmatpush2.msra.mxu0 0.0
    %2406 = vmatprep.mubr.f32.mxu0 0.0
    %2407 = vmatmul.mubr.f32.gmra.mxu0 %v284
    %v2408 = vpop.f32.mrf.mxu0
    %v2409 = vadd.f32 0.0, %v2408
    %v2410 = vpop.f32.mrf.mxu0
    %2411 = vdwg.mxu0
    %v2412 = vadd.f32 %v2341, %v2409
    %v2413 = vxor.u32 %v2412, 2147483648
    %v2414 = vmul.f32 %v2413, 1.442695
    %v2415 = vpow.pop %v2414
    %v2416 = vadd.f32 %v2415, 1.0
    %v2417 = vrcp.pop %v2416
    %v2418 = vmul.f32 1.0, %v2417
    %v2419 = vtanh.pop %v2412
    %v2420 = vmul.f32 %v2418, 0.0
    %2422 = vrot.lane.b32.xlu0 %v2419, 64
    %v2423 = vpop.permute.xlu0 %2422
    %v2425 = vmul.f32 %v2418, %v2423
    %2427 = vrot.lane.b32.xlu0 %v2425, 32
    %v2428 = vpop.permute.xlu0 %2427
    %v2430 = vadd.f32 %v2420, %v2428
    %v2431 = vtanh.pop %v2430
    %2433 = vrot.lane.b32.xlu0 %v2431, 64
    %v2434 = vpop.permute.xlu0 %2433
    %v2436 = vmul.f32 %v2418, %v2434
    %2438 = vrot.lane.b32.xlu0 %v2436, 32
    %v2439 = vpop.permute.xlu0 %2438
    %2441 = vst.msk [vmem:[#allocation3] sm:$0x3] %vm385, %v2439
    %v2442 = vld [vmem:[%s387] sm:$0x3]
    %v2443 = vsel %vm282, %v2439, 0
    %2445 = vmatprep.subr.mxu0 0.0
    %2446 = vmatpush1.msra.mxu0 0.0
    %2447 = vmatprep.subr.mxu0 0.0
    %2448 = vmatpush1.msra.mxu0 0.0
    %2449 = vmatprep.subr.mxu0 0.0
    %2450 = vmatpush1.msra.mxu0 0.0
    %2451 = vmatprep.subr.mxu0 0.0
    %2452 = vmatpush1.msra.mxu0 0.0
    %2453 = vmatprep.subr.mxu0 0.0
    %2454 = vmatpush1.msra.mxu0 0.0
    %2455 = vmatprep.subr.mxu0 0.0
    %2456 = vmatpush1.msra.mxu0 0.0
    %2457 = vmatprep.subr.mxu0 0.0
    %2458 = vmatpush1.msra.mxu0 0.0
    %2459 = vmatprep.subr.mxu0 0.0
    %2460 = vmatpush1.msra.mxu0 0.0
    %2461 = vmatprep.subr.mxu0 0.0
    %2462 = vmatpush1.msra.mxu0 0.0
    %2463 = vmatprep.subr.mxu0 0.0
    %2464 = vmatpush1.msra.mxu0 0.0
    %2465 = vmatprep.subr.mxu0 0.0
    %2466 = vmatpush1.msra.mxu0 0.0
    %2467 = vmatprep.subr.mxu0 0.0
    %2468 = vmatpush1.msra.mxu0 0.0
    %2469 = vmatprep.subr.mxu0 0.0
    %2470 = vmatpush1.msra.mxu0 %v2340
    %2471 = vmatprep.subr.mxu0 0.0
    %2472 = vmatpush1.msra.mxu0 %v2339
    %2473 = vmatprep.subr.mxu0 0.0
    %2474 = vmatpush1.msra.mxu0 %v2338
    %2475 = vmatprep.subr.mxu0 0.0
    %2476 = vmatpush1.msra.mxu0 %v2337
    %2477 = vmatprep.subr.mxu0 0.0
    %2478 = vmatpush2.msra.mxu0 0.0
    %2479 = vmatprep.subr.mxu0 0.0
    %2480 = vmatpush2.msra.mxu0 0.0
    %2481 = vmatprep.subr.mxu0 0.0
    %2482 = vmatpush2.msra.mxu0 0.0
    %2483 = vmatprep.subr.mxu0 0.0
    %2484 = vmatpush2.msra.mxu0 0.0
    %2485 = vmatprep.subr.mxu0 0.0
    %2486 = vmatpush2.msra.mxu0 0.0
    %2487 = vmatprep.subr.mxu0 0.0
    %2488 = vmatpush2.msra.mxu0 0.0
    %2489 = vmatprep.subr.mxu0 0.0
    %2490 = vmatpush2.msra.mxu0 0.0
    %2491 = vmatprep.subr.mxu0 0.0
    %2492 = vmatpush2.msra.mxu0 0.0
    %2493 = vmatprep.subr.mxu0 0.0
    %2494 = vmatpush2.msra.mxu0 0.0
    %2495 = vmatprep.subr.mxu0 0.0
    %2496 = vmatpush2.msra.mxu0 0.0
    %2497 = vmatprep.subr.mxu0 0.0
    %2498 = vmatpush2.msra.mxu0 0.0
    %2499 = vmatprep.subr.mxu0 0.0
    %2500 = vmatpush2.msra.mxu0 0.0
    %2501 = vmatprep.subr.mxu0 0.0
    %2502 = vmatpush2.msra.mxu0 0.0
    %2503 = vmatprep.subr.mxu0 0.0
    %2504 = vmatpush2.msra.mxu0 0.0
    %2505 = vmatprep.subr.mxu0 0.0
    %2506 = vmatpush2.msra.mxu0 0.0
    %2507 = vmatprep.subr.mxu0 0.0
    %2508 = vmatpush2.msra.mxu0 0.0
    %2509 = vmatprep.mubr.f32.mxu0 0.0
    %2510 = vmatmul.mubr.f32.gmra.mxu0 %v2443
    %v2511 = vpop.f32.mrf.mxu0
    %v2512 = vadd.f32 0.0, %v2511
    %v2513 = vpop.f32.mrf.mxu0
    %2514 = vdwg.mxu0
    %v2515 = vadd.f32 %v2442, %v2512
    %v2516 = vxor.u32 %v2515, 2147483648
    %v2517 = vmul.f32 %v2516, 1.442695
    %v2518 = vpow.pop %v2517
    %v2519 = vadd.f32 %v2518, 1.0
    %v2520 = vrcp.pop %v2519
    %v2521 = vmul.f32 1.0, %v2520
    %v2522 = vtanh.pop %v2515
    %v2523 = vmul.f32 %v2521, %v2430
    %2525 = vrot.lane.b32.xlu0 %v2522, 64
    %v2526 = vpop.permute.xlu0 %2525
    %v2528 = vmul.f32 %v2521, %v2526
    %2530 = vrot.lane.b32.xlu0 %v2528, 32
    %v2531 = vpop.permute.xlu0 %2530
    %v2533 = vadd.f32 %v2523, %v2531
    %v2534 = vtanh.pop %v2533
    %2536 = vrot.lane.b32.xlu0 %v2534, 64
    %v2537 = vpop.permute.xlu0 %2536
    %v2539 = vmul.f32 %v2521, %v2537
    %2541 = vrot.lane.b32.xlu0 %v2539, 32
    %v2542 = vpop.permute.xlu0 %2541
    %2544 = vst.msk [vmem:[%s490] sm:$0x3] %vm385, %v2542
    %v2545 = vld [vmem:[%s492] sm:$0x3]
    %v2546 = vsel %vm282, %v2542, 0
    %2548 = vmatprep.subr.mxu0 0.0
    %2549 = vmatpush1.msra.mxu0 0.0
    %2550 = vmatprep.subr.mxu0 0.0
    %2551 = vmatpush1.msra.mxu0 0.0
    %2552 = vmatprep.subr.mxu0 0.0
    %2553 = vmatpush1.msra.mxu0 0.0
    %2554 = vmatprep.subr.mxu0 0.0
    %2555 = vmatpush1.msra.mxu0 0.0
    %2556 = vmatprep.subr.mxu0 0.0
    %2557 = vmatpush1.msra.mxu0 0.0
    %2558 = vmatprep.subr.mxu0 0.0
    %2559 = vmatpush1.msra.mxu0 0.0
    %2560 = vmatprep.subr.mxu0 0.0
    %2561 = vmatpush1.msra.mxu0 0.0
    %2562 = vmatprep.subr.mxu0 0.0
    %2563 = vmatpush1.msra.mxu0 0.0
    %2564 = vmatprep.subr.mxu0 0.0
    %2565 = vmatpush1.msra.mxu0 0.0
    %2566 = vmatprep.subr.mxu0 0.0
    %2567 = vmatpush1.msra.mxu0 0.0
    %2568 = vmatprep.subr.mxu0 0.0
    %2569 = vmatpush1.msra.mxu0 0.0
    %2570 = vmatprep.subr.mxu0 0.0
    %2571 = vmatpush1.msra.mxu0 0.0
    %2572 = vmatprep.subr.mxu0 0.0
    %2573 = vmatpush1.msra.mxu0 %v2340
    %2574 = vmatprep.subr.mxu0 0.0
    %2575 = vmatpush1.msra.mxu0 %v2339
    %2576 = vmatprep.subr.mxu0 0.0
    %2577 = vmatpush1.msra.mxu0 %v2338
    %2578 = vmatprep.subr.mxu0 0.0
    %2579 = vmatpush1.msra.mxu0 %v2337
    %2580 = vmatprep.subr.mxu0 0.0
    %2581 = vmatpush2.msra.mxu0 0.0
    %2582 = vmatprep.subr.mxu0 0.0
    %2583 = vmatpush2.msra.mxu0 0.0
    %2584 = vmatprep.subr.mxu0 0.0
    %2585 = vmatpush2.msra.mxu0 0.0
    %2586 = vmatprep.subr.mxu0 0.0
    %2587 = vmatpush2.msra.mxu0 0.0
    %2588 = vmatprep.subr.mxu0 0.0
    %2589 = vmatpush2.msra.mxu0 0.0
    %2590 = vmatprep.subr.mxu0 0.0
    %2591 = vmatpush2.msra.mxu0 0.0
    %2592 = vmatprep.subr.mxu0 0.0
    %2593 = vmatpush2.msra.mxu0 0.0
    %2594 = vmatprep.subr.mxu0 0.0
    %2595 = vmatpush2.msra.mxu0 0.0
    %2596 = vmatprep.subr.mxu0 0.0
    %2597 = vmatpush2.msra.mxu0 0.0
    %2598 = vmatprep.subr.mxu0 0.0
    %2599 = vmatpush2.msra.mxu0 0.0
    %2600 = vmatprep.subr.mxu0 0.0
    %2601 = vmatpush2.msra.mxu0 0.0
    %2602 = vmatprep.subr.mxu0 0.0
    %2603 = vmatpush2.msra.mxu0 0.0
    %2604 = vmatprep.subr.mxu0 0.0
    %2605 = vmatpush2.msra.mxu0 0.0
    %2606 = vmatprep.subr.mxu0 0.0
    %2607 = vmatpush2.msra.mxu0 0.0
    %2608 = vmatprep.subr.mxu0 0.0
    %2609 = vmatpush2.msra.mxu0 0.0
    %2610 = vmatprep.subr.mxu0 0.0
    %2611 = vmatpush2.msra.mxu0 0.0
    %2612 = vmatprep.mubr.f32.mxu0 0.0
    %2613 = vmatmul.mubr.f32.gmra.mxu0 %v2546
    %v2614 = vpop.f32.mrf.mxu0
    %v2615 = vadd.f32 0.0, %v2614
    %v2616 = vpop.f32.mrf.mxu0
    %2617 = vdwg.mxu0
    %v2618 = vadd.f32 %v2545, %v2615
    %v2619 = vxor.u32 %v2618, 2147483648
    %v2620 = vmul.f32 %v2619, 1.442695
    %v2621 = vpow.pop %v2620
    %v2622 = vadd.f32 %v2621, 1.0
    %v2623 = vrcp.pop %v2622
    %v2624 = vmul.f32 1.0, %v2623
    %v2625 = vtanh.pop %v2618
    %v2626 = vmul.f32 %v2624, %v2533
    %2628 = vrot.lane.b32.xlu0 %v2625, 64
    %v2629 = vpop.permute.xlu0 %2628
    %v2631 = vmul.f32 %v2624, %v2629
    %2633 = vrot.lane.b32.xlu0 %v2631, 32
    %v2634 = vpop.permute.xlu0 %2633
    %v2636 = vadd.f32 %v2626, %v2634
    %v2637 = vtanh.pop %v2636
    %2639 = vrot.lane.b32.xlu0 %v2637, 64
    %v2640 = vpop.permute.xlu0 %2639
    %v2642 = vmul.f32 %v2624, %v2640
    %2644 = vrot.lane.b32.xlu0 %v2642, 32
    %v2645 = vpop.permute.xlu0 %2644
    %2647 = vst.msk [vmem:[%s595] sm:$0x3] %vm385, %v2645
    %v2648 = vld [vmem:[%s597] sm:$0x3]
    %v2649 = vsel %vm282, %v2645, 0
    %2651 = vmatprep.subr.mxu0 0.0
    %2652 = vmatpush1.msra.mxu0 0.0
    %2653 = vmatprep.subr.mxu0 0.0
    %2654 = vmatpush1.msra.mxu0 0.0
    %2655 = vmatprep.subr.mxu0 0.0
    %2656 = vmatpush1.msra.mxu0 0.0
    %2657 = vmatprep.subr.mxu0 0.0
    %2658 = vmatpush1.msra.mxu0 0.0
    %2659 = vmatprep.subr.mxu0 0.0
    %2660 = vmatpush1.msra.mxu0 0.0
    %2661 = vmatprep.subr.mxu0 0.0
    %2662 = vmatpush1.msra.mxu0 0.0
    %2663 = vmatprep.subr.mxu0 0.0
    %2664 = vmatpush1.msra.mxu0 0.0
    %2665 = vmatprep.subr.mxu0 0.0
    %2666 = vmatpush1.msra.mxu0 0.0
    %2667 = vmatprep.subr.mxu0 0.0
    %2668 = vmatpush1.msra.mxu0 0.0
    %2669 = vmatprep.subr.mxu0 0.0
    %2670 = vmatpush1.msra.mxu0 0.0
    %2671 = vmatprep.subr.mxu0 0.0
    %2672 = vmatpush1.msra.mxu0 0.0
    %2673 = vmatprep.subr.mxu0 0.0
    %2674 = vmatpush1.msra.mxu0 0.0
    %2675 = vmatprep.subr.mxu0 0.0
    %2676 = vmatpush1.msra.mxu0 %v2340
    %2677 = vmatprep.subr.mxu0 0.0
    %2678 = vmatpush1.msra.mxu0 %v2339
    %2679 = vmatprep.subr.mxu0 0.0
    %2680 = vmatpush1.msra.mxu0 %v2338
    %2681 = vmatprep.subr.mxu0 0.0
    %2682 = vmatpush1.msra.mxu0 %v2337
    %2683 = vmatprep.subr.mxu0 0.0
    %2684 = vmatpush2.msra.mxu0 0.0
    %2685 = vmatprep.subr.mxu0 0.0
    %2686 = vmatpush2.msra.mxu0 0.0
    %2687 = vmatprep.subr.mxu0 0.0
    %2688 = vmatpush2.msra.mxu0 0.0
    %2689 = vmatprep.subr.mxu0 0.0
    %2690 = vmatpush2.msra.mxu0 0.0
    %2691 = vmatprep.subr.mxu0 0.0
    %2692 = vmatpush2.msra.mxu0 0.0
    %2693 = vmatprep.subr.mxu0 0.0
    %2694 = vmatpush2.msra.mxu0 0.0
    %2695 = vmatprep.subr.mxu0 0.0
    %2696 = vmatpush2.msra.mxu0 0.0
    %2697 = vmatprep.subr.mxu0 0.0
    %2698 = vmatpush2.msra.mxu0 0.0
    %2699 = vmatprep.subr.mxu0 0.0
    %2700 = vmatpush2.msra.mxu0 0.0
    %2701 = vmatprep.subr.mxu0 0.0
    %2702 = vmatpush2.msra.mxu0 0.0
    %2703 = vmatprep.subr.mxu0 0.0
    %2704 = vmatpush2.msra.mxu0 0.0
    %2705 = vmatprep.subr.mxu0 0.0
    %2706 = vmatpush2.msra.mxu0 0.0
    %2707 = vmatprep.subr.mxu0 0.0
    %2708 = vmatpush2.msra.mxu0 0.0
    %2709 = vmatprep.subr.mxu0 0.0
    %2710 = vmatpush2.msra.mxu0 0.0
    %2711 = vmatprep.subr.mxu0 0.0
    %2712 = vmatpush2.msra.mxu0 0.0
    %2713 = vmatprep.subr.mxu0 0.0
    %2714 = vmatpush2.msra.mxu0 0.0
    %2715 = vmatprep.mubr.f32.mxu0 0.0
    %2716 = vmatmul.mubr.f32.gmra.mxu0 %v2649
    %v2717 = vpop.f32.mrf.mxu0
    %v2718 = vadd.f32 0.0, %v2717
    %v2719 = vpop.f32.mrf.mxu0
    %2720 = vdwg.mxu0
    %v2721 = vadd.f32 %v2648, %v2718
    %v2722 = vxor.u32 %v2721, 2147483648
    %v2723 = vmul.f32 %v2722, 1.442695
    %v2724 = vpow.pop %v2723
    %v2725 = vadd.f32 %v2724, 1.0
    %v2726 = vrcp.pop %v2725
    %v2727 = vmul.f32 1.0, %v2726
    %v2728 = vtanh.pop %v2721
    %v2729 = vmul.f32 %v2727, %v2636
    %2731 = vrot.lane.b32.xlu0 %v2728, 64
    %v2732 = vpop.permute.xlu0 %2731
    %v2734 = vmul.f32 %v2727, %v2732
    %2736 = vrot.lane.b32.xlu0 %v2734, 32
    %v2737 = vpop.permute.xlu0 %2736
    %v2739 = vadd.f32 %v2729, %v2737
    %v2740 = vtanh.pop %v2739
    %2742 = vrot.lane.b32.xlu0 %v2740, 64
    %v2743 = vpop.permute.xlu0 %2742
    %v2745 = vmul.f32 %v2727, %v2743
    %2747 = vrot.lane.b32.xlu0 %v2745, 32
    %v2748 = vpop.permute.xlu0 %2747
    %2750 = vst.msk [vmem:[%s700] sm:$0x3] %vm385, %v2748
    %v2751 = vld [vmem:[%s702] sm:$0x3]
    %v2752 = vsel %vm282, %v2748, 0
    %2754 = vmatprep.subr.mxu0 0.0
    %2755 = vmatpush1.msra.mxu0 0.0
    %2756 = vmatprep.subr.mxu0 0.0
    %2757 = vmatpush1.msra.mxu0 0.0
    %2758 = vmatprep.subr.mxu0 0.0
    %2759 = vmatpush1.msra.mxu0 0.0
    %2760 = vmatprep.subr.mxu0 0.0
    %2761 = vmatpush1.msra.mxu0 0.0
    %2762 = vmatprep.subr.mxu0 0.0
    %2763 = vmatpush1.msra.mxu0 0.0
    %2764 = vmatprep.subr.mxu0 0.0
    %2765 = vmatpush1.msra.mxu0 0.0
    %2766 = vmatprep.subr.mxu0 0.0
    %2767 = vmatpush1.msra.mxu0 0.0
    %2768 = vmatprep.subr.mxu0 0.0
    %2769 = vmatpush1.msra.mxu0 0.0
    %2770 = vmatprep.subr.mxu0 0.0
    %2771 = vmatpush1.msra.mxu0 0.0
    %2772 = vmatprep.subr.mxu0 0.0
    %2773 = vmatpush1.msra.mxu0 0.0
    %2774 = vmatprep.subr.mxu0 0.0
    %2775 = vmatpush1.msra.mxu0 0.0
    %2776 = vmatprep.subr.mxu0 0.0
    %2777 = vmatpush1.msra.mxu0 0.0
    %2778 = vmatprep.subr.mxu0 0.0
    %2779 = vmatpush1.msra.mxu0 %v2340
    %2780 = vmatprep.subr.mxu0 0.0
    %2781 = vmatpush1.msra.mxu0 %v2339
    %2782 = vmatprep.subr.mxu0 0.0
    %2783 = vmatpush1.msra.mxu0 %v2338
    %2784 = vmatprep.subr.mxu0 0.0
    %2785 = vmatpush1.msra.mxu0 %v2337
    %2786 = vmatprep.subr.mxu0 0.0
    %2787 = vmatpush2.msra.mxu0 0.0
    %2788 = vmatprep.subr.mxu0 0.0
    %2789 = vmatpush2.msra.mxu0 0.0
    %2790 = vmatprep.subr.mxu0 0.0
    %2791 = vmatpush2.msra.mxu0 0.0
    %2792 = vmatprep.subr.mxu0 0.0
    %2793 = vmatpush2.msra.mxu0 0.0
    %2794 = vmatprep.subr.mxu0 0.0
    %2795 = vmatpush2.msra.mxu0 0.0
    %2796 = vmatprep.subr.mxu0 0.0
    %2797 = vmatpush2.msra.mxu0 0.0
    %2798 = vmatprep.subr.mxu0 0.0
    %2799 = vmatpush2.msra.mxu0 0.0
    %2800 = vmatprep.subr.mxu0 0.0
    %2801 = vmatpush2.msra.mxu0 0.0
    %2802 = vmatprep.subr.mxu0 0.0
    %2803 = vmatpush2.msra.mxu0 0.0
    %2804 = vmatprep.subr.mxu0 0.0
    %2805 = vmatpush2.msra.mxu0 0.0
    %2806 = vmatprep.subr.mxu0 0.0
    %2807 = vmatpush2.msra.mxu0 0.0
    %2808 = vmatprep.subr.mxu0 0.0
    %2809 = vmatpush2.msra.mxu0 0.0
    %2810 = vmatprep.subr.mxu0 0.0
    %2811 = vmatpush2.msra.mxu0 0.0
    %2812 = vmatprep.subr.mxu0 0.0
    %2813 = vmatpush2.msra.mxu0 0.0
    %2814 = vmatprep.subr.mxu0 0.0
    %2815 = vmatpush2.msra.mxu0 0.0
    %2816 = vmatprep.subr.mxu0 0.0
    %2817 = vmatpush2.msra.mxu0 0.0
    %2818 = vmatprep.mubr.f32.mxu0 0.0
    %2819 = vmatmul.mubr.f32.gmra.mxu0 %v2752
    %v2820 = vpop.f32.mrf.mxu0
    %v2821 = vadd.f32 0.0, %v2820
    %v2822 = vpop.f32.mrf.mxu0
    %2823 = vdwg.mxu0
    %v2824 = vadd.f32 %v2751, %v2821
    %v2825 = vxor.u32 %v2824, 2147483648
    %v2826 = vmul.f32 %v2825, 1.442695
    %v2827 = vpow.pop %v2826
    %v2828 = vadd.f32 %v2827, 1.0
    %v2829 = vrcp.pop %v2828
    %v2830 = vmul.f32 1.0, %v2829
    %v2831 = vtanh.pop %v2824
    %v2832 = vmul.f32 %v2830, %v2739
    %2834 = vrot.lane.b32.xlu0 %v2831, 64
    %v2835 = vpop.permute.xlu0 %2834
    %v2837 = vmul.f32 %v2830, %v2835
    %2839 = vrot.lane.b32.xlu0 %v2837, 32
    %v2840 = vpop.permute.xlu0 %2839
    %v2842 = vadd.f32 %v2832, %v2840
    %v2843 = vtanh.pop %v2842
    %2845 = vrot.lane.b32.xlu0 %v2843, 64
    %v2846 = vpop.permute.xlu0 %2845
    %v2848 = vmul.f32 %v2830, %v2846
    %2850 = vrot.lane.b32.xlu0 %v2848, 32
    %v2851 = vpop.permute.xlu0 %2850
    %2853 = vst.msk [vmem:[%s805] sm:$0x3] %vm385, %v2851
    %v2854 = vld [vmem:[%s807] sm:$0x3]
    %v2855 = vsel %vm282, %v2851, 0
    %2857 = vmatprep.subr.mxu0 0.0
    %2858 = vmatpush1.msra.mxu0 0.0
    %2859 = vmatprep.subr.mxu0 0.0
    %2860 = vmatpush1.msra.mxu0 0.0
    %2861 = vmatprep.subr.mxu0 0.0
    %2862 = vmatpush1.msra.mxu0 0.0
    %2863 = vmatprep.subr.mxu0 0.0
    %2864 = vmatpush1.msra.mxu0 0.0
    %2865 = vmatprep.subr.mxu0 0.0
    %2866 = vmatpush1.msra.mxu0 0.0
    %2867 = vmatprep.subr.mxu0 0.0
    %2868 = vmatpush1.msra.mxu0 0.0
    %2869 = vmatprep.subr.mxu0 0.0
    %2870 = vmatpush1.msra.mxu0 0.0
    %2871 = vmatprep.subr.mxu0 0.0
    %2872 = vmatpush1.msra.mxu0 0.0
    %2873 = vmatprep.subr.mxu0 0.0
    %2874 = vmatpush1.msra.mxu0 0.0
    %2875 = vmatprep.subr.mxu0 0.0
    %2876 = vmatpush1.msra.mxu0 0.0
    %2877 = vmatprep.subr.mxu0 0.0
    %2878 = vmatpush1.msra.mxu0 0.0
    %2879 = vmatprep.subr.mxu0 0.0
    %2880 = vmatpush1.msra.mxu0 0.0
    %2881 = vmatprep.subr.mxu0 0.0
    %2882 = vmatpush1.msra.mxu0 %v2340
    %2883 = vmatprep.subr.mxu0 0.0
    %2884 = vmatpush1.msra.mxu0 %v2339
    %2885 = vmatprep.subr.mxu0 0.0
    %2886 = vmatpush1.msra.mxu0 %v2338
    %2887 = vmatprep.subr.mxu0 0.0
    %2888 = vmatpush1.msra.mxu0 %v2337
    %2889 = vmatprep.subr.mxu0 0.0
    %2890 = vmatpush2.msra.mxu0 0.0
    %2891 = vmatprep.subr.mxu0 0.0
    %2892 = vmatpush2.msra.mxu0 0.0
    %2893 = vmatprep.subr.mxu0 0.0
    %2894 = vmatpush2.msra.mxu0 0.0
    %2895 = vmatprep.subr.mxu0 0.0
    %2896 = vmatpush2.msra.mxu0 0.0
    %2897 = vmatprep.subr.mxu0 0.0
    %2898 = vmatpush2.msra.mxu0 0.0
    %2899 = vmatprep.subr.mxu0 0.0
    %2900 = vmatpush2.msra.mxu0 0.0
    %2901 = vmatprep.subr.mxu0 0.0
    %2902 = vmatpush2.msra.mxu0 0.0
    %2903 = vmatprep.subr.mxu0 0.0
    %2904 = vmatpush2.msra.mxu0 0.0
    %2905 = vmatprep.subr.mxu0 0.0
    %2906 = vmatpush2.msra.mxu0 0.0
    %2907 = vmatprep.subr.mxu0 0.0
    %2908 = vmatpush2.msra.mxu0 0.0
    %2909 = vmatprep.subr.mxu0 0.0
    %2910 = vmatpush2.msra.mxu0 0.0
    %2911 = vmatprep.subr.mxu0 0.0
    %2912 = vmatpush2.msra.mxu0 0.0
    %2913 = vmatprep.subr.mxu0 0.0
    %2914 = vmatpush2.msra.mxu0 0.0
    %2915 = vmatprep.subr.mxu0 0.0
    %2916 = vmatpush2.msra.mxu0 0.0
    %2917 = vmatprep.subr.mxu0 0.0
    %2918 = vmatpush2.msra.mxu0 0.0
    %2919 = vmatprep.subr.mxu0 0.0
    %2920 = vmatpush2.msra.mxu0 0.0
    %2921 = vmatprep.mubr.f32.mxu0 0.0
    %2922 = vmatmul.mubr.f32.gmra.mxu0 %v2855
    %v2923 = vpop.f32.mrf.mxu0
    %v2924 = vadd.f32 0.0, %v2923
    %v2925 = vpop.f32.mrf.mxu0
    %2926 = vdwg.mxu0
    %v2927 = vadd.f32 %v2854, %v2924
    %v2928 = vxor.u32 %v2927, 2147483648
    %v2929 = vmul.f32 %v2928, 1.442695
    %v2930 = vpow.pop %v2929
    %v2931 = vadd.f32 %v2930, 1.0
    %v2932 = vrcp.pop %v2931
    %v2933 = vmul.f32 1.0, %v2932
    %v2934 = vtanh.pop %v2927
    %v2935 = vmul.f32 %v2933, %v2842
    %2937 = vrot.lane.b32.xlu0 %v2934, 64
    %v2938 = vpop.permute.xlu0 %2937
    %v2940 = vmul.f32 %v2933, %v2938
    %2942 = vrot.lane.b32.xlu0 %v2940, 32
    %v2943 = vpop.permute.xlu0 %2942
    %v2945 = vadd.f32 %v2935, %v2943
    %v2946 = vtanh.pop %v2945
    %2948 = vrot.lane.b32.xlu0 %v2946, 64
    %v2949 = vpop.permute.xlu0 %2948
    %v2951 = vmul.f32 %v2933, %v2949
    %2953 = vrot.lane.b32.xlu0 %v2951, 32
    %v2954 = vpop.permute.xlu0 %2953
    %2956 = vst.msk [vmem:[%s910] sm:$0x3] %vm385, %v2954
    %v2957 = vld [vmem:[%s912] sm:$0x3]
    %v2958 = vsel %vm282, %v2954, 0
    %2960 = vmatprep.subr.mxu0 0.0
    %2961 = vmatpush1.msra.mxu0 0.0
    %2962 = vmatprep.subr.mxu0 0.0
    %2963 = vmatpush1.msra.mxu0 0.0
    %2964 = vmatprep.subr.mxu0 0.0
    %2965 = vmatpush1.msra.mxu0 0.0
    %2966 = vmatprep.subr.mxu0 0.0
    %2967 = vmatpush1.msra.mxu0 0.0
    %2968 = vmatprep.subr.mxu0 0.0
    %2969 = vmatpush1.msra.mxu0 0.0
    %2970 = vmatprep.subr.mxu0 0.0
    %2971 = vmatpush1.msra.mxu0 0.0
    %2972 = vmatprep.subr.mxu0 0.0
    %2973 = vmatpush1.msra.mxu0 0.0
    %2974 = vmatprep.subr.mxu0 0.0
    %2975 = vmatpush1.msra.mxu0 0.0
    %2976 = vmatprep.subr.mxu0 0.0
    %2977 = vmatpush1.msra.mxu0 0.0
    %2978 = vmatprep.subr.mxu0 0.0
    %2979 = vmatpush1.msra.mxu0 0.0
    %2980 = vmatprep.subr.mxu0 0.0
    %2981 = vmatpush1.msra.mxu0 0.0
    %2982 = vmatprep.subr.mxu0 0.0
    %2983 = vmatpush1.msra.mxu0 0.0
    %2984 = vmatprep.subr.mxu0 0.0
    %2985 = vmatpush1.msra.mxu0 %v2340
    %2986 = vmatprep.subr.mxu0 0.0
    %2987 = vmatpush1.msra.mxu0 %v2339
    %2988 = vmatprep.subr.mxu0 0.0
    %2989 = vmatpush1.msra.mxu0 %v2338
    %2990 = vmatprep.subr.mxu0 0.0
    %2991 = vmatpush1.msra.mxu0 %v2337
    %2992 = vmatprep.subr.mxu0 0.0
    %2993 = vmatpush2.msra.mxu0 0.0
    %2994 = vmatprep.subr.mxu0 0.0
    %2995 = vmatpush2.msra.mxu0 0.0
    %2996 = vmatprep.subr.mxu0 0.0
    %2997 = vmatpush2.msra.mxu0 0.0
    %2998 = vmatprep.subr.mxu0 0.0
    %2999 = vmatpush2.msra.mxu0 0.0
    %3000 = vmatprep.subr.mxu0 0.0
    %3001 = vmatpush2.msra.mxu0 0.0
    %3002 = vmatprep.subr.mxu0 0.0
    %3003 = vmatpush2.msra.mxu0 0.0
    %3004 = vmatprep.subr.mxu0 0.0
    %3005 = vmatpush2.msra.mxu0 0.0
    %3006 = vmatprep.subr.mxu0 0.0
    %3007 = vmatpush2.msra.mxu0 0.0
    %3008 = vmatprep.subr.mxu0 0.0
    %3009 = vmatpush2.msra.mxu0 0.0
    %3010 = vmatprep.subr.mxu0 0.0
    %3011 = vmatpush2.msra.mxu0 0.0
    %3012 = vmatprep.subr.mxu0 0.0
    %3013 = vmatpush2.msra.mxu0 0.0
    %3014 = vmatprep.subr.mxu0 0.0
    %3015 = vmatpush2.msra.mxu0 0.0
    %3016 = vmatprep.subr.mxu0 0.0
    %3017 = vmatpush2.msra.mxu0 0.0
    %3018 = vmatprep.subr.mxu0 0.0
    %3019 = vmatpush2.msra.mxu0 0.0
    %3020 = vmatprep.subr.mxu0 0.0
    %3021 = vmatpush2.msra.mxu0 0.0
    %3022 = vmatprep.subr.mxu0 0.0
    %3023 = vmatpush2.msra.mxu0 0.0
    %3024 = vmatprep.mubr.f32.mxu0 0.0
    %3025 = vmatmul.mubr.f32.gmra.mxu0 %v2958
    %v3026 = vpop.f32.mrf.mxu0
    %v3027 = vadd.f32 0.0, %v3026
    %v3028 = vpop.f32.mrf.mxu0
    %3029 = vdwg.mxu0
    %v3030 = vadd.f32 %v2957, %v3027
    %v3031 = vxor.u32 %v3030, 2147483648
    %v3032 = vmul.f32 %v3031, 1.442695
    %v3033 = vpow.pop %v3032
    %v3034 = vadd.f32 %v3033, 1.0
    %v3035 = vrcp.pop %v3034
    %v3036 = vmul.f32 1.0, %v3035
    %v3037 = vtanh.pop %v3030
    %v3038 = vmul.f32 %v3036, %v2945
    %3040 = vrot.lane.b32.xlu0 %v3037, 64
    %v3041 = vpop.permute.xlu0 %3040
    %v3043 = vmul.f32 %v3036, %v3041
    %3045 = vrot.lane.b32.xlu0 %v3043, 32
    %v3046 = vpop.permute.xlu0 %3045
    %v3048 = vadd.f32 %v3038, %v3046
    %v3049 = vtanh.pop %v3048
    %3051 = vrot.lane.b32.xlu0 %v3049, 64
    %v3052 = vpop.permute.xlu0 %3051
    %v3054 = vmul.f32 %v3036, %v3052
    %3056 = vrot.lane.b32.xlu0 %v3054, 32
    %v3057 = vpop.permute.xlu0 %3056
    %3059 = vst.msk [vmem:[%s1015] sm:$0x3] %vm385, %v3057
    %v3060 = vld [vmem:[%s1017] sm:$0x3]
    %v3061 = vsel %vm282, %v3057, 0
    %3063 = vmatprep.subr.mxu0 0.0
    %3064 = vmatpush1.msra.mxu0 0.0
    %3065 = vmatprep.subr.mxu0 0.0
    %3066 = vmatpush1.msra.mxu0 0.0
    %3067 = vmatprep.subr.mxu0 0.0
    %3068 = vmatpush1.msra.mxu0 0.0
    %3069 = vmatprep.subr.mxu0 0.0
    %3070 = vmatpush1.msra.mxu0 0.0
    %3071 = vmatprep.subr.mxu0 0.0
    %3072 = vmatpush1.msra.mxu0 0.0
    %3073 = vmatprep.subr.mxu0 0.0
    %3074 = vmatpush1.msra.mxu0 0.0
    %3075 = vmatprep.subr.mxu0 0.0
    %3076 = vmatpush1.msra.mxu0 0.0
    %3077 = vmatprep.subr.mxu0 0.0
    %3078 = vmatpush1.msra.mxu0 0.0
    %3079 = vmatprep.subr.mxu0 0.0
    %3080 = vmatpush1.msra.mxu0 0.0
    %3081 = vmatprep.subr.mxu0 0.0
    %3082 = vmatpush1.msra.mxu0 0.0
    %3083 = vmatprep.subr.mxu0 0.0
    %3084 = vmatpush1.msra.mxu0 0.0
    %3085 = vmatprep.subr.mxu0 0.0
    %3086 = vmatpush1.msra.mxu0 0.0
    %3087 = vmatprep.subr.mxu0 0.0
    %3088 = vmatpush1.msra.mxu0 %v2340
    %3089 = vmatprep.subr.mxu0 0.0
    %3090 = vmatpush1.msra.mxu0 %v2339
    %3091 = vmatprep.subr.mxu0 0.0
    %3092 = vmatpush1.msra.mxu0 %v2338
    %3093 = vmatprep.subr.mxu0 0.0
    %3094 = vmatpush1.msra.mxu0 %v2337
    %3095 = vmatprep.subr.mxu0 0.0
    %3096 = vmatpush2.msra.mxu0 0.0
    %3097 = vmatprep.subr.mxu0 0.0
    %3098 = vmatpush2.msra.mxu0 0.0
    %3099 = vmatprep.subr.mxu0 0.0
    %3100 = vmatpush2.msra.mxu0 0.0
    %3101 = vmatprep.subr.mxu0 0.0
    %3102 = vmatpush2.msra.mxu0 0.0
    %3103 = vmatprep.subr.mxu0 0.0
    %3104 = vmatpush2.msra.mxu0 0.0
    %3105 = vmatprep.subr.mxu0 0.0
    %3106 = vmatpush2.msra.mxu0 0.0
    %3107 = vmatprep.subr.mxu0 0.0
    %3108 = vmatpush2.msra.mxu0 0.0
    %3109 = vmatprep.subr.mxu0 0.0
    %3110 = vmatpush2.msra.mxu0 0.0
    %3111 = vmatprep.subr.mxu0 0.0
    %3112 = vmatpush2.msra.mxu0 0.0
    %3113 = vmatprep.subr.mxu0 0.0
    %3114 = vmatpush2.msra.mxu0 0.0
    %3115 = vmatprep.subr.mxu0 0.0
    %3116 = vmatpush2.msra.mxu0 0.0
    %3117 = vmatprep.subr.mxu0 0.0
    %3118 = vmatpush2.msra.mxu0 0.0
    %3119 = vmatprep.subr.mxu0 0.0
    %3120 = vmatpush2.msra.mxu0 0.0
    %3121 = vmatprep.subr.mxu0 0.0
    %3122 = vmatpush2.msra.mxu0 0.0
    %3123 = vmatprep.subr.mxu0 0.0
    %3124 = vmatpush2.msra.mxu0 0.0
    %3125 = vmatprep.subr.mxu0 0.0
    %3126 = vmatpush2.msra.mxu0 0.0
    %3127 = vmatprep.mubr.f32.mxu0 0.0
    %3128 = vmatmul.mubr.f32.gmra.mxu0 %v3061
    %v3129 = vpop.f32.mrf.mxu0
    %v3130 = vadd.f32 0.0, %v3129
    %v3131 = vpop.f32.mrf.mxu0
    %3132 = vdwg.mxu0
    %v3133 = vadd.f32 %v3060, %v3130
    %v3134 = vxor.u32 %v3133, 2147483648
    %v3135 = vmul.f32 %v3134, 1.442695
    %v3136 = vpow.pop %v3135
    %v3137 = vadd.f32 %v3136, 1.0
    %v3138 = vrcp.pop %v3137
    %v3139 = vmul.f32 1.0, %v3138
    %v3140 = vtanh.pop %v3133
    %v3141 = vmul.f32 %v3139, %v3048
    %3143 = vrot.lane.b32.xlu0 %v3140, 64
    %v3144 = vpop.permute.xlu0 %3143
    %v3146 = vmul.f32 %v3139, %v3144
    %3148 = vrot.lane.b32.xlu0 %v3146, 32
    %v3149 = vpop.permute.xlu0 %3148
    %v3151 = vadd.f32 %v3141, %v3149
    %v3152 = vtanh.pop %v3151
    %3154 = vrot.lane.b32.xlu0 %v3152, 64
    %v3155 = vpop.permute.xlu0 %3154
    %v3157 = vmul.f32 %v3139, %v3155
    %3159 = vrot.lane.b32.xlu0 %v3157, 32
    %v3160 = vpop.permute.xlu0 %3159
    %3162 = vst.msk [vmem:[%s1120] sm:$0x3] %vm385, %v3160
    %v3163 = vld [vmem:[#allocation3] sm:$0x3]
    %v3164 = vld [vmem:[#allocation3 + $0x2] sm:$0x3]
    %v3165 = vld [vmem:[#allocation3 + $0x4] sm:$0x3]
    %v3166 = vld [vmem:[#allocation3 + $0x6] sm:$0x3]
    %v3167 = vld [vmem:[#allocation3 + $0x8] sm:$0x3]
    %v3168 = vld [vmem:[#allocation3 + $0xa] sm:$0x3]
    %v3169 = vld [vmem:[#allocation3 + $0xc] sm:$0x3]
    %v3170 = vld [vmem:[#allocation3 + $0xe] sm:$0x3]
    %v3171 = vld [vmem:[#allocation10] sm:$0xff]
    %v3172 = vld [vmem:[#allocation10 + $0x8] sm:$0xff]
    %v3173 = vld [vmem:[#allocation10 + $0x10] sm:$0xff]
    %v3174 = vld [vmem:[#allocation10 + $0x18] sm:$0xff]
    %v3175 = vld [vmem:[#allocation12] sm:$0x1]
    %v3177 = vlaneseq
    %v3178 = vshrl.u32 %v3177, 7
    %v3179 = vsub.s32 0, %v3178
    %v3180 = vrot.slane %v3175, %v3179
    %v3190 = vcombine.low %v3163, %v3164
    %v3191 = vcombine.low %v3165, %v3166
    %v3193 = vunpack.c.l.s4 1983009808
    %v3194 = vunpack.c.0.s8 %v3193
    %v3195 = vlaneseq
    %v3196 = vshrl.u32 %v3195, 7
    %v3197 = vsub.s32 %v3194, %v3196
    %v3198 = vrot.slane %v3190, %v3197
    %v3200 = vunpack.c.l.s4 1983009808
    %v3201 = vunpack.c.0.s8 %v3200
    %v3202 = vlaneseq
    %v3203 = vshrl.u32 %v3202, 7
    %v3204 = vsub.s32 %v3201, %v3203
    %v3205 = vrot.slane %v3191, %v3204
    %v3206 = vcombine.low %v3198, %v3205
    %v3207 = vcombine.low %v3167, %v3168
    %v3208 = vcombine.low %v3169, %v3170
    %v3210 = vunpack.c.l.s4 1983009808
    %v3211 = vunpack.c.0.s8 %v3210
    %v3212 = vlaneseq
    %v3213 = vshrl.u32 %v3212, 7
    %v3214 = vsub.s32 %v3211, %v3213
    %v3215 = vrot.slane %v3207, %v3214
    %v3217 = vunpack.c.l.s4 1983009808
    %v3218 = vunpack.c.0.s8 %v3217
    %v3219 = vlaneseq
    %v3220 = vshrl.u32 %v3219, 7
    %v3221 = vsub.s32 %v3218, %v3220
    %v3222 = vrot.slane %v3208, %v3221
    %v3223 = vcombine.low %v3215, %v3222
    %v3224 = vsel %vm282, %v3206, 0
    %v3226 = vsel %vm282, %v3223, 0
    %3228 = vmatprep.subr.mxu0 0.0
    %3229 = vmatpush1.msra.mxu0 0.0
    %3230 = vmatprep.subr.mxu0 0.0
    %3231 = vmatpush1.msra.mxu0 0.0
    %3232 = vmatprep.subr.mxu0 0.0
    %3233 = vmatpush1.msra.mxu0 0.0
    %3234 = vmatprep.subr.mxu0 0.0
    %3235 = vmatpush1.msra.mxu0 0.0
    %3236 = vmatprep.subr.mxu0 0.0
    %3237 = vmatpush1.msra.mxu0 0.0
    %3238 = vmatprep.subr.mxu0 0.0
    %3239 = vmatpush1.msra.mxu0 0.0
    %3240 = vmatprep.subr.mxu0 0.0
    %3241 = vmatpush1.msra.mxu0 0.0
    %3242 = vmatprep.subr.mxu0 0.0
    %3243 = vmatpush1.msra.mxu0 0.0
    %3244 = vmatprep.subr.mxu0 0.0
    %3245 = vmatpush1.msra.mxu0 0.0
    %3246 = vmatprep.subr.mxu0 0.0
    %3247 = vmatpush1.msra.mxu0 0.0
    %3248 = vmatprep.subr.mxu0 0.0
    %3249 = vmatpush1.msra.mxu0 0.0
    %3250 = vmatprep.subr.mxu0 0.0
    %3251 = vmatpush1.msra.mxu0 0.0
    %3252 = vmatprep.subr.mxu0 0.0
    %3253 = vmatpush1.msra.mxu0 %v3174
    %3254 = vmatprep.subr.mxu0 0.0
    %3255 = vmatpush1.msra.mxu0 %v3173
    %3256 = vmatprep.subr.mxu0 0.0
    %3257 = vmatpush1.msra.mxu0 %v3172
    %3258 = vmatprep.subr.mxu0 0.0
    %3259 = vmatpush1.msra.mxu0 %v3171
    %3260 = vmatprep.subr.mxu0 0.0
    %3261 = vmatpush2.msra.mxu0 0.0
    %3262 = vmatprep.subr.mxu0 0.0
    %3263 = vmatpush2.msra.mxu0 0.0
    %3264 = vmatprep.subr.mxu0 0.0
    %3265 = vmatpush2.msra.mxu0 0.0
    %3266 = vmatprep.subr.mxu0 0.0
    %3267 = vmatpush2.msra.mxu0 0.0
    %3268 = vmatprep.subr.mxu0 0.0
    %3269 = vmatpush2.msra.mxu0 0.0
    %3270 = vmatprep.subr.mxu0 0.0
    %3271 = vmatpush2.msra.mxu0 0.0
    %3272 = vmatprep.subr.mxu0 0.0
    %3273 = vmatpush2.msra.mxu0 0.0
    %3274 = vmatprep.subr.mxu0 0.0
    %3275 = vmatpush2.msra.mxu0 0.0
    %3276 = vmatprep.subr.mxu0 0.0
    %3277 = vmatpush2.msra.mxu0 0.0
    %3278 = vmatprep.subr.mxu0 0.0
    %3279 = vmatpush2.msra.mxu0 0.0
    %3280 = vmatprep.subr.mxu0 0.0
    %3281 = vmatpush2.msra.mxu0 0.0
    %3282 = vmatprep.subr.mxu0 0.0
    %3283 = vmatpush2.msra.mxu0 0.0
    %3284 = vmatprep.subr.mxu0 0.0
    %3285 = vmatpush2.msra.mxu0 0.0
    %3286 = vmatprep.subr.mxu0 0.0
    %3287 = vmatpush2.msra.mxu0 0.0
    %3288 = vmatprep.subr.mxu0 0.0
    %3289 = vmatpush2.msra.mxu0 0.0
    %3290 = vmatprep.subr.mxu0 0.0
    %3291 = vmatpush2.msra.mxu0 0.0
    %3292 = vmatprep.mubr.f32.mxu0 0.0
    %3293 = vmatmul.mubr.f32.gmra.mxu0 %v3224
    %v3294 = vpop.f32.mrf.mxu0
    %v3295 = vadd.f32 %v3180, %v3294
    %v3296 = vpop.f32.mrf.mxu0
    %3297 = vmatprep.mubr.f32.mxu0 0.0
    %3298 = vmatmul.mubr.f32.gmra.mxu0 %v3226
    %v3299 = vpop.f32.mrf.mxu0
    %v3300 = vadd.f32 %v3180, %v3299
    %v3301 = vpop.f32.mrf.mxu0
    %3302 = vdwg.mxu0
    %v3303 = vmax.f32 %v3295, 0.0
    %v3304 = vmax.f32 %v3300, 0.0
    %v3307 = vadd.f32 %v3303, %v3206
    %v3308 = vadd.f32 %v3304, %v3223
    %s3309 = scalar_lea.vmem [#allocation10], 32
    %v3310 = vld [vmem:[%s3309] sm:$0xff]
    %v3311 = vld [vmem:[%s3309 + $0x8] sm:$0xff]
    %v3312 = vld [vmem:[%s3309 + $0x10] sm:$0xff]
    %v3313 = vld [vmem:[%s3309 + $0x18] sm:$0xff]
    %s3314 = scalar_lea.vmem [#allocation12], 1
    %v3315 = vld [vmem:[%s3314] sm:$0x1]
    %v3317 = vlaneseq
    %v3318 = vshrl.u32 %v3317, 7
    %v3319 = vsub.s32 0, %v3318
    %v3320 = vrot.slane %v3315, %v3319
    %v3323 = vsel %vm282, %v3307, 0
    %v3326 = vsel %vm282, %v3308, 0
    %3328 = vmatprep.subr.mxu0 0.0
    %3329 = vmatpush1.msra.mxu0 0.0
    %3330 = vmatprep.subr.mxu0 0.0
    %3331 = vmatpush1.msra.mxu0 0.0
    %3332 = vmatprep.subr.mxu0 0.0
    %3333 = vmatpush1.msra.mxu0 0.0
    %3334 = vmatprep.subr.mxu0 0.0
    %3335 = vmatpush1.msra.mxu0 0.0
    %3336 = vmatprep.subr.mxu0 0.0
    %3337 = vmatpush1.msra.mxu0 0.0
    %3338 = vmatprep.subr.mxu0 0.0
    %3339 = vmatpush1.msra.mxu0 0.0
    %3340 = vmatprep.subr.mxu0 0.0
    %3341 = vmatpush1.msra.mxu0 0.0
    %3342 = vmatprep.subr.mxu0 0.0
    %3343 = vmatpush1.msra.mxu0 0.0
    %3344 = vmatprep.subr.mxu0 0.0
    %3345 = vmatpush1.msra.mxu0 0.0
    %3346 = vmatprep.subr.mxu0 0.0
    %3347 = vmatpush1.msra.mxu0 0.0
    %3348 = vmatprep.subr.mxu0 0.0
    %3349 = vmatpush1.msra.mxu0 0.0
    %3350 = vmatprep.subr.mxu0 0.0
    %3351 = vmatpush1.msra.mxu0 0.0
    %3352 = vmatprep.subr.mxu0 0.0
    %3353 = vmatpush1.msra.mxu0 %v3313
    %3354 = vmatprep.subr.mxu0 0.0
    %3355 = vmatpush1.msra.mxu0 %v3312
    %3356 = vmatprep.subr.mxu0 0.0
    %3357 = vmatpush1.msra.mxu0 %v3311
    %3358 = vmatprep.subr.mxu0 0.0
    %3359 = vmatpush1.msra.mxu0 %v3310
    %3360 = vmatprep.subr.mxu0 0.0
    %3361 = vmatpush2.msra.mxu0 0.0
    %3362 = vmatprep.subr.mxu0 0.0
    %3363 = vmatpush2.msra.mxu0 0.0
    %3364 = vmatprep.subr.mxu0 0.0
    %3365 = vmatpush2.msra.mxu0 0.0
    %3366 = vmatprep.subr.mxu0 0.0
    %3367 = vmatpush2.msra.mxu0 0.0
    %3368 = vmatprep.subr.mxu0 0.0
    %3369 = vmatpush2.msra.mxu0 0.0
    %3370 = vmatprep.subr.mxu0 0.0
    %3371 = vmatpush2.msra.mxu0 0.0
    %3372 = vmatprep.subr.mxu0 0.0
    %3373 = vmatpush2.msra.mxu0 0.0
    %3374 = vmatprep.subr.mxu0 0.0
    %3375 = vmatpush2.msra.mxu0 0.0
    %3376 = vmatprep.subr.mxu0 0.0
    %3377 = vmatpush2.msra.mxu0 0.0
    %3378 = vmatprep.subr.mxu0 0.0
    %3379 = vmatpush2.msra.mxu0 0.0
    %3380 = vmatprep.subr.mxu0 0.0
    %3381 = vmatpush2.msra.mxu0 0.0
    %3382 = vmatprep.subr.mxu0 0.0
    %3383 = vmatpush2.msra.mxu0 0.0
    %3384 = vmatprep.subr.mxu0 0.0
    %3385 = vmatpush2.msra.mxu0 0.0
    %3386 = vmatprep.subr.mxu0 0.0
    %3387 = vmatpush2.msra.mxu0 0.0
    %3388 = vmatprep.subr.mxu0 0.0
    %3389 = vmatpush2.msra.mxu0 0.0
    %3390 = vmatprep.subr.mxu0 0.0
    %3391 = vmatpush2.msra.mxu0 0.0
    %3392 = vmatprep.mubr.f32.mxu0 0.0
    %3393 = vmatmul.mubr.f32.gmra.mxu0 %v3323
    %v3394 = vpop.f32.mrf.mxu0
    %v3395 = vadd.f32 %v3320, %v3394
    %v3396 = vpop.f32.mrf.mxu0
    %3397 = vmatprep.mubr.f32.mxu0 0.0
    %3398 = vmatmul.mubr.f32.gmra.mxu0 %v3326
    %v3399 = vpop.f32.mrf.mxu0
    %v3400 = vadd.f32 %v3320, %v3399
    %v3401 = vpop.f32.mrf.mxu0
    %3402 = vdwg.mxu0
    %v3403 = vmax.f32 %v3395, 0.0
    %v3404 = vmax.f32 %v3400, 0.0
    %v3405 = vadd.f32 %v3403, %v3206
    %v3406 = vadd.f32 %v3404, %v3223
    %s3407 = scalar_lea.vmem [#allocation10], 64
    %v3408 = vld [vmem:[%s3407] sm:$0xff]
    %v3409 = vld [vmem:[%s3407 + $0x8] sm:$0xff]
    %v3410 = vld [vmem:[%s3407 + $0x10] sm:$0xff]
    %v3411 = vld [vmem:[%s3407 + $0x18] sm:$0xff]
    %s3412 = scalar_lea.vmem [#allocation12], 2
    %v3413 = vld [vmem:[%s3412] sm:$0x1]
    %v3415 = vlaneseq
    %v3416 = vshrl.u32 %v3415, 7
    %v3417 = vsub.s32 0, %v3416
    %v3418 = vrot.slane %v3413, %v3417
    %v3421 = vsel %vm282, %v3405, 0
    %v3424 = vsel %vm282, %v3406, 0
    %3426 = vmatprep.subr.mxu0 0.0
    %3427 = vmatpush1.msra.mxu0 0.0
    %3428 = vmatprep.subr.mxu0 0.0
    %3429 = vmatpush1.msra.mxu0 0.0
    %3430 = vmatprep.subr.mxu0 0.0
    %3431 = vmatpush1.msra.mxu0 0.0
    %3432 = vmatprep.subr.mxu0 0.0
    %3433 = vmatpush1.msra.mxu0 0.0
    %3434 = vmatprep.subr.mxu0 0.0
    %3435 = vmatpush1.msra.mxu0 0.0
    %3436 = vmatprep.subr.mxu0 0.0
    %3437 = vmatpush1.msra.mxu0 0.0
    %3438 = vmatprep.subr.mxu0 0.0
    %3439 = vmatpush1.msra.mxu0 0.0
    %3440 = vmatprep.subr.mxu0 0.0
    %3441 = vmatpush1.msra.mxu0 0.0
    %3442 = vmatprep.subr.mxu0 0.0
    %3443 = vmatpush1.msra.mxu0 0.0
    %3444 = vmatprep.subr.mxu0 0.0
    %3445 = vmatpush1.msra.mxu0 0.0
    %3446 = vmatprep.subr.mxu0 0.0
    %3447 = vmatpush1.msra.mxu0 0.0
    %3448 = vmatprep.subr.mxu0 0.0
    %3449 = vmatpush1.msra.mxu0 0.0
    %3450 = vmatprep.subr.mxu0 0.0
    %3451 = vmatpush1.msra.mxu0 %v3411
    %3452 = vmatprep.subr.mxu0 0.0
    %3453 = vmatpush1.msra.mxu0 %v3410
    %3454 = vmatprep.subr.mxu0 0.0
    %3455 = vmatpush1.msra.mxu0 %v3409
    %3456 = vmatprep.subr.mxu0 0.0
    %3457 = vmatpush1.msra.mxu0 %v3408
    %3458 = vmatprep.subr.mxu0 0.0
    %3459 = vmatpush2.msra.mxu0 0.0
    %3460 = vmatprep.subr.mxu0 0.0
    %3461 = vmatpush2.msra.mxu0 0.0
    %3462 = vmatprep.subr.mxu0 0.0
    %3463 = vmatpush2.msra.mxu0 0.0
    %3464 = vmatprep.subr.mxu0 0.0
    %3465 = vmatpush2.msra.mxu0 0.0
    %3466 = vmatprep.subr.mxu0 0.0
    %3467 = vmatpush2.msra.mxu0 0.0
    %3468 = vmatprep.subr.mxu0 0.0
    %3469 = vmatpush2.msra.mxu0 0.0
    %3470 = vmatprep.subr.mxu0 0.0
    %3471 = vmatpush2.msra.mxu0 0.0
    %3472 = vmatprep.subr.mxu0 0.0
    %3473 = vmatpush2.msra.mxu0 0.0
    %3474 = vmatprep.subr.mxu0 0.0
    %3475 = vmatpush2.msra.mxu0 0.0
    %3476 = vmatprep.subr.mxu0 0.0
    %3477 = vmatpush2.msra.mxu0 0.0
    %3478 = vmatprep.subr.mxu0 0.0
    %3479 = vmatpush2.msra.mxu0 0.0
    %3480 = vmatprep.subr.mxu0 0.0
    %3481 = vmatpush2.msra.mxu0 0.0
    %3482 = vmatprep.subr.mxu0 0.0
    %3483 = vmatpush2.msra.mxu0 0.0
    %3484 = vmatprep.subr.mxu0 0.0
    %3485 = vmatpush2.msra.mxu0 0.0
    %3486 = vmatprep.subr.mxu0 0.0
    %3487 = vmatpush2.msra.mxu0 0.0
    %3488 = vmatprep.subr.mxu0 0.0
    %3489 = vmatpush2.msra.mxu0 0.0
    %3490 = vmatprep.mubr.f32.mxu0 0.0
    %3491 = vmatmul.mubr.f32.gmra.mxu0 %v3421
    %v3492 = vpop.f32.mrf.mxu0
    %v3493 = vadd.f32 %v3418, %v3492
    %v3494 = vpop.f32.mrf.mxu0
    %3495 = vmatprep.mubr.f32.mxu0 0.0
    %3496 = vmatmul.mubr.f32.gmra.mxu0 %v3424
    %v3497 = vpop.f32.mrf.mxu0
    %v3498 = vadd.f32 %v3418, %v3497
    %v3499 = vpop.f32.mrf.mxu0
    %3500 = vdwg.mxu0
    %v3501 = vmax.f32 %v3493, 0.0
    %v3502 = vmax.f32 %v3498, 0.0
    %v3503 = vadd.f32 %v3501, %v3206
    %v3504 = vadd.f32 %v3502, %v3223
    %s3505 = scalar_lea.vmem [#allocation10], 96
    %v3506 = vld [vmem:[%s3505] sm:$0xff]
    %v3507 = vld [vmem:[%s3505 + $0x8] sm:$0xff]
    %v3508 = vld [vmem:[%s3505 + $0x10] sm:$0xff]
    %v3509 = vld [vmem:[%s3505 + $0x18] sm:$0xff]
    %s3510 = scalar_lea.vmem [#allocation12], 3
    %v3511 = vld [vmem:[%s3510] sm:$0x1]
    %v3513 = vlaneseq
    %v3514 = vshrl.u32 %v3513, 7
    %v3515 = vsub.s32 0, %v3514
    %v3516 = vrot.slane %v3511, %v3515
    %v3519 = vsel %vm282, %v3503, 0
    %v3522 = vsel %vm282, %v3504, 0
    %3524 = vmatprep.subr.mxu0 0.0
    %3525 = vmatpush1.msra.mxu0 0.0
    %3526 = vmatprep.subr.mxu0 0.0
    %3527 = vmatpush1.msra.mxu0 0.0
    %3528 = vmatprep.subr.mxu0 0.0
    %3529 = vmatpush1.msra.mxu0 0.0
    %3530 = vmatprep.subr.mxu0 0.0
    %3531 = vmatpush1.msra.mxu0 0.0
    %3532 = vmatprep.subr.mxu0 0.0
    %3533 = vmatpush1.msra.mxu0 0.0
    %3534 = vmatprep.subr.mxu0 0.0
    %3535 = vmatpush1.msra.mxu0 0.0
    %3536 = vmatprep.subr.mxu0 0.0
    %3537 = vmatpush1.msra.mxu0 0.0
    %3538 = vmatprep.subr.mxu0 0.0
    %3539 = vmatpush1.msra.mxu0 0.0
    %3540 = vmatprep.subr.mxu0 0.0
    %3541 = vmatpush1.msra.mxu0 0.0
    %3542 = vmatprep.subr.mxu0 0.0
    %3543 = vmatpush1.msra.mxu0 0.0
    %3544 = vmatprep.subr.mxu0 0.0
    %3545 = vmatpush1.msra.mxu0 0.0
    %3546 = vmatprep.subr.mxu0 0.0
    %3547 = vmatpush1.msra.mxu0 0.0
    %3548 = vmatprep.subr.mxu0 0.0
    %3549 = vmatpush1.msra.mxu0 %v3509
    %3550 = vmatprep.subr.mxu0 0.0
    %3551 = vmatpush1.msra.mxu0 %v3508
    %3552 = vmatprep.subr.mxu0 0.0
    %3553 = vmatpush1.msra.mxu0 %v3507
    %3554 = vmatprep.subr.mxu0 0.0
    %3555 = vmatpush1.msra.mxu0 %v3506
    %3556 = vmatprep.subr.mxu0 0.0
    %3557 = vmatpush2.msra.mxu0 0.0
    %3558 = vmatprep.subr.mxu0 0.0
    %3559 = vmatpush2.msra.mxu0 0.0
    %3560 = vmatprep.subr.mxu0 0.0
    %3561 = vmatpush2.msra.mxu0 0.0
    %3562 = vmatprep.subr.mxu0 0.0
    %3563 = vmatpush2.msra.mxu0 0.0
    %3564 = vmatprep.subr.mxu0 0.0
    %3565 = vmatpush2.msra.mxu0 0.0
    %3566 = vmatprep.subr.mxu0 0.0
    %3567 = vmatpush2.msra.mxu0 0.0
    %3568 = vmatprep.subr.mxu0 0.0
    %3569 = vmatpush2.msra.mxu0 0.0
    %3570 = vmatprep.subr.mxu0 0.0
    %3571 = vmatpush2.msra.mxu0 0.0
    %3572 = vmatprep.subr.mxu0 0.0
    %3573 = vmatpush2.msra.mxu0 0.0
    %3574 = vmatprep.subr.mxu0 0.0
    %3575 = vmatpush2.msra.mxu0 0.0
    %3576 = vmatprep.subr.mxu0 0.0
    %3577 = vmatpush2.msra.mxu0 0.0
    %3578 = vmatprep.subr.mxu0 0.0
    %3579 = vmatpush2.msra.mxu0 0.0
    %3580 = vmatprep.subr.mxu0 0.0
    %3581 = vmatpush2.msra.mxu0 0.0
    %3582 = vmatprep.subr.mxu0 0.0
    %3583 = vmatpush2.msra.mxu0 0.0
    %3584 = vmatprep.subr.mxu0 0.0
    %3585 = vmatpush2.msra.mxu0 0.0
    %3586 = vmatprep.subr.mxu0 0.0
    %3587 = vmatpush2.msra.mxu0 0.0
    %3588 = vmatprep.mubr.f32.mxu0 0.0
    %3589 = vmatmul.mubr.f32.gmra.mxu0 %v3519
    %v3590 = vpop.f32.mrf.mxu0
    %v3591 = vadd.f32 %v3516, %v3590
    %v3592 = vpop.f32.mrf.mxu0
    %3593 = vmatprep.mubr.f32.mxu0 0.0
    %3594 = vmatmul.mubr.f32.gmra.mxu0 %v3522
    %v3595 = vpop.f32.mrf.mxu0
    %v3596 = vadd.f32 %v3516, %v3595
    %v3597 = vpop.f32.mrf.mxu0
    %3598 = vdwg.mxu0
    %v3599 = vmax.f32 %v3591, 0.0
    %v3600 = vmax.f32 %v3596, 0.0
    %v3601 = vadd.f32 %v3599, %v3206
    %v3602 = vadd.f32 %v3600, %v3223
    %s3603 = scalar_lea.vmem [#allocation10], 128
    %v3604 = vld [vmem:[%s3603] sm:$0xff]
    %v3605 = vld [vmem:[%s3603 + $0x8] sm:$0xff]
    %v3606 = vld [vmem:[%s3603 + $0x10] sm:$0xff]
    %v3607 = vld [vmem:[%s3603 + $0x18] sm:$0xff]
    %s3608 = scalar_lea.vmem [#allocation12], 4
    %v3609 = vld [vmem:[%s3608] sm:$0x1]
    %v3611 = vlaneseq
    %v3612 = vshrl.u32 %v3611, 7
    %v3613 = vsub.s32 0, %v3612
    %v3614 = vrot.slane %v3609, %v3613
    %v3617 = vsel %vm282, %v3601, 0
    %v3620 = vsel %vm282, %v3602, 0
    %3622 = vmatprep.subr.mxu0 0.0
    %3623 = vmatpush1.msra.mxu0 0.0
    %3624 = vmatprep.subr.mxu0 0.0
    %3625 = vmatpush1.msra.mxu0 0.0
    %3626 = vmatprep.subr.mxu0 0.0
    %3627 = vmatpush1.msra.mxu0 0.0
    %3628 = vmatprep.subr.mxu0 0.0
    %3629 = vmatpush1.msra.mxu0 0.0
    %3630 = vmatprep.subr.mxu0 0.0
    %3631 = vmatpush1.msra.mxu0 0.0
    %3632 = vmatprep.subr.mxu0 0.0
    %3633 = vmatpush1.msra.mxu0 0.0
    %3634 = vmatprep.subr.mxu0 0.0
    %3635 = vmatpush1.msra.mxu0 0.0
    %3636 = vmatprep.subr.mxu0 0.0
    %3637 = vmatpush1.msra.mxu0 0.0
    %3638 = vmatprep.subr.mxu0 0.0
    %3639 = vmatpush1.msra.mxu0 0.0
    %3640 = vmatprep.subr.mxu0 0.0
    %3641 = vmatpush1.msra.mxu0 0.0
    %3642 = vmatprep.subr.mxu0 0.0
    %3643 = vmatpush1.msra.mxu0 0.0
    %3644 = vmatprep.subr.mxu0 0.0
    %3645 = vmatpush1.msra.mxu0 0.0
    %3646 = vmatprep.subr.mxu0 0.0
    %3647 = vmatpush1.msra.mxu0 %v3607
    %3648 = vmatprep.subr.mxu0 0.0
    %3649 = vmatpush1.msra.mxu0 %v3606
    %3650 = vmatprep.subr.mxu0 0.0
    %3651 = vmatpush1.msra.mxu0 %v3605
    %3652 = vmatprep.subr.mxu0 0.0
    %3653 = vmatpush1.msra.mxu0 %v3604
    %3654 = vmatprep.subr.mxu0 0.0
    %3655 = vmatpush2.msra.mxu0 0.0
    %3656 = vmatprep.subr.mxu0 0.0
    %3657 = vmatpush2.msra.mxu0 0.0
    %3658 = vmatprep.subr.mxu0 0.0
    %3659 = vmatpush2.msra.mxu0 0.0
    %3660 = vmatprep.subr.mxu0 0.0
    %3661 = vmatpush2.msra.mxu0 0.0
    %3662 = vmatprep.subr.mxu0 0.0
    %3663 = vmatpush2.msra.mxu0 0.0
    %3664 = vmatprep.subr.mxu0 0.0
    %3665 = vmatpush2.msra.mxu0 0.0
    %3666 = vmatprep.subr.mxu0 0.0
    %3667 = vmatpush2.msra.mxu0 0.0
    %3668 = vmatprep.subr.mxu0 0.0
    %3669 = vmatpush2.msra.mxu0 0.0
    %3670 = vmatprep.subr.mxu0 0.0
    %3671 = vmatpush2.msra.mxu0 0.0
    %3672 = vmatprep.subr.mxu0 0.0
    %3673 = vmatpush2.msra.mxu0 0.0
    %3674 = vmatprep.subr.mxu0 0.0
    %3675 = vmatpush2.msra.mxu0 0.0
    %3676 = vmatprep.subr.mxu0 0.0
    %3677 = vmatpush2.msra.mxu0 0.0
    %3678 = vmatprep.subr.mxu0 0.0
    %3679 = vmatpush2.msra.mxu0 0.0
    %3680 = vmatprep.subr.mxu0 0.0
    %3681 = vmatpush2.msra.mxu0 0.0
    %3682 = vmatprep.subr.mxu0 0.0
    %3683 = vmatpush2.msra.mxu0 0.0
    %3684 = vmatprep.subr.mxu0 0.0
    %3685 = vmatpush2.msra.mxu0 0.0
    %3686 = vmatprep.mubr.f32.mxu0 0.0
    %3687 = vmatmul.mubr.f32.gmra.mxu0 %v3617
    %v3688 = vpop.f32.mrf.mxu0
    %v3689 = vadd.f32 %v3614, %v3688
    %v3690 = vpop.f32.mrf.mxu0
    %3691 = vmatprep.mubr.f32.mxu0 0.0
    %3692 = vmatmul.mubr.f32.gmra.mxu0 %v3620
    %v3693 = vpop.f32.mrf.mxu0
    %v3694 = vadd.f32 %v3614, %v3693
    %v3695 = vpop.f32.mrf.mxu0
    %3696 = vdwg.mxu0
    %v3697 = vmax.f32 %v3689, 0.0
    %v3698 = vmax.f32 %v3694, 0.0
    %v3699 = vadd.f32 %v3697, %v3206
    %v3700 = vadd.f32 %v3698, %v3223
    %s3701 = scalar_lea.vmem [#allocation10], 160
    %v3702 = vld [vmem:[%s3701] sm:$0xff]
    %v3703 = vld [vmem:[%s3701 + $0x8] sm:$0xff]
    %v3704 = vld [vmem:[%s3701 + $0x10] sm:$0xff]
    %v3705 = vld [vmem:[%s3701 + $0x18] sm:$0xff]
    %s3706 = scalar_lea.vmem [#allocation12], 5
    %v3707 = vld [vmem:[%s3706] sm:$0x1]
    %v3709 = vlaneseq
    %v3710 = vshrl.u32 %v3709, 7
    %v3711 = vsub.s32 0, %v3710
    %v3712 = vrot.slane %v3707, %v3711
    %v3715 = vsel %vm282, %v3699, 0
    %v3718 = vsel %vm282, %v3700, 0
    %3720 = vmatprep.subr.mxu0 0.0
    %3721 = vmatpush1.msra.mxu0 0.0
    %3722 = vmatprep.subr.mxu0 0.0
    %3723 = vmatpush1.msra.mxu0 0.0
    %3724 = vmatprep.subr.mxu0 0.0
    %3725 = vmatpush1.msra.mxu0 0.0
    %3726 = vmatprep.subr.mxu0 0.0
    %3727 = vmatpush1.msra.mxu0 0.0
    %3728 = vmatprep.subr.mxu0 0.0
    %3729 = vmatpush1.msra.mxu0 0.0
    %3730 = vmatprep.subr.mxu0 0.0
    %3731 = vmatpush1.msra.mxu0 0.0
    %3732 = vmatprep.subr.mxu0 0.0
    %3733 = vmatpush1.msra.mxu0 0.0
    %3734 = vmatprep.subr.mxu0 0.0
    %3735 = vmatpush1.msra.mxu0 0.0
    %3736 = vmatprep.subr.mxu0 0.0
    %3737 = vmatpush1.msra.mxu0 0.0
    %3738 = vmatprep.subr.mxu0 0.0
    %3739 = vmatpush1.msra.mxu0 0.0
    %3740 = vmatprep.subr.mxu0 0.0
    %3741 = vmatpush1.msra.mxu0 0.0
    %3742 = vmatprep.subr.mxu0 0.0
    %3743 = vmatpush1.msra.mxu0 0.0
    %3744 = vmatprep.subr.mxu0 0.0
    %3745 = vmatpush1.msra.mxu0 %v3705
    %3746 = vmatprep.subr.mxu0 0.0
    %3747 = vmatpush1.msra.mxu0 %v3704
    %3748 = vmatprep.subr.mxu0 0.0
    %3749 = vmatpush1.msra.mxu0 %v3703
    %3750 = vmatprep.subr.mxu0 0.0
    %3751 = vmatpush1.msra.mxu0 %v3702
    %3752 = vmatprep.subr.mxu0 0.0
    %3753 = vmatpush2.msra.mxu0 0.0
    %3754 = vmatprep.subr.mxu0 0.0
    %3755 = vmatpush2.msra.mxu0 0.0
    %3756 = vmatprep.subr.mxu0 0.0
    %3757 = vmatpush2.msra.mxu0 0.0
    %3758 = vmatprep.subr.mxu0 0.0
    %3759 = vmatpush2.msra.mxu0 0.0
    %3760 = vmatprep.subr.mxu0 0.0
    %3761 = vmatpush2.msra.mxu0 0.0
    %3762 = vmatprep.subr.mxu0 0.0
    %3763 = vmatpush2.msra.mxu0 0.0
    %3764 = vmatprep.subr.mxu0 0.0
    %3765 = vmatpush2.msra.mxu0 0.0
    %3766 = vmatprep.subr.mxu0 0.0
    %3767 = vmatpush2.msra.mxu0 0.0
    %3768 = vmatprep.subr.mxu0 0.0
    %3769 = vmatpush2.msra.mxu0 0.0
    %3770 = vmatprep.subr.mxu0 0.0
    %3771 = vmatpush2.msra.mxu0 0.0
    %3772 = vmatprep.subr.mxu0 0.0
    %3773 = vmatpush2.msra.mxu0 0.0
    %3774 = vmatprep.subr.mxu0 0.0
    %3775 = vmatpush2.msra.mxu0 0.0
    %3776 = vmatprep.subr.mxu0 0.0
    %3777 = vmatpush2.msra.mxu0 0.0
    %3778 = vmatprep.subr.mxu0 0.0
    %3779 = vmatpush2.msra.mxu0 0.0
    %3780 = vmatprep.subr.mxu0 0.0
    %3781 = vmatpush2.msra.mxu0 0.0
    %3782 = vmatprep.subr.mxu0 0.0
    %3783 = vmatpush2.msra.mxu0 0.0
    %3784 = vmatprep.mubr.f32.mxu0 0.0
    %3785 = vmatmul.mubr.f32.gmra.mxu0 %v3715
    %v3786 = vpop.f32.mrf.mxu0
    %v3787 = vadd.f32 %v3712, %v3786
    %v3788 = vpop.f32.mrf.mxu0
    %3789 = vmatprep.mubr.f32.mxu0 0.0
    %3790 = vmatmul.mubr.f32.gmra.mxu0 %v3718
    %v3791 = vpop.f32.mrf.mxu0
    %v3792 = vadd.f32 %v3712, %v3791
    %v3793 = vpop.f32.mrf.mxu0
    %3794 = vdwg.mxu0
    %v3795 = vmax.f32 %v3787, 0.0
    %v3796 = vmax.f32 %v3792, 0.0
    %v3797 = vadd.f32 %v3795, %v3206
    %v3798 = vadd.f32 %v3796, %v3223
    %s3799 = scalar_lea.vmem [#allocation10], 192
    %v3800 = vld [vmem:[%s3799] sm:$0xff]
    %v3801 = vld [vmem:[%s3799 + $0x8] sm:$0xff]
    %v3802 = vld [vmem:[%s3799 + $0x10] sm:$0xff]
    %v3803 = vld [vmem:[%s3799 + $0x18] sm:$0xff]
    %s3804 = scalar_lea.vmem [#allocation12], 6
    %v3805 = vld [vmem:[%s3804] sm:$0x1]
    %v3807 = vlaneseq
    %v3808 = vshrl.u32 %v3807, 7
    %v3809 = vsub.s32 0, %v3808
    %v3810 = vrot.slane %v3805, %v3809
    %v3813 = vsel %vm282, %v3797, 0
    %v3816 = vsel %vm282, %v3798, 0
    %3818 = vmatprep.subr.mxu0 0.0
    %3819 = vmatpush1.msra.mxu0 0.0
    %3820 = vmatprep.subr.mxu0 0.0
    %3821 = vmatpush1.msra.mxu0 0.0
    %3822 = vmatprep.subr.mxu0 0.0
    %3823 = vmatpush1.msra.mxu0 0.0
    %3824 = vmatprep.subr.mxu0 0.0
    %3825 = vmatpush1.msra.mxu0 0.0
    %3826 = vmatprep.subr.mxu0 0.0
    %3827 = vmatpush1.msra.mxu0 0.0
    %3828 = vmatprep.subr.mxu0 0.0
    %3829 = vmatpush1.msra.mxu0 0.0
    %3830 = vmatprep.subr.mxu0 0.0
    %3831 = vmatpush1.msra.mxu0 0.0
    %3832 = vmatprep.subr.mxu0 0.0
    %3833 = vmatpush1.msra.mxu0 0.0
    %3834 = vmatprep.subr.mxu0 0.0
    %3835 = vmatpush1.msra.mxu0 0.0
    %3836 = vmatprep.subr.mxu0 0.0
    %3837 = vmatpush1.msra.mxu0 0.0
    %3838 = vmatprep.subr.mxu0 0.0
    %3839 = vmatpush1.msra.mxu0 0.0
    %3840 = vmatprep.subr.mxu0 0.0
    %3841 = vmatpush1.msra.mxu0 0.0
    %3842 = vmatprep.subr.mxu0 0.0
    %3843 = vmatpush1.msra.mxu0 %v3803
    %3844 = vmatprep.subr.mxu0 0.0
    %3845 = vmatpush1.msra.mxu0 %v3802
    %3846 = vmatprep.subr.mxu0 0.0
    %3847 = vmatpush1.msra.mxu0 %v3801
    %3848 = vmatprep.subr.mxu0 0.0
    %3849 = vmatpush1.msra.mxu0 %v3800
    %3850 = vmatprep.subr.mxu0 0.0
    %3851 = vmatpush2.msra.mxu0 0.0
    %3852 = vmatprep.subr.mxu0 0.0
    %3853 = vmatpush2.msra.mxu0 0.0
    %3854 = vmatprep.subr.mxu0 0.0
    %3855 = vmatpush2.msra.mxu0 0.0
    %3856 = vmatprep.subr.mxu0 0.0
    %3857 = vmatpush2.msra.mxu0 0.0
    %3858 = vmatprep.subr.mxu0 0.0
    %3859 = vmatpush2.msra.mxu0 0.0
    %3860 = vmatprep.subr.mxu0 0.0
    %3861 = vmatpush2.msra.mxu0 0.0
    %3862 = vmatprep.subr.mxu0 0.0
    %3863 = vmatpush2.msra.mxu0 0.0
    %3864 = vmatprep.subr.mxu0 0.0
    %3865 = vmatpush2.msra.mxu0 0.0
    %3866 = vmatprep.subr.mxu0 0.0
    %3867 = vmatpush2.msra.mxu0 0.0
    %3868 = vmatprep.subr.mxu0 0.0
    %3869 = vmatpush2.msra.mxu0 0.0
    %3870 = vmatprep.subr.mxu0 0.0
    %3871 = vmatpush2.msra.mxu0 0.0
    %3872 = vmatprep.subr.mxu0 0.0
    %3873 = vmatpush2.msra.mxu0 0.0
    %3874 = vmatprep.subr.mxu0 0.0
    %3875 = vmatpush2.msra.mxu0 0.0
    %3876 = vmatprep.subr.mxu0 0.0
    %3877 = vmatpush2.msra.mxu0 0.0
    %3878 = vmatprep.subr.mxu0 0.0
    %3879 = vmatpush2.msra.mxu0 0.0
    %3880 = vmatprep.subr.mxu0 0.0
    %3881 = vmatpush2.msra.mxu0 0.0
    %3882 = vmatprep.mubr.f32.mxu0 0.0
    %3883 = vmatmul.mubr.f32.gmra.mxu0 %v3813
    %v3884 = vpop.f32.mrf.mxu0
    %v3885 = vadd.f32 %v3810, %v3884
    %v3886 = vpop.f32.mrf.mxu0
    %3887 = vmatprep.mubr.f32.mxu0 0.0
    %3888 = vmatmul.mubr.f32.gmra.mxu0 %v3816
    %v3889 = vpop.f32.mrf.mxu0
    %v3890 = vadd.f32 %v3810, %v3889
    %v3891 = vpop.f32.mrf.mxu0
    %3892 = vdwg.mxu0
    %v3893 = vmax.f32 %v3885, 0.0
    %v3894 = vmax.f32 %v3890, 0.0
    %v3895 = vadd.f32 %v3893, %v3206
    %v3896 = vadd.f32 %v3894, %v3223
    %v3897 = vld [vmem:[%s7] sm:$0xff]
    %v3898 = vld [vmem:[%s7 + $0x8] sm:$0xff]
    %v3899 = vld [vmem:[%s7 + $0x10] sm:$0xff]
    %v3900 = vld [vmem:[%s7 + $0x18] sm:$0xff]
    %v3901 = vld [vmem:[%s8] sm:$0x1]
    %v3903 = vlaneseq
    %v3904 = vshrl.u32 %v3903, 7
    %v3905 = vsub.s32 0, %v3904
    %v3906 = vrot.slane %v3901, %v3905
    %v3909 = vsel %vm282, %v3895, 0
    %v3912 = vsel %vm282, %v3896, 0
    %3914 = vmatprep.subr.mxu0 0.0
    %3915 = vmatpush1.msra.mxu0 0.0
    %3916 = vmatprep.subr.mxu0 0.0
    %3917 = vmatpush1.msra.mxu0 0.0
    %3918 = vmatprep.subr.mxu0 0.0
    %3919 = vmatpush1.msra.mxu0 0.0
    %3920 = vmatprep.subr.mxu0 0.0
    %3921 = vmatpush1.msra.mxu0 0.0
    %3922 = vmatprep.subr.mxu0 0.0
    %3923 = vmatpush1.msra.mxu0 0.0
    %3924 = vmatprep.subr.mxu0 0.0
    %3925 = vmatpush1.msra.mxu0 0.0
    %3926 = vmatprep.subr.mxu0 0.0
    %3927 = vmatpush1.msra.mxu0 0.0
    %3928 = vmatprep.subr.mxu0 0.0
    %3929 = vmatpush1.msra.mxu0 0.0
    %3930 = vmatprep.subr.mxu0 0.0
    %3931 = vmatpush1.msra.mxu0 0.0
    %3932 = vmatprep.subr.mxu0 0.0
    %3933 = vmatpush1.msra.mxu0 0.0
    %3934 = vmatprep.subr.mxu0 0.0
    %3935 = vmatpush1.msra.mxu0 0.0
    %3936 = vmatprep.subr.mxu0 0.0
    %3937 = vmatpush1.msra.mxu0 0.0
    %3938 = vmatprep.subr.mxu0 0.0
    %3939 = vmatpush1.msra.mxu0 %v3900
    %3940 = vmatprep.subr.mxu0 0.0
    %3941 = vmatpush1.msra.mxu0 %v3899
    %3942 = vmatprep.subr.mxu0 0.0
    %3943 = vmatpush1.msra.mxu0 %v3898
    %3944 = vmatprep.subr.mxu0 0.0
    %3945 = vmatpush1.msra.mxu0 %v3897
    %3946 = vmatprep.subr.mxu0 0.0
    %3947 = vmatpush2.msra.mxu0 0.0
    %3948 = vmatprep.subr.mxu0 0.0
    %3949 = vmatpush2.msra.mxu0 0.0
    %3950 = vmatprep.subr.mxu0 0.0
    %3951 = vmatpush2.msra.mxu0 0.0
    %3952 = vmatprep.subr.mxu0 0.0
    %3953 = vmatpush2.msra.mxu0 0.0
    %3954 = vmatprep.subr.mxu0 0.0
    %3955 = vmatpush2.msra.mxu0 0.0
    %3956 = vmatprep.subr.mxu0 0.0
    %3957 = vmatpush2.msra.mxu0 0.0
    %3958 = vmatprep.subr.mxu0 0.0
    %3959 = vmatpush2.msra.mxu0 0.0
    %3960 = vmatprep.subr.mxu0 0.0
    %3961 = vmatpush2.msra.mxu0 0.0
    %3962 = vmatprep.subr.mxu0 0.0
    %3963 = vmatpush2.msra.mxu0 0.0
    %3964 = vmatprep.subr.mxu0 0.0
    %3965 = vmatpush2.msra.mxu0 0.0
    %3966 = vmatprep.subr.mxu0 0.0
    %3967 = vmatpush2.msra.mxu0 0.0
    %3968 = vmatprep.subr.mxu0 0.0
    %3969 = vmatpush2.msra.mxu0 0.0
    %3970 = vmatprep.subr.mxu0 0.0
    %3971 = vmatpush2.msra.mxu0 0.0
    %3972 = vmatprep.subr.mxu0 0.0
    %3973 = vmatpush2.msra.mxu0 0.0
    %3974 = vmatprep.subr.mxu0 0.0
    %3975 = vmatpush2.msra.mxu0 0.0
    %3976 = vmatprep.subr.mxu0 0.0
    %3977 = vmatpush2.msra.mxu0 0.0
    %3978 = vmatprep.mubr.f32.mxu0 0.0
    %3979 = vmatmul.mubr.f32.gmra.mxu0 %v3909
    %v3980 = vpop.f32.mrf.mxu0
    %v3981 = vadd.f32 %v3906, %v3980
    %v3982 = vpop.f32.mrf.mxu0
    %3983 = vmatprep.mubr.f32.mxu0 0.0
    %3984 = vmatmul.mubr.f32.gmra.mxu0 %v3912
    %v3985 = vpop.f32.mrf.mxu0
    %v3986 = vadd.f32 %v3906, %v3985
    %v3987 = vpop.f32.mrf.mxu0
    %3988 = vdwg.mxu0
    %v3991 = vcombine.high %v3981, %v3981
    %v3993 = vunpack.c.l.s4 1983009808
    %v3994 = vunpack.c.0.s8 %v3993
    %v3995 = vlaneseq
    %v3996 = vshrl.u32 %v3995, 7
    %v3997 = vsub.s32 %v3994, %v3996
    %v3998 = vrot.slane %v3981, %v3997
    %v4000 = vunpack.c.l.s4 1983009808
    %v4001 = vunpack.c.0.s8 %v4000
    %v4002 = vlaneseq
    %v4003 = vshrl.u32 %v4002, 7
    %v4004 = vsub.s32 %v4001, %v4003
    %v4005 = vrot.slane %v3991, %v4004
    %v4006 = vcombine.high %v3998, %v3998
    %v4007 = vcombine.high %v4005, %v4005
    %v4008 = vcombine.high %v3986, %v3986
    %v4010 = vunpack.c.l.s4 1983009808
    %v4011 = vunpack.c.0.s8 %v4010
    %v4012 = vlaneseq
    %v4013 = vshrl.u32 %v4012, 7
    %v4014 = vsub.s32 %v4011, %v4013
    %v4015 = vrot.slane %v3986, %v4014
    %v4017 = vunpack.c.l.s4 1983009808
    %v4018 = vunpack.c.0.s8 %v4017
    %v4019 = vlaneseq
    %v4020 = vshrl.u32 %v4019, 7
    %v4021 = vsub.s32 %v4018, %v4020
    %v4022 = vrot.slane %v4008, %v4021
    %v4023 = vcombine.high %v4015, %v4015
    %v4024 = vcombine.high %v4022, %v4022
    %v4033 = vcombine.low %v3998, %v4006
    %v4035 = vunpack.c.l.s4 1934713408
    %v4036 = vunpack.c.0.s8 %v4035
    %v4037 = vlaneseq
    %v4038 = vshrl.u32 %v4037, 7
    %v4039 = vsub.s32 %v4036, %v4038
    %v4040 = vrot.slane %v4033, %v4039
    %v4041 = vcombine.high %v4040, 0.0
    %v4042 = vcombine.low %v4005, %v4007
    %v4044 = vunpack.c.l.s4 1934713408
    %v4045 = vunpack.c.0.s8 %v4044
    %v4046 = vlaneseq
    %v4047 = vshrl.u32 %v4046, 7
    %v4048 = vsub.s32 %v4045, %v4047
    %v4049 = vrot.slane %v4042, %v4048
    %v4050 = vcombine.high %v4049, 0.0
    %v4051 = vcombine.low %v4015, %v4023
    %v4053 = vunpack.c.l.s4 1934713408
    %v4054 = vunpack.c.0.s8 %v4053
    %v4055 = vlaneseq
    %v4056 = vshrl.u32 %v4055, 7
    %v4057 = vsub.s32 %v4054, %v4056
    %v4058 = vrot.slane %v4051, %v4057
    %v4059 = vcombine.high %v4058, 0.0
    %v4060 = vcombine.low %v4022, %v4024
    %v4062 = vunpack.c.l.s4 1934713408
    %v4063 = vunpack.c.0.s8 %v4062
    %v4064 = vlaneseq
    %v4065 = vshrl.u32 %v4064, 7
    %v4066 = vsub.s32 %v4063, %v4065
    %v4067 = vrot.slane %v4060, %v4066
    %v4068 = vcombine.high %v4067, 0.0
    %v4077 = vcombine.low %v4040, %v4049
    %v4078 = vcombine.low %v4058, %v4067
    %v4080 = vunpack.c.l.s4 1983009808
    %v4081 = vunpack.c.0.s8 %v4080
    %v4082 = vlaneseq
    %v4083 = vshrl.u32 %v4082, 7
    %v4084 = vsub.s32 %v4081, %v4083
    %v4085 = vrot.slane %v4077, %v4084
    %v4087 = vunpack.c.l.s4 1983009808
    %v4088 = vunpack.c.0.s8 %v4087
    %v4089 = vlaneseq
    %v4090 = vshrl.u32 %v4089, 7
    %v4091 = vsub.s32 %v4088, %v4090
    %v4092 = vrot.slane %v4078, %v4091
    %v4093 = vcombine.low %v4085, %v4092
    %v4094 = vcombine.low %v4041, %v4050
    %v4095 = vcombine.low %v4059, %v4068
    %v4097 = vunpack.c.l.s4 1983009808
    %v4098 = vunpack.c.0.s8 %v4097
    %v4099 = vlaneseq
    %v4100 = vshrl.u32 %v4099, 7
    %v4101 = vsub.s32 %v4098, %v4100
    %v4102 = vrot.slane %v4094, %v4101
    %v4104 = vunpack.c.l.s4 1983009808
    %v4105 = vunpack.c.0.s8 %v4104
    %v4106 = vlaneseq
    %v4107 = vshrl.u32 %v4106, 7
    %v4108 = vsub.s32 %v4105, %v4107
    %v4109 = vrot.slane %v4095, %v4108
    %v4110 = vcombine.low %v4102, %v4109
    %4113 = vst [vmem:[#allocation13] sm:$0xff] %v4093
    %4114 = vst [vmem:[#allocation13 + $0x8] sm:$0xff] %v4110
    // Predicated region
    $region58: #{rnn_forward.1} parent=1 // pred_check
      _
    $region59: #{rnn_forward.1} parent=1 // pred_check_branch
      %4116 = sbr.rel (0) target = $region61
    $region60: #{rnn_forward.1} parent=1 // pred_region
      %s4118 = ssub.s32 256, 256
      %4119 = vsyncadd [#allocation6], %s4118
      %s4120 = sshll.u32 [#allocation13], 4
      %s4121 = int_to_ptr.vmem [resolvable:$true] %s4120
      %4126 = dma.vmem_to_hbm [thread:$0]  %s4121, 256, %s9, [#allocation6], 128, 128, 8
    $region61: #{rnn_forward.1} parent=1 // pred_fallthru
      _
    // Predicated region
    $region62: #{rnn_forward.1} parent=1 // pred_check
      _
    $region63: #{rnn_forward.1} parent=1 // pred_check_branch
      %4128 = sbr.rel (0) target = $region65
    $region64: #{rnn_forward.1} parent=1 // pred_region
      %4129 = dma.done [#allocation6], 256
    $region65: #{rnn_forward.1} parent=1 // pred_fallthru
      _
    %4130 = vsyncpa [#allocation5], 1
    %4131 = vsyncpa [#allocation8], 1
    %4132 = vsyncpa [#allocation11], 1
    %4133 = vsyncpa [#allocation6], 1

</llo_original>
